<compile_context>
chip_gen: v7x
topology: tpu7x:2x2x1
jax: 0.10.0
libtpu: 0.0.40
codegen_flags: <defaults>
</compile_context>

<pallas_src>
import functools

import jax
import jax.numpy as jnp
import numpy as np
from jax.experimental import pallas as pl
from jax.experimental.pallas import tpu as pltpu

BN_EPS = 1e-5
LANE = 128


def _round_up(x, m):
    return (x + m - 1) // m * m


# ---------------------------------------------------------------------------
# Fused identity-block kernel (one grid step per image)
# ---------------------------------------------------------------------------
def _identity_block_kernel(xp_ref, mask_ref, w1_ref, b1_ref, w2_ref, b2_ref,
                           w3_ref, b3_ref, o_ref, h1_pad,
                           *, shifts, margin, mi, cp):
    # ---- conv1 (1x1) + BN1 + ReLU, evaluated at every padded position ------
    x = xp_ref[...]                                           # (Mi, Cp) f32
    h1 = jnp.dot(x.astype(jnp.bfloat16), w1_ref[...],
                 preferred_element_type=jnp.float32)
    # mask forces the spatial-halo rows back to zero so conv2 sees the same
    # zero padding PyTorch applies to the post-ReLU activation.
    h1 = jnp.maximum(h1 + b1_ref[...], 0.0) * mask_ref[...]

    # ---- stage h1 into a zero-margined scratch for the tap shifts ----------
    h1_pad[...] = jnp.zeros((mi + 2 * margin, cp), jnp.float32)
    h1_pad[pl.ds(margin, mi), :] = h1                         # aligned store

    # ---- conv2 (kxk) + BN2 + ReLU via tap accumulation ---------------------
    acc = jnp.zeros((mi, cp), jnp.float32)
    for t, shift in enumerate(shifts):                        # static unroll
        tap = h1_pad[pl.ds(margin + shift, mi), :].astype(jnp.bfloat16)
        acc = acc + jnp.dot(tap, w2_ref[t],
                            preferred_element_type=jnp.float32)
    h2 = jnp.maximum(acc + b2_ref[...], 0.0).astype(jnp.bfloat16)

    # ---- conv3 (1x1) + BN3 + residual + ReLU --------------------------------
    out = jnp.dot(h2, w3_ref[...], preferred_element_type=jnp.float32)
    out = jnp.maximum(out + b3_ref[...] + xp_ref[...], 0.0)
    o_ref[...] = out


# ---------------------------------------------------------------------------
# Wrapper: layout prep (NCHW -> padded flat NHWC), BN folding, pallas_call
# ---------------------------------------------------------------------------
def _fold_bn(gamma, beta, mean, var):
    scale = gamma / jnp.sqrt(var + BN_EPS)
    return scale, beta - mean * scale


def _prep_conv(w, scale, bias, cp):
    """w:(Cout,Cin,kh,kw) -> ((kh*kw, cp, cp) bf16 with BN scale folded,
    (1, cp) f32 bias)."""
    cout, cin, kh, kw = w.shape
    wm = jnp.transpose(w, (2, 3, 1, 0)) * scale               # (kh,kw,Cin,Cout)
    wm = jnp.pad(wm, ((0, 0), (0, 0), (0, cp - cin), (0, cp - cout)))
    wm = wm.reshape(kh * kw, cp, cp).astype(jnp.bfloat16)
    bm = jnp.pad(bias.reshape(1, cout), ((0, 0), (0, cp - cout))).astype(jnp.float32)
    return wm, bm


def identity_block3_forward(x_nchw, params):
    N, Cin, H, W = x_nchw.shape
    w1, w2, w3 = params['c1']['w'], params['c2']['w'], params['c3']['w']
    C1, C2, Cout = w1.shape[0], w2.shape[0], w3.shape[0]
    kh, kw = w2.shape[2], w2.shape[3]
    pad = (kh - 1) // 2                                       # odd kernel_size
    Hp, Wp = H + 2 * pad, W + 2 * pad
    Mi = Hp * Wp
    Cp = _round_up(max(Cin, C1, C2, Cout), LANE)
    margin = _round_up(pad * Wp + pad, 8) if pad > 0 else 0

    # NCHW -> padded-flat NHWC (N, Hp*Wp, Cp); channels zero-padded to 128 lanes.
    x = jnp.transpose(x_nchw, (0, 2, 3, 1))
    xp = jnp.pad(x, ((0, 0), (pad, pad), (pad, pad), (0, Cp - Cin)))
    xp = xp.reshape(N, Mi, Cp).astype(jnp.float32)

    # Static interior mask (1 at real pixels, 0 at spatial halo rows).
    m = np.zeros((Hp, Wp), np.float32)
    m[pad:pad + H, pad:pad + W] = 1.0
    mask = jnp.asarray(m.reshape(Mi, 1))

    w1m, b1m = _prep_conv(w1, params['c1']['s'], params['c1']['b'], Cp)
    w2m, b2m = _prep_conv(w2, params['c2']['s'], params['c2']['b'], Cp)
    w3m, b3m = _prep_conv(w3, params['c3']['s'], params['c3']['b'], Cp)
    w1m, w3m = w1m[0], w3m[0]                                  # 1x1 convs

    shifts = tuple((di - pad) * Wp + (dj - pad)
                   for di in range(kh) for dj in range(kw))
    nk = len(shifts)

    kernel = functools.partial(_identity_block_kernel, shifts=shifts,
                               margin=margin, mi=Mi, cp=Cp)

    flops = 2 * N * Mi * Cp * Cp * (2 + nk)
    bytes_accessed = (2 * N * Mi * Cp * 4                      # x in + out
                      + (w1m.size + w2m.size + w3m.size) * 2
                      + (b1m.size + b2m.size + b3m.size + mask.size) * 4)

    out = pl.pallas_call(
        kernel,
        out_shape=jax.ShapeDtypeStruct((N, Mi, Cp), jnp.float32),
        grid=(N,),
        in_specs=[
            pl.BlockSpec((None, Mi, Cp), lambda n: (n, 0, 0)),   # x (padded flat)
            pl.BlockSpec((Mi, 1), lambda n: (0, 0)),             # interior mask
            pl.BlockSpec((Cp, Cp), lambda n: (0, 0)),            # w1 (scale folded)
            pl.BlockSpec((1, Cp), lambda n: (0, 0)),             # b1
            pl.BlockSpec((nk, Cp, Cp), lambda n: (0, 0, 0)),     # w2 per-tap
            pl.BlockSpec((1, Cp), lambda n: (0, 0)),             # b2
            pl.BlockSpec((Cp, Cp), lambda n: (0, 0)),            # w3
            pl.BlockSpec((1, Cp), lambda n: (0, 0)),             # b3
        ],
        out_specs=pl.BlockSpec((None, Mi, Cp), lambda n: (n, 0, 0)),
        scratch_shapes=[pltpu.VMEM((Mi + 2 * margin, Cp), jnp.float32)],
        compiler_params=pltpu.CompilerParams(
            dimension_semantics=("parallel",)),
        cost_estimate=pl.CostEstimate(flops=flops, transcendentals=0,
                                      bytes_accessed=bytes_accessed),
    )(xp, mask, w1m, b1m, w2m, b2m, w3m, b3m)

    out = out.reshape(N, Hp, Wp, Cp)[:, pad:pad + H, pad:pad + W, :Cout]
    return jnp.transpose(out, (0, 3, 1, 2))                    # NHWC -> NCHW


# ---------------------------------------------------------------------------
# Parameter construction (conv weights + folded eval-mode BN)
# ---------------------------------------------------------------------------
def make_params(key, inplanes, planes, kernel_size):
    p1, p2, p3 = planes
    keys = iter(jax.random.split(key, 16))

    def conv_w(cout, cin, k):
        fan_out = cout * k * k
        std = float(np.sqrt(2.0 / fan_out))
        return std * jax.random.normal(next(keys), (cout, cin, k, k), jnp.float32)

    def bn(c):
        gamma = jax.random.uniform(next(keys), (c,), jnp.float32, 0.5, 1.5)
        beta = 0.1 * jax.random.normal(next(keys), (c,), jnp.float32)
        mean = 0.1 * jax.random.normal(next(keys), (c,), jnp.float32)
        var = jax.random.uniform(next(keys), (c,), jnp.float32, 0.5, 1.5)
        return _fold_bn(gamma, beta, mean, var)

    def conv_bn(cout, cin, k):
        w = conv_w(cout, cin, k)
        s, b = bn(cout)
        return {'w': w, 's': s, 'b': b}

    return {
        'c1': conv_bn(p1, inplanes, 1),
        'c2': conv_bn(p2, p1, kernel_size),
        'c3': conv_bn(p3, p2, 1),
    }


# ---------------------------------------------------------------------------
# Pure-JAX reference (XLA convs; mirrors bf16-operand / f32-accumulate numerics)
# ---------------------------------------------------------------------------
def _ref_conv_bn(x, w, s, b, residual=None):
    kh = w.shape[2]
    pad = (kh - 1) // 2
    wf = (jnp.transpose(w, (2, 3, 1, 0)) * s).astype(jnp.bfloat16)   # HWIO
    out = jax.lax.conv_general_dilated(
        x.astype(jnp.bfloat16), wf, (1, 1), [(pad, pad), (pad, pad)],
        dimension_numbers=('NHWC', 'HWIO', 'NHWC'),
        preferred_element_type=jnp.float32)
    out = out + b
    if residual is not None:
        out = out + residual
    return jnp.maximum(out, 0.0)


def _ref_forward(x_nchw, p):
    x = jnp.transpose(x_nchw, (0, 2, 3, 1))
    h = _ref_conv_bn(x, p['c1']['w'], p['c1']['s'], p['c1']['b'])
    h = _ref_conv_bn(h, p['c2']['w'], p['c2']['s'], p['c2']['b'])
    out = _ref_conv_bn(h, p['c3']['w'], p['c3']['s'], p['c3']['b'], residual=x)
    return jnp.transpose(out, (0, 3, 1, 2))


if __name__ == "__main__":
    # identity_block3(inplanes=64, planes=(32, 32, 64), kernel_size=3)
    inplanes, planes, ksize = 64, (32, 32, 64), 3
    N, H, W = 2, 16, 16

    key = jax.random.PRNGKey(0)
    k_x, k_p = jax.random.split(key)
    x = jax.random.normal(k_x, (N, inplanes, H, W), jnp.float32)   # NCHW
    params = make_params(k_p, inplanes, planes, ksize)

    fwd = jax.jit(identity_block3_forward)
    out = jax.block_until_ready(fwd(x, params))
    assert out.shape == (N, inplanes, H, W)

    ref = jax.block_until_ready(jax.jit(_ref_forward)(x, params))
    np.testing.assert_allclose(np.asarray(out), np.asarray(ref),
                               rtol=2e-2, atol=2e-2)

    print("KERNEL_OK")
</pallas_src>

<mosaic_0001>
module attributes {stable_mosaic.version = 11 : i64} {
  func.func @_identity_block_kernel(%arg0: i32, %arg1: memref<1x324x128xf32, #tpu.memory_space<vmem>>, %arg2: memref<324x1xf32, #tpu.memory_space<vmem>>, %arg3: memref<128x128xbf16, #tpu.memory_space<vmem>>, %arg4: memref<1x128xf32, #tpu.memory_space<vmem>>, %arg5: memref<9x128x128xbf16, #tpu.memory_space<vmem>>, %arg6: memref<1x128xf32, #tpu.memory_space<vmem>>, %arg7: memref<128x128xbf16, #tpu.memory_space<vmem>>, %arg8: memref<1x128xf32, #tpu.memory_space<vmem>>, %arg9: memref<1x324x128xf32, #tpu.memory_space<vmem>>, %arg10: memref<372x128xf32, #tpu.memory_space<vmem>>) attributes {dimension_semantics = [#tpu.dimension_semantics<parallel>], iteration_bounds = array<i64: 2>, scalar_prefetch = 0 : i64, scratch_operands = 1 : i64, tpu.core_type = #tpu.core_type<tc>, window_params = [{transform_indices = @transform_0, window_bounds = array<i64: 1, 324, 128>}, {pipeline_mode = #tpu.pipeline_mode<synchronous>, transform_indices = @transform_1, window_bounds = array<i64: 324, 1>}, {pipeline_mode = #tpu.pipeline_mode<synchronous>, transform_indices = @transform_2, window_bounds = array<i64: 128, 128>}, {pipeline_mode = #tpu.pipeline_mode<synchronous>, transform_indices = @transform_3, window_bounds = array<i64: 1, 128>}, {pipeline_mode = #tpu.pipeline_mode<synchronous>, transform_indices = @transform_4, window_bounds = array<i64: 9, 128, 128>}, {pipeline_mode = #tpu.pipeline_mode<synchronous>, transform_indices = @transform_5, window_bounds = array<i64: 1, 128>}, {pipeline_mode = #tpu.pipeline_mode<synchronous>, transform_indices = @transform_6, window_bounds = array<i64: 128, 128>}, {pipeline_mode = #tpu.pipeline_mode<synchronous>, transform_indices = @transform_7, window_bounds = array<i64: 1, 128>}, {transform_indices = @transform_8, window_bounds = array<i64: 1, 324, 128>}]} {
    %c0 = arith.constant 0 : index
    %c0_0 = arith.constant 0 : index
    %c0_1 = arith.constant 0 : index
    %0 = vector.load %arg1[%c0, %c0_0, %c0_1] : memref<1x324x128xf32, #tpu.memory_space<vmem>>, vector<1x324x128xf32>
    %1 = vector.shape_cast %0 : vector<1x324x128xf32> to vector<324x128xf32>
    %2 = arith.truncf %1 : vector<324x128xf32> to vector<324x128xbf16>
    %c0_2 = arith.constant 0 : index
    %c0_3 = arith.constant 0 : index
    %3 = vector.load %arg3[%c0_2, %c0_3] : memref<128x128xbf16, #tpu.memory_space<vmem>>, vector<128x128xbf16>
    %cst = arith.constant dense<0.000000e+00> : vector<324x128xf32>
    %4 = tpu.matmul %2, %3, %cst {dimension_numbers = #tpu.dot_dimension_numbers<[1], [0], [0], [1], [0, 0, 1, 1], [], []>} : vector<324x128xbf16>, vector<128x128xbf16>, vector<324x128xf32> -> vector<324x128xf32>
    %c0_4 = arith.constant 0 : index
    %c0_5 = arith.constant 0 : index
    %5 = vector.load %arg4[%c0_4, %c0_5] : memref<1x128xf32, #tpu.memory_space<vmem>>, vector<1x128xf32>
    %6 = vector.broadcast %5 : vector<1x128xf32> to vector<324x128xf32>
    %7 = arith.addf %4, %6 : vector<324x128xf32>
    %cst_6 = arith.constant 0.000000e+00 : f32
    %8 = vector.broadcast %cst_6 : f32 to vector<324x128xf32>
    %9 = arith.maximumf %7, %8 : vector<324x128xf32>
    %c0_7 = arith.constant 0 : index
    %c0_8 = arith.constant 0 : index
    %10 = vector.load %arg2[%c0_7, %c0_8] : memref<324x1xf32, #tpu.memory_space<vmem>>, vector<324x1xf32>
    %11 = vector.broadcast %10 : vector<324x1xf32> to vector<324x128xf32>
    %12 = arith.mulf %9, %11 : vector<324x128xf32>
    %cst_9 = arith.constant 0.000000e+00 : f32
    %13 = vector.broadcast %cst_9 : f32 to vector<372x128xf32>
    %c0_10 = arith.constant 0 : index
    %c0_11 = arith.constant 0 : index
    %14 = vector.load %arg10[%c0_10, %c0_11] : memref<372x128xf32, #tpu.memory_space<vmem>>, vector<372x128xf32>
    tpu.vector_store %arg10[%c0_10, %c0_11], %13 {strides = array<i32>} : memref<372x128xf32, #tpu.memory_space<vmem>>, vector<372x128xf32>,
    %c24 = arith.constant 24 : index
    %c0_12 = arith.constant 0 : index
    %15 = vector.load %arg10[%c24, %c0_12] : memref<372x128xf32, #tpu.memory_space<vmem>>, vector<324x128xf32>
    tpu.vector_store %arg10[%c24, %c0_12], %12 {strides = array<i32>} : memref<372x128xf32, #tpu.memory_space<vmem>>, vector<324x128xf32>,
    %cst_13 = arith.constant 0.000000e+00 : f32
    %16 = vector.broadcast %cst_13 : f32 to vector<324x128xf32>
    %c5 = arith.constant 5 : index
    %c0_14 = arith.constant 0 : index
    %17 = vector.load %arg10[%c5, %c0_14] : memref<372x128xf32, #tpu.memory_space<vmem>>, vector<324x128xf32>
    %18 = arith.truncf %17 : vector<324x128xf32> to vector<324x128xbf16>
    %c0_15 = arith.constant 0 : index
    %c0_16 = arith.constant 0 : index
    %c0_17 = arith.constant 0 : index
    %19 = vector.load %arg5[%c0_15, %c0_16, %c0_17] : memref<9x128x128xbf16, #tpu.memory_space<vmem>>, vector<1x128x128xbf16>
    %20 = vector.shape_cast %19 : vector<1x128x128xbf16> to vector<128x128xbf16>
    %cst_18 = arith.constant dense<0.000000e+00> : vector<324x128xf32>
    %21 = tpu.matmul %18, %20, %cst_18 {dimension_numbers = #tpu.dot_dimension_numbers<[1], [0], [0], [1], [0, 0, 1, 1], [], []>} : vector<324x128xbf16>, vector<128x128xbf16>, vector<324x128xf32> -> vector<324x128xf32>
    %22 = arith.addf %16, %21 : vector<324x128xf32>
    %c6 = arith.constant 6 : index
    %c0_19 = arith.constant 0 : index
    %23 = vector.load %arg10[%c6, %c0_19] : memref<372x128xf32, #tpu.memory_space<vmem>>, vector<324x128xf32>
    %24 = arith.truncf %23 : vector<324x128xf32> to vector<324x128xbf16>
    %c1 = arith.constant 1 : index
    %c0_20 = arith.constant 0 : index
    %c0_21 = arith.constant 0 : index
    %25 = vector.load %arg5[%c1, %c0_20, %c0_21] : memref<9x128x128xbf16, #tpu.memory_space<vmem>>, vector<1x128x128xbf16>
    %26 = vector.shape_cast %25 : vector<1x128x128xbf16> to vector<128x128xbf16>
    %cst_22 = arith.constant dense<0.000000e+00> : vector<324x128xf32>
    %27 = tpu.matmul %24, %26, %cst_22 {dimension_numbers = #tpu.dot_dimension_numbers<[1], [0], [0], [1], [0, 0, 1, 1], [], []>} : vector<324x128xbf16>, vector<128x128xbf16>, vector<324x128xf32> -> vector<324x128xf32>
    %28 = arith.addf %22, %27 : vector<324x128xf32>
    %c7 = arith.constant 7 : index
    %c0_23 = arith.constant 0 : index
    %29 = vector.load %arg10[%c7, %c0_23] : memref<372x128xf32, #tpu.memory_space<vmem>>, vector<324x128xf32>
    %30 = arith.truncf %29 : vector<324x128xf32> to vector<324x128xbf16>
    %c2 = arith.constant 2 : index
    %c0_24 = arith.constant 0 : index
    %c0_25 = arith.constant 0 : index
    %31 = vector.load %arg5[%c2, %c0_24, %c0_25] : memref<9x128x128xbf16, #tpu.memory_space<vmem>>, vector<1x128x128xbf16>
    %32 = vector.shape_cast %31 : vector<1x128x128xbf16> to vector<128x128xbf16>
    %cst_26 = arith.constant dense<0.000000e+00> : vector<324x128xf32>
    %33 = tpu.matmul %30, %32, %cst_26 {dimension_numbers = #tpu.dot_dimension_numbers<[1], [0], [0], [1], [0, 0, 1, 1], [], []>} : vector<324x128xbf16>, vector<128x128xbf16>, vector<324x128xf32> -> vector<324x128xf32>
    %34 = arith.addf %28, %33 : vector<324x128xf32>
    %c23 = arith.constant 23 : index
    %c0_27 = arith.constant 0 : index
    %35 = vector.load %arg10[%c23, %c0_27] : memref<372x128xf32, #tpu.memory_space<vmem>>, vector<324x128xf32>
    %36 = arith.truncf %35 : vector<324x128xf32> to vector<324x128xbf16>
    %c3 = arith.constant 3 : index
    %c0_28 = arith.constant 0 : index
    %c0_29 = arith.constant 0 : index
    %37 = vector.load %arg5[%c3, %c0_28, %c0_29] : memref<9x128x128xbf16, #tpu.memory_space<vmem>>, vector<1x128x128xbf16>
    %38 = vector.shape_cast %37 : vector<1x128x128xbf16> to vector<128x128xbf16>
    %cst_30 = arith.constant dense<0.000000e+00> : vector<324x128xf32>
    %39 = tpu.matmul %36, %38, %cst_30 {dimension_numbers = #tpu.dot_dimension_numbers<[1], [0], [0], [1], [0, 0, 1, 1], [], []>} : vector<324x128xbf16>, vector<128x128xbf16>, vector<324x128xf32> -> vector<324x128xf32>
    %40 = arith.addf %34, %39 : vector<324x128xf32>
    %c24_31 = arith.constant 24 : index
    %c0_32 = arith.constant 0 : index
    %41 = vector.load %arg10[%c24_31, %c0_32] : memref<372x128xf32, #tpu.memory_space<vmem>>, vector<324x128xf32>
    %42 = arith.truncf %41 : vector<324x128xf32> to vector<324x128xbf16>
    %c4 = arith.constant 4 : index
    %c0_33 = arith.constant 0 : index
    %c0_34 = arith.constant 0 : index
    %43 = vector.load %arg5[%c4, %c0_33, %c0_34] : memref<9x128x128xbf16, #tpu.memory_space<vmem>>, vector<1x128x128xbf16>
    %44 = vector.shape_cast %43 : vector<1x128x128xbf16> to vector<128x128xbf16>
    %cst_35 = arith.constant dense<0.000000e+00> : vector<324x128xf32>
    %45 = tpu.matmul %42, %44, %cst_35 {dimension_numbers = #tpu.dot_dimension_numbers<[1], [0], [0], [1], [0, 0, 1, 1], [], []>} : vector<324x128xbf16>, vector<128x128xbf16>, vector<324x128xf32> -> vector<324x128xf32>
    %46 = arith.addf %40, %45 : vector<324x128xf32>
    %c25 = arith.constant 25 : index
    %c0_36 = arith.constant 0 : index
    %47 = vector.load %arg10[%c25, %c0_36] : memref<372x128xf32, #tpu.memory_space<vmem>>, vector<324x128xf32>
    %48 = arith.truncf %47 : vector<324x128xf32> to vector<324x128xbf16>
    %c5_37 = arith.constant 5 : index
    %c0_38 = arith.constant 0 : index
    %c0_39 = arith.constant 0 : index
    %49 = vector.load %arg5[%c5_37, %c0_38, %c0_39] : memref<9x128x128xbf16, #tpu.memory_space<vmem>>, vector<1x128x128xbf16>
    %50 = vector.shape_cast %49 : vector<1x128x128xbf16> to vector<128x128xbf16>
    %cst_40 = arith.constant dense<0.000000e+00> : vector<324x128xf32>
    %51 = tpu.matmul %48, %50, %cst_40 {dimension_numbers = #tpu.dot_dimension_numbers<[1], [0], [0], [1], [0, 0, 1, 1], [], []>} : vector<324x128xbf16>, vector<128x128xbf16>, vector<324x128xf32> -> vector<324x128xf32>
    %52 = arith.addf %46, %51 : vector<324x128xf32>
    %c41 = arith.constant 41 : index
    %c0_41 = arith.constant 0 : index
    %53 = vector.load %arg10[%c41, %c0_41] : memref<372x128xf32, #tpu.memory_space<vmem>>, vector<324x128xf32>
    %54 = arith.truncf %53 : vector<324x128xf32> to vector<324x128xbf16>
    %c6_42 = arith.constant 6 : index
    %c0_43 = arith.constant 0 : index
    %c0_44 = arith.constant 0 : index
    %55 = vector.load %arg5[%c6_42, %c0_43, %c0_44] : memref<9x128x128xbf16, #tpu.memory_space<vmem>>, vector<1x128x128xbf16>
    %56 = vector.shape_cast %55 : vector<1x128x128xbf16> to vector<128x128xbf16>
    %cst_45 = arith.constant dense<0.000000e+00> : vector<324x128xf32>
    %57 = tpu.matmul %54, %56, %cst_45 {dimension_numbers = #tpu.dot_dimension_numbers<[1], [0], [0], [1], [0, 0, 1, 1], [], []>} : vector<324x128xbf16>, vector<128x128xbf16>, vector<324x128xf32> -> vector<324x128xf32>
    %58 = arith.addf %52, %57 : vector<324x128xf32>
    %c42 = arith.constant 42 : index
    %c0_46 = arith.constant 0 : index
    %59 = vector.load %arg10[%c42, %c0_46] : memref<372x128xf32, #tpu.memory_space<vmem>>, vector<324x128xf32>
    %60 = arith.truncf %59 : vector<324x128xf32> to vector<324x128xbf16>
    %c7_47 = arith.constant 7 : index
    %c0_48 = arith.constant 0 : index
    %c0_49 = arith.constant 0 : index
    %61 = vector.load %arg5[%c7_47, %c0_48, %c0_49] : memref<9x128x128xbf16, #tpu.memory_space<vmem>>, vector<1x128x128xbf16>
    %62 = vector.shape_cast %61 : vector<1x128x128xbf16> to vector<128x128xbf16>
    %cst_50 = arith.constant dense<0.000000e+00> : vector<324x128xf32>
    %63 = tpu.matmul %60, %62, %cst_50 {dimension_numbers = #tpu.dot_dimension_numbers<[1], [0], [0], [1], [0, 0, 1, 1], [], []>} : vector<324x128xbf16>, vector<128x128xbf16>, vector<324x128xf32> -> vector<324x128xf32>
    %64 = arith.addf %58, %63 : vector<324x128xf32>
    %c43 = arith.constant 43 : index
    %c0_51 = arith.constant 0 : index
    %65 = vector.load %arg10[%c43, %c0_51] : memref<372x128xf32, #tpu.memory_space<vmem>>, vector<324x128xf32>
    %66 = arith.truncf %65 : vector<324x128xf32> to vector<324x128xbf16>
    %c8 = arith.constant 8 : index
    %c0_52 = arith.constant 0 : index
    %c0_53 = arith.constant 0 : index
    %67 = vector.load %arg5[%c8, %c0_52, %c0_53] : memref<9x128x128xbf16, #tpu.memory_space<vmem>>, vector<1x128x128xbf16>
    %68 = vector.shape_cast %67 : vector<1x128x128xbf16> to vector<128x128xbf16>
    %cst_54 = arith.constant dense<0.000000e+00> : vector<324x128xf32>
    %69 = tpu.matmul %66, %68, %cst_54 {dimension_numbers = #tpu.dot_dimension_numbers<[1], [0], [0], [1], [0, 0, 1, 1], [], []>} : vector<324x128xbf16>, vector<128x128xbf16>, vector<324x128xf32> -> vector<324x128xf32>
    %70 = arith.addf %64, %69 : vector<324x128xf32>
    %c0_55 = arith.constant 0 : index
    %c0_56 = arith.constant 0 : index
    %71 = vector.load %arg6[%c0_55, %c0_56] : memref<1x128xf32, #tpu.memory_space<vmem>>, vector<1x128xf32>
    %72 = vector.broadcast %71 : vector<1x128xf32> to vector<324x128xf32>
    %73 = arith.addf %70, %72 : vector<324x128xf32>
    %cst_57 = arith.constant 0.000000e+00 : f32
    %74 = vector.broadcast %cst_57 : f32 to vector<324x128xf32>
    %75 = arith.maximumf %73, %74 : vector<324x128xf32>
    %76 = arith.truncf %75 : vector<324x128xf32> to vector<324x128xbf16>
    %c0_58 = arith.constant 0 : index
    %c0_59 = arith.constant 0 : index
    %77 = vector.load %arg7[%c0_58, %c0_59] : memref<128x128xbf16, #tpu.memory_space<vmem>>, vector<128x128xbf16>
    %cst_60 = arith.constant dense<0.000000e+00> : vector<324x128xf32>
    %78 = tpu.matmul %76, %77, %cst_60 {dimension_numbers = #tpu.dot_dimension_numbers<[1], [0], [0], [1], [0, 0, 1, 1], [], []>} : vector<324x128xbf16>, vector<128x128xbf16>, vector<324x128xf32> -> vector<324x128xf32>
    %c0_61 = arith.constant 0 : index
    %c0_62 = arith.constant 0 : index
    %79 = vector.load %arg8[%c0_61, %c0_62] : memref<1x128xf32, #tpu.memory_space<vmem>>, vector<1x128xf32>
    %80 = vector.broadcast %79 : vector<1x128xf32> to vector<324x128xf32>
    %81 = arith.addf %78, %80 : vector<324x128xf32>
    %c0_63 = arith.constant 0 : index
    %c0_64 = arith.constant 0 : index
    %c0_65 = arith.constant 0 : index
    %82 = vector.load %arg1[%c0_63, %c0_64, %c0_65] : memref<1x324x128xf32, #tpu.memory_space<vmem>>, vector<1x324x128xf32>
    %83 = vector.shape_cast %82 : vector<1x324x128xf32> to vector<324x128xf32>
    %84 = arith.addf %81, %83 : vector<324x128xf32>
    %cst_66 = arith.constant 0.000000e+00 : f32
    %85 = vector.broadcast %cst_66 : f32 to vector<324x128xf32>
    %86 = arith.maximumf %84, %85 : vector<324x128xf32>
    %c0_67 = arith.constant 0 : index
    %c0_68 = arith.constant 0 : index
    %c0_69 = arith.constant 0 : index
    %87 = vector.load %arg9[%c0_67, %c0_68, %c0_69] : memref<1x324x128xf32, #tpu.memory_space<vmem>>, vector<1x324x128xf32>
    %88 = vector.shape_cast %87 : vector<1x324x128xf32> to vector<324x128xf32>
    %89 = vector.shape_cast %86 : vector<324x128xf32> to vector<1x324x128xf32>
    tpu.vector_store %arg9[%c0_67, %c0_68, %c0_69], %89 {strides = array<i32>} : memref<1x324x128xf32, #tpu.memory_space<vmem>>, vector<1x324x128xf32>,
    return
  }
  func.func @transform_0(%arg0: i32) -> (i32, i32, i32) {
    %c0_i32 = arith.constant 0 : i32
    %c0_i32_0 = arith.constant 0 : i32
    %c0_i32_1 = arith.constant 0 : i32
    return %arg0, %c0_i32, %c0_i32_0 : i32, i32, i32
  }
  func.func @transform_1(%arg0: i32) -> (i32, i32) {
    %c0_i32 = arith.constant 0 : i32
    %c0_i32_0 = arith.constant 0 : i32
    %c0_i32_1 = arith.constant 0 : i32
    return %c0_i32, %c0_i32_0 : i32, i32
  }
  func.func @transform_2(%arg0: i32) -> (i32, i32) {
    %c0_i32 = arith.constant 0 : i32
    %c0_i32_0 = arith.constant 0 : i32
    %c0_i32_1 = arith.constant 0 : i32
    return %c0_i32, %c0_i32_0 : i32, i32
  }
  func.func @transform_3(%arg0: i32) -> (i32, i32) {
    %c0_i32 = arith.constant 0 : i32
    %c0_i32_0 = arith.constant 0 : i32
    %c0_i32_1 = arith.constant 0 : i32
    return %c0_i32, %c0_i32_0 : i32, i32
  }
  func.func @transform_4(%arg0: i32) -> (i32, i32, i32) {
    %c0_i32 = arith.constant 0 : i32
    %c0_i32_0 = arith.constant 0 : i32
    %c0_i32_1 = arith.constant 0 : i32
    %c0_i32_2 = arith.constant 0 : i32
    return %c0_i32, %c0_i32_0, %c0_i32_1 : i32, i32, i32
  }
  func.func @transform_5(%arg0: i32) -> (i32, i32) {
    %c0_i32 = arith.constant 0 : i32
    %c0_i32_0 = arith.constant 0 : i32
    %c0_i32_1 = arith.constant 0 : i32
    return %c0_i32, %c0_i32_0 : i32, i32
  }
  func.func @transform_6(%arg0: i32) -> (i32, i32) {
    %c0_i32 = arith.constant 0 : i32
    %c0_i32_0 = arith.constant 0 : i32
    %c0_i32_1 = arith.constant 0 : i32
    return %c0_i32, %c0_i32_0 : i32, i32
  }
  func.func @transform_7(%arg0: i32) -> (i32, i32) {
    %c0_i32 = arith.constant 0 : i32
    %c0_i32_0 = arith.constant 0 : i32
    %c0_i32_1 = arith.constant 0 : i32
    return %c0_i32, %c0_i32_0 : i32, i32
  }
  func.func @transform_8(%arg0: i32) -> (i32, i32, i32) {
    %c0_i32 = arith.constant 0 : i32
    %c0_i32_0 = arith.constant 0 : i32
    %c0_i32_1 = arith.constant 0 : i32
    return %arg0, %c0_i32, %c0_i32_0 : i32, i32, i32
  }
}

</mosaic_0001>

<llo_original>
// kernel: identity_block3_forward.1
$region0: #{identity_block3_forward.1}
  #allocation0 [shape = 'u32[]', space=smem, size = 0x4, offset = 0x4, fixed_abs, tag = 'smem constant byte address 0x4 - core index']
  #allocation1 [shape = 'u32[144,128]{1,0:T(1,128)}', space=vmem, size = 0x12000, scoped, tag = 'internal scratch']
  #allocation2 [shape = 'f32[372,128]{1,0:T(8,128)}', space=vmem, size = 0x2f000, scoped, tag = 'scratch operand']
  %s0 = inlined_call_operand.vmem [shape: f32[2,324,128], index: 0, kind: input, shape index: {}]
  %s1 = inlined_call_operand.vmem [shape: f32[324,1], index: 1, kind: input, shape index: {}]
  %s2 = inlined_call_operand.vmem [shape: bf16[128,128], index: 2, kind: input, shape index: {}]
  %s3 = inlined_call_operand.vmem [shape: f32[1,128], index: 3, kind: input, shape index: {}]
  %s4 = inlined_call_operand.vmem [shape: bf16[9,128,128], index: 4, kind: input, shape index: {}]
  %s5 = inlined_call_operand.vmem [shape: f32[1,128], index: 5, kind: input, shape index: {}]
  %s6 = inlined_call_operand.vmem [shape: bf16[128,128], index: 6, kind: input, shape index: {}]
  %s7 = inlined_call_operand.vmem [shape: f32[1,128], index: 7, kind: input, shape index: {}]
  %s8 = inlined_call_operand.vmem [shape: f32[2,324,128], index: 8, kind: output, shape index: {}]
  %s9 = sld [smem:[#allocation0]]
  $region65: #{identity_block3_forward.1} parent=0
    _
  %s11 = ssub.s32 1, %s9
  %s12 = scalar_select 0, %s11, %s9
  loop: start=0, step=1, limit=4
  $region2: #{identity_block3_forward.1} parent=0 // loop_pre_header
    _
  $region3: #{identity_block3_forward.1} parent=0 // loop_header
    %s14 = sphi 0, %s18
    %p15 = scmp.ge.s32.totalorder %s14, 4
    %s24 = sphi 0, %s26
    %s27 = sphi 0, %s24
    %s28 = sphi 0, %s27
    %s44 = sphi 0, %s28
    %s48 = sphi 0, %s48
    %s50 = sphi 0, %s48
    %s51 = sphi 0, %s50
    %s65 = sphi 0, %s51
    %s69 = sphi 0, %s69
    %s71 = sphi 0, %s69
    %s72 = sphi 0, %s71
    %s86 = sphi 0, %s72
    %s90 = sphi 0, %s90
    %s92 = sphi 0, %s90
    %s93 = sphi 0, %s92
    %s107 = sphi 0, %s93
    %s111 = sphi 0, %s111
    %s113 = sphi 0, %s111
    %s114 = sphi 0, %s113
    %s128 = sphi 0, %s114
    %s132 = sphi 0, %s132
    %s134 = sphi 0, %s132
    %s135 = sphi 0, %s134
    %s149 = sphi 0, %s135
    %s153 = sphi 0, %s153
    %s155 = sphi 0, %s153
    %s156 = sphi 0, %s155
    %s170 = sphi 0, %s156
    %s174 = sphi 0, %s174
    %s176 = sphi 0, %s174
    %s177 = sphi 0, %s176
    %s191 = sphi 0, %s177
    %s197 = sphi 0, %s199
    %s200 = sphi 0, %s197
    %s201 = sphi 0, %s200
    %s217 = sphi 0, %s201
  $region4: #{identity_block3_forward.1} parent=0 // loop_header_branch
    %17 = sbr.rel (%p15) target = $region8
  $region5: #{identity_block3_forward.1} parent=0 // loop_body
    %s19 = ssub.s32 %s14, 1
    %s20 = ssub.s32 %s14, 2
    %s21 = sadd.s32 %s14, 1
    %s22 = ssub.s32 %s14, %s21
    %p23 = scmp.eq.s32.totalorder %s22, 0
    %s25 = sadd.s32 %s24, 1
    %s26 = scalar_select %p23, %s24, %s25
    %p29 = pneg %p23
    %p30 = scmp.eq.s32.totalorder %s14, 1
    %p31 = por %p29, %p30
    %p32 = scmp.ne.s32.totalorder %s24, %s27
    %p33 = scmp.eq.s32.totalorder %s14, 0
    %p34 = por %p32, %p33
    %p35 = scmp.ne.s32.totalorder %s24, %s27
    %p36 = scmp.eq.s32.totalorder %s19, 1
    %p37 = por %p35, %p36
    %p38 = scmp.ne.s32.totalorder %s27, %s28
    %p39 = scmp.eq.s32.totalorder %s19, 0
    %p40 = por %p38, %p39
    %p41 = scmp.ne.s32.totalorder %s27, %s28
    %p42 = scmp.eq.s32.totalorder %s20, 1
    %p43 = por %p41, %p42
    %p45 = scmp.ne.s32.totalorder %s28, %s44
    %p46 = scmp.eq.s32.totalorder %s20, 0
    %p47 = por %p45, %p46
    %s49 = sadd.s32 %s48, 1
    %p52 = scmp.eq.s32.totalorder %s14, 1
    %p53 = scmp.ne.s32.totalorder %s48, %s50
    %p54 = scmp.eq.s32.totalorder %s14, 0
    %p55 = por %p53, %p54
    %p56 = scmp.ne.s32.totalorder %s48, %s50
    %p57 = scmp.eq.s32.totalorder %s19, 1
    %p58 = por %p56, %p57
    %p59 = scmp.ne.s32.totalorder %s50, %s51
    %p60 = scmp.eq.s32.totalorder %s19, 0
    %p61 = por %p59, %p60
    %p62 = scmp.ne.s32.totalorder %s50, %s51
    %p63 = scmp.eq.s32.totalorder %s20, 1
    %p64 = por %p62, %p63
    %p66 = scmp.ne.s32.totalorder %s51, %s65
    %p67 = scmp.eq.s32.totalorder %s20, 0
    %p68 = por %p66, %p67
    %s70 = sadd.s32 %s69, 1
    %p73 = scmp.eq.s32.totalorder %s14, 1
    %p74 = scmp.ne.s32.totalorder %s69, %s71
    %p75 = scmp.eq.s32.totalorder %s14, 0
    %p76 = por %p74, %p75
    %p77 = scmp.ne.s32.totalorder %s69, %s71
    %p78 = scmp.eq.s32.totalorder %s19, 1
    %p79 = por %p77, %p78
    %p80 = scmp.ne.s32.totalorder %s71, %s72
    %p81 = scmp.eq.s32.totalorder %s19, 0
    %p82 = por %p80, %p81
    %p83 = scmp.ne.s32.totalorder %s71, %s72
    %p84 = scmp.eq.s32.totalorder %s20, 1
    %p85 = por %p83, %p84
    %p87 = scmp.ne.s32.totalorder %s72, %s86
    %p88 = scmp.eq.s32.totalorder %s20, 0
    %p89 = por %p87, %p88
    %s91 = sadd.s32 %s90, 1
    %p94 = scmp.eq.s32.totalorder %s14, 1
    %p95 = scmp.ne.s32.totalorder %s90, %s92
    %p96 = scmp.eq.s32.totalorder %s14, 0
    %p97 = por %p95, %p96
    %p98 = scmp.ne.s32.totalorder %s90, %s92
    %p99 = scmp.eq.s32.totalorder %s19, 1
    %p100 = por %p98, %p99
    %p101 = scmp.ne.s32.totalorder %s92, %s93
    %p102 = scmp.eq.s32.totalorder %s19, 0
    %p103 = por %p101, %p102
    %p104 = scmp.ne.s32.totalorder %s92, %s93
    %p105 = scmp.eq.s32.totalorder %s20, 1
    %p106 = por %p104, %p105
    %p108 = scmp.ne.s32.totalorder %s93, %s107
    %p109 = scmp.eq.s32.totalorder %s20, 0
    %p110 = por %p108, %p109
    %s112 = sadd.s32 %s111, 1
    %p115 = scmp.eq.s32.totalorder %s14, 1
    %p116 = scmp.ne.s32.totalorder %s111, %s113
    %p117 = scmp.eq.s32.totalorder %s14, 0
    %p118 = por %p116, %p117
    %p119 = scmp.ne.s32.totalorder %s111, %s113
    %p120 = scmp.eq.s32.totalorder %s19, 1
    %p121 = por %p119, %p120
    %p122 = scmp.ne.s32.totalorder %s113, %s114
    %p123 = scmp.eq.s32.totalorder %s19, 0
    %p124 = por %p122, %p123
    %p125 = scmp.ne.s32.totalorder %s113, %s114
    %p126 = scmp.eq.s32.totalorder %s20, 1
    %p127 = por %p125, %p126
    %p129 = scmp.ne.s32.totalorder %s114, %s128
    %p130 = scmp.eq.s32.totalorder %s20, 0
    %p131 = por %p129, %p130
    %s133 = sadd.s32 %s132, 1
    %p136 = scmp.eq.s32.totalorder %s14, 1
    %p137 = scmp.ne.s32.totalorder %s132, %s134
    %p138 = scmp.eq.s32.totalorder %s14, 0
    %p139 = por %p137, %p138
    %p140 = scmp.ne.s32.totalorder %s132, %s134
    %p141 = scmp.eq.s32.totalorder %s19, 1
    %p142 = por %p140, %p141
    %p143 = scmp.ne.s32.totalorder %s134, %s135
    %p144 = scmp.eq.s32.totalorder %s19, 0
    %p145 = por %p143, %p144
    %p146 = scmp.ne.s32.totalorder %s134, %s135
    %p147 = scmp.eq.s32.totalorder %s20, 1
    %p148 = por %p146, %p147
    %p150 = scmp.ne.s32.totalorder %s135, %s149
    %p151 = scmp.eq.s32.totalorder %s20, 0
    %p152 = por %p150, %p151
    %s154 = sadd.s32 %s153, 1
    %p157 = scmp.eq.s32.totalorder %s14, 1
    %p158 = scmp.ne.s32.totalorder %s153, %s155
    %p159 = scmp.eq.s32.totalorder %s14, 0
    %p160 = por %p158, %p159
    %p161 = scmp.ne.s32.totalorder %s153, %s155
    %p162 = scmp.eq.s32.totalorder %s19, 1
    %p163 = por %p161, %p162
    %p164 = scmp.ne.s32.totalorder %s155, %s156
    %p165 = scmp.eq.s32.totalorder %s19, 0
    %p166 = por %p164, %p165
    %p167 = scmp.ne.s32.totalorder %s155, %s156
    %p168 = scmp.eq.s32.totalorder %s20, 1
    %p169 = por %p167, %p168
    %p171 = scmp.ne.s32.totalorder %s156, %s170
    %p172 = scmp.eq.s32.totalorder %s20, 0
    %p173 = por %p171, %p172
    %s175 = sadd.s32 %s174, 1
    %p178 = scmp.eq.s32.totalorder %s14, 1
    %p179 = scmp.ne.s32.totalorder %s174, %s176
    %p180 = scmp.eq.s32.totalorder %s14, 0
    %p181 = por %p179, %p180
    %p182 = scmp.ne.s32.totalorder %s174, %s176
    %p183 = scmp.eq.s32.totalorder %s19, 1
    %p184 = por %p182, %p183
    %p185 = scmp.ne.s32.totalorder %s176, %s177
    %p186 = scmp.eq.s32.totalorder %s19, 0
    %p187 = por %p185, %p186
    %p188 = scmp.ne.s32.totalorder %s176, %s177
    %p189 = scmp.eq.s32.totalorder %s20, 1
    %p190 = por %p188, %p189
    %p192 = scmp.ne.s32.totalorder %s177, %s191
    %p193 = scmp.eq.s32.totalorder %s20, 0
    %p194 = por %p192, %p193
    %s195 = ssub.s32 %s14, %s21
    %p196 = scmp.eq.s32.totalorder %s195, 0
    %s198 = sadd.s32 %s197, 1
    %s199 = scalar_select %p196, %s197, %s198
    %p202 = pneg %p196
    %p203 = scmp.eq.s32.totalorder %s14, 1
    %p204 = por %p202, %p203
    %p205 = scmp.ne.s32.totalorder %s197, %s200
    %p206 = scmp.eq.s32.totalorder %s14, 0
    %p207 = por %p205, %p206
    %p208 = scmp.ne.s32.totalorder %s197, %s200
    %p209 = scmp.eq.s32.totalorder %s19, 1
    %p210 = por %p208, %p209
    %p211 = scmp.ne.s32.totalorder %s200, %s201
    %p212 = scmp.eq.s32.totalorder %s19, 0
    %p213 = por %p211, %p212
    %p214 = scmp.ne.s32.totalorder %s200, %s201
    %p215 = scmp.eq.s32.totalorder %s20, 1
    %p216 = por %p214, %p215
    %p218 = scmp.ne.s32.totalorder %s201, %s217
    %p219 = scmp.eq.s32.totalorder %s20, 0
    %p220 = por %p218, %p219
    %p221 = scmp.le.s32.totalorder 1, %s14
    %p222 = scmp.lt.s32.totalorder %s14, 3
    %p223 = pnand %p221, %p222
    %p224 = pneg %p223
    // Predicated region
    $region9: #{identity_block3_forward.1} parent=5 // pred_check
      _
    $region10: #{identity_block3_forward.1} parent=5 // pred_check_branch
      %226 = sbr.rel (%p223) target = $region12
    $region11: #{identity_block3_forward.1} parent=5 // pred_region
      %s227 = ssub.s32 %s14, 1
      // Predicated region
      $region13: #{identity_block3_forward.1} parent=11 // pred_check
        %p228 = pneg %p61
      $region14: #{identity_block3_forward.1} parent=11 // pred_check_branch
        %230 = sbr.rel (%p228) target = $region16
      $region15: #{identity_block3_forward.1} parent=11 // pred_region
        _
      $region16: #{identity_block3_forward.1} parent=11 // pred_fallthru
        _
      // Predicated region
      $region17: #{identity_block3_forward.1} parent=11 // pred_check
        %p231 = pneg %p82
      $region18: #{identity_block3_forward.1} parent=11 // pred_check_branch
        %233 = sbr.rel (%p231) target = $region20
      $region19: #{identity_block3_forward.1} parent=11 // pred_region
        _
      $region20: #{identity_block3_forward.1} parent=11 // pred_fallthru
        _
      // Predicated region
      $region21: #{identity_block3_forward.1} parent=11 // pred_check
        %p234 = pneg %p103
      $region22: #{identity_block3_forward.1} parent=11 // pred_check_branch
        %236 = sbr.rel (%p234) target = $region24
      $region23: #{identity_block3_forward.1} parent=11 // pred_region
        _
      $region24: #{identity_block3_forward.1} parent=11 // pred_fallthru
        _
      // Predicated region
      $region25: #{identity_block3_forward.1} parent=11 // pred_check
        %p237 = pneg %p124
      $region26: #{identity_block3_forward.1} parent=11 // pred_check_branch
        %239 = sbr.rel (%p237) target = $region28
      $region27: #{identity_block3_forward.1} parent=11 // pred_region
        _
      $region28: #{identity_block3_forward.1} parent=11 // pred_fallthru
        _
      // Predicated region
      $region29: #{identity_block3_forward.1} parent=11 // pred_check
        %p240 = pneg %p145
      $region30: #{identity_block3_forward.1} parent=11 // pred_check_branch
        %242 = sbr.rel (%p240) target = $region32
      $region31: #{identity_block3_forward.1} parent=11 // pred_region
        _
      $region32: #{identity_block3_forward.1} parent=11 // pred_fallthru
        _
      // Predicated region
      $region33: #{identity_block3_forward.1} parent=11 // pred_check
        %p243 = pneg %p166
      $region34: #{identity_block3_forward.1} parent=11 // pred_check_branch
        %245 = sbr.rel (%p243) target = $region36
      $region35: #{identity_block3_forward.1} parent=11 // pred_region
        _
      $region36: #{identity_block3_forward.1} parent=11 // pred_fallthru
        _
      // Predicated region
      $region37: #{identity_block3_forward.1} parent=11 // pred_check
        %p246 = pneg %p187
      $region38: #{identity_block3_forward.1} parent=11 // pred_check_branch
        %248 = sbr.rel (%p246) target = $region40
      $region39: #{identity_block3_forward.1} parent=11 // pred_region
        _
      $region40: #{identity_block3_forward.1} parent=11 // pred_fallthru
        _
    $region12: #{identity_block3_forward.1} parent=5 // pred_fallthru
      _
    %p249 = scmp.lt.s32.totalorder %s14, 2
    // Predicated region
    $region41: #{identity_block3_forward.1} parent=5 // pred_check
      %p250 = pneg %p249
    $region42: #{identity_block3_forward.1} parent=5 // pred_check_branch
      %252 = sbr.rel (%p250) target = $region44
    $region43: #{identity_block3_forward.1} parent=5 // pred_region
      // Predicated region
      $region45: #{identity_block3_forward.1} parent=43 // pred_check
        %p253 = pneg %p34
      $region46: #{identity_block3_forward.1} parent=43 // pred_check_branch
        %255 = sbr.rel (%p253) target = $region48
      $region47: #{identity_block3_forward.1} parent=43 // pred_region
        %p256 = scmp.lt.s32.totalorder %s14, 1
        %s257 = scalar_select %p256, %s14, 1
        %s258 = smul.addr %s257, 41
        %s259 = smul.addr %s258, 8
        %s260 = scalar_lea.vmem %s0, %s259
      $region48: #{identity_block3_forward.1} parent=43 // pred_fallthru
        _
    $region44: #{identity_block3_forward.1} parent=5 // pred_fallthru
      _
    %p261 = scmp.le.s32.totalorder 1, %s14
    %p262 = scmp.lt.s32.totalorder %s14, 3
    %p263 = pnand %p261, %p262
    %p264 = pneg %p263
    // Predicated region
    $region49: #{identity_block3_forward.1} parent=5 // pred_check
      _
    $region50: #{identity_block3_forward.1} parent=5 // pred_check_branch
      %266 = sbr.rel (%p263) target = $region52
    $region51: #{identity_block3_forward.1} parent=5 // pred_region
      %s267 = ssub.s32 %s14, 1
      %p268 = scmp.lt.s32.totalorder %s19, 1
      %s269 = scalar_select %p268, %s19, 1
      %s270 = smul.addr %s269, 41
      %s271 = smul.addr %s270, 8
      %s272 = scalar_lea.vmem %s0, %s271
      %p273 = pneg %p40
      %p274 = pneg %p37
      %p275 = pneg %p61
      %p276 = pneg %p58
      %p277 = pneg %p82
      %p278 = pneg %p79
      %p279 = pneg %p103
      %p280 = pneg %p100
      %p281 = pneg %p124
      %p282 = pneg %p121
      %p283 = pneg %p145
      %p284 = pneg %p142
      %p285 = pneg %p166
      %p286 = pneg %p163
      %p287 = pneg %p187
      %p288 = pneg %p184
      %p289 = pneg %p213
      %p290 = pneg %p210
      %p291 = scmp.lt.s32.totalorder %s19, 1
      %s292 = scalar_select %p291, %s19, 1
      %s293 = smul.addr %s292, 41
      %s294 = smul.addr %s293, 8
      %s295 = scalar_lea.vmem %s8, %s294
      %p296 = scmp.lt.s32.totalorder %s19, 1
      %s297 = scalar_select %p296, %s19, 1
      %s298 = smul.addr %s297, 41
      %s299 = smul.addr %s298, 8
      %s300 = scalar_lea.vmem %s0, %s299
      %p301 = scmp.lt.s32.totalorder %s19, 1
      %s302 = scalar_select %p301, %s19, 1
      %s303 = smul.addr %s302, 41
      %s304 = smul.addr %s303, 8
      %s305 = scalar_lea.vmem %s8, %s304
      %v307 = vld [vmem:[%s300] sm:$0xff]
      %v308 = vld [vmem:[%s300 + $0x8] sm:$0xff]
      %v309 = vld [vmem:[%s300 + $0x10] sm:$0xff]
      %v310 = vld [vmem:[%s300 + $0x18] sm:$0xff]
      %v311 = vld [vmem:[%s300 + $0x20] sm:$0xff]
      %v312 = vld [vmem:[%s300 + $0x28] sm:$0xff]
      %v313 = vld [vmem:[%s300 + $0x30] sm:$0xff]
      %v314 = vld [vmem:[%s300 + $0x38] sm:$0xff]
      %v315 = vld [vmem:[%s300 + $0x40] sm:$0xff]
      %v316 = vld [vmem:[%s300 + $0x48] sm:$0xff]
      %v317 = vld [vmem:[%s300 + $0x50] sm:$0xff]
      %v318 = vld [vmem:[%s300 + $0x58] sm:$0xff]
      %v319 = vld [vmem:[%s300 + $0x60] sm:$0xff]
      %v320 = vld [vmem:[%s300 + $0x68] sm:$0xff]
      %v321 = vld [vmem:[%s300 + $0x70] sm:$0xff]
      %v322 = vld [vmem:[%s300 + $0x78] sm:$0xff]
      %v323 = vld [vmem:[%s300 + $0x80] sm:$0xff]
      %v324 = vld [vmem:[%s300 + $0x88] sm:$0xff]
      %v325 = vld [vmem:[%s300 + $0x90] sm:$0xff]
      %v326 = vld [vmem:[%s300 + $0x98] sm:$0xff]
      %v327 = vld [vmem:[%s300 + $0xa0] sm:$0xff]
      %v328 = vld [vmem:[%s300 + $0xa8] sm:$0xff]
      %v329 = vld [vmem:[%s300 + $0xb0] sm:$0xff]
      %v330 = vld [vmem:[%s300 + $0xb8] sm:$0xff]
      %v331 = vld [vmem:[%s300 + $0xc0] sm:$0xff]
      %v332 = vld [vmem:[%s300 + $0xc8] sm:$0xff]
      %v333 = vld [vmem:[%s300 + $0xd0] sm:$0xff]
      %v334 = vld [vmem:[%s300 + $0xd8] sm:$0xff]
      %v335 = vld [vmem:[%s300 + $0xe0] sm:$0xff]
      %v336 = vld [vmem:[%s300 + $0xe8] sm:$0xff]
      %v337 = vld [vmem:[%s300 + $0xf0] sm:$0xff]
      %v338 = vld [vmem:[%s300 + $0xf8] sm:$0xff]
      %v339 = vld [vmem:[%s300 + $0x100] sm:$0xff]
      %v340 = vld [vmem:[%s300 + $0x108] sm:$0xff]
      %v341 = vld [vmem:[%s300 + $0x110] sm:$0xff]
      %v342 = vld [vmem:[%s300 + $0x118] sm:$0xff]
      %v343 = vld [vmem:[%s300 + $0x120] sm:$0xff]
      %v344 = vld [vmem:[%s300 + $0x128] sm:$0xff]
      %v345 = vld [vmem:[%s300 + $0x130] sm:$0xff]
      %v346 = vld [vmem:[%s300 + $0x138] sm:$0xff]
      %v347 = vld [vmem:[%s300 + $0x140] sm:$0xf]
      %v348 = vpack.c.bf16 %v308, %v307
      %v349 = vpack.c.bf16 %v310, %v309
      %v350 = vpack.c.bf16 %v312, %v311
      %v351 = vpack.c.bf16 %v314, %v313
      %v352 = vpack.c.bf16 %v316, %v315
      %v353 = vpack.c.bf16 %v318, %v317
      %v354 = vpack.c.bf16 %v320, %v319
      %v355 = vpack.c.bf16 %v322, %v321
      %v356 = vpack.c.bf16 %v324, %v323
      %v357 = vpack.c.bf16 %v326, %v325
      %v358 = vpack.c.bf16 %v328, %v327
      %v359 = vpack.c.bf16 %v330, %v329
      %v360 = vpack.c.bf16 %v332, %v331
      %v361 = vpack.c.bf16 %v334, %v333
      %v362 = vpack.c.bf16 %v336, %v335
      %v363 = vpack.c.bf16 %v338, %v337
      %v364 = vpack.c.bf16 %v340, %v339
      %v365 = vpack.c.bf16 %v342, %v341
      %v366 = vpack.c.bf16 %v344, %v343
      %v367 = vpack.c.bf16 %v346, %v345
      %v368 = vpack.c.bf16 %v347, %v347
      %v369 = vld [vmem:[%s2] sm:$0xf]
      %v370 = vld [vmem:[%s2 + $0x4] sm:$0xf]
      %v371 = vld [vmem:[%s2 + $0x8] sm:$0xf]
      %v372 = vld [vmem:[%s2 + $0xc] sm:$0xf]
      %v373 = vld [vmem:[%s2 + $0x10] sm:$0xf]
      %v374 = vld [vmem:[%s2 + $0x14] sm:$0xf]
      %v375 = vld [vmem:[%s2 + $0x18] sm:$0xf]
      %v376 = vld [vmem:[%s2 + $0x1c] sm:$0xf]
      %v377 = vld [vmem:[%s2 + $0x20] sm:$0xf]
      %v378 = vld [vmem:[%s2 + $0x24] sm:$0xf]
      %v379 = vld [vmem:[%s2 + $0x28] sm:$0xf]
      %v380 = vld [vmem:[%s2 + $0x2c] sm:$0xf]
      %v381 = vld [vmem:[%s2 + $0x30] sm:$0xf]
      %v382 = vld [vmem:[%s2 + $0x34] sm:$0xf]
      %v383 = vld [vmem:[%s2 + $0x38] sm:$0xf]
      %v384 = vld [vmem:[%s2 + $0x3c] sm:$0xf]
      %v385 = vld [vmem:[%s3] sm:$0x1]
      %v387 = vlaneseq
      %v388 = vshrl.u32 %v387, 7
      %v389 = vsub.s32 0, %v388
      %v390 = vrot.slane %v385, %v389
      %v408 = vunpack.c.l.b16 %v369
      %v409 = vunpack.c.l.b16 %v370
      %v410 = vunpack.c.l.b16 %v371
      %v411 = vunpack.c.l.b16 %v372
      %v412 = vunpack.c.l.b16 %v373
      %v413 = vunpack.c.l.b16 %v374
      %v414 = vunpack.c.l.b16 %v375
      %v415 = vunpack.c.l.b16 %v376
      %v416 = vunpack.c.l.b16 %v377
      %v417 = vunpack.c.l.b16 %v378
      %v418 = vunpack.c.l.b16 %v379
      %v419 = vunpack.c.l.b16 %v380
      %v420 = vunpack.c.l.b16 %v381
      %v421 = vunpack.c.l.b16 %v382
      %v422 = vunpack.c.l.b16 %v383
      %v423 = vunpack.c.l.b16 %v384
      %v424 = vpack.c.b16 %v409, %v408
      %v425 = vpack.c.b16 %v411, %v410
      %v426 = vpack.c.b16 %v413, %v412
      %v427 = vpack.c.b16 %v415, %v414
      %v428 = vpack.c.b16 %v417, %v416
      %v429 = vpack.c.b16 %v419, %v418
      %v430 = vpack.c.b16 %v421, %v420
      %v431 = vpack.c.b16 %v423, %v422
      %440 = vmatprep.subr.bf16.mxu0 0
      %441 = vmatpush1.bf16.msra.mxu0 %v424
      %442 = vmatprep.subr.bf16.mxu0 0
      %443 = vmatpush1.bf16.msra.mxu0 %v425
      %444 = vmatprep.subr.bf16.mxu0 0
      %445 = vmatpush1.bf16.msra.mxu0 %v426
      %446 = vmatprep.subr.bf16.mxu0 0
      %447 = vmatpush1.bf16.msra.mxu0 %v427
      %448 = vmatprep.subr.bf16.mxu0 0
      %449 = vmatpush1.bf16.msra.mxu0 %v428
      %450 = vmatprep.subr.bf16.mxu0 0
      %451 = vmatpush1.bf16.msra.mxu0 %v429
      %452 = vmatprep.subr.bf16.mxu0 0
      %453 = vmatpush1.bf16.msra.mxu0 %v430
      %454 = vmatprep.subr.bf16.mxu0 0
      %455 = vmatpush1.bf16.msra.mxu0 %v431
      %456 = vmatprep.subr.bf16.mxu0 0
      %457 = vmatpush1.bf16.msra.mxu0 0
      %458 = vmatprep.subr.bf16.mxu0 0
      %459 = vmatpush1.bf16.msra.mxu0 0
      %460 = vmatprep.subr.bf16.mxu0 0
      %461 = vmatpush1.bf16.msra.mxu0 0
      %462 = vmatprep.subr.bf16.mxu0 0
      %463 = vmatpush1.bf16.msra.mxu0 0
      %464 = vmatprep.subr.bf16.mxu0 0
      %465 = vmatpush1.bf16.msra.mxu0 0
      %466 = vmatprep.subr.bf16.mxu0 0
      %467 = vmatpush1.bf16.msra.mxu0 0
      %468 = vmatprep.subr.bf16.mxu0 0
      %469 = vmatpush1.bf16.msra.mxu0 0
      %470 = vmatprep.subr.bf16.mxu0 0
      %471 = vmatpush1.bf16.msra.mxu0 0
      %472 = vmatprep.mubr.bf16.mxu0 0
      %473 = vmatmul.mubr.bf16.gmra.mrb[0].mxu0 %v348
      %v474 = vpop.f32.mrb[0].mxu0
      %v475 = vadd.f32 %v390, %v474
      %v476 = vpop.f32.mrb[0].mxu0
      %v477 = vpop.f32.mrb[0].mxu0
      %v478 = vadd.f32 %v390, %v477
      %v479 = vpop.f32.mrb[0].mxu0
      %480 = vmatprep.mubr.bf16.mxu0 0
      %481 = vmatmul.mubr.bf16.gmra.mrb[0].mxu0 %v349
      %v482 = vpop.f32.mrb[0].mxu0
      %v483 = vadd.f32 %v390, %v482
      %v484 = vpop.f32.mrb[0].mxu0
      %v485 = vpop.f32.mrb[0].mxu0
      %v486 = vadd.f32 %v390, %v485
      %v487 = vpop.f32.mrb[0].mxu0
      %488 = vmatprep.mubr.bf16.mxu0 0
      %489 = vmatmul.mubr.bf16.gmra.mrb[0].mxu0 %v350
      %v490 = vpop.f32.mrb[0].mxu0
      %v491 = vadd.f32 %v390, %v490
      %v492 = vpop.f32.mrb[0].mxu0
      %v493 = vpop.f32.mrb[0].mxu0
      %v494 = vadd.f32 %v390, %v493
      %v495 = vpop.f32.mrb[0].mxu0
      %496 = vmatprep.mubr.bf16.mxu0 0
      %497 = vmatmul.mubr.bf16.gmra.mrb[0].mxu0 %v351
      %v498 = vpop.f32.mrb[0].mxu0
      %v499 = vadd.f32 %v390, %v498
      %v500 = vpop.f32.mrb[0].mxu0
      %v501 = vpop.f32.mrb[0].mxu0
      %v502 = vadd.f32 %v390, %v501
      %v503 = vpop.f32.mrb[0].mxu0
      %504 = vmatprep.mubr.bf16.mxu0 0
      %505 = vmatmul.mubr.bf16.gmra.mrb[0].mxu0 %v352
      %v506 = vpop.f32.mrb[0].mxu0
      %v507 = vadd.f32 %v390, %v506
      %v508 = vpop.f32.mrb[0].mxu0
      %v509 = vpop.f32.mrb[0].mxu0
      %v510 = vadd.f32 %v390, %v509
      %v511 = vpop.f32.mrb[0].mxu0
      %512 = vmatprep.mubr.bf16.mxu0 0
      %513 = vmatmul.mubr.bf16.gmra.mrb[0].mxu0 %v353
      %v514 = vpop.f32.mrb[0].mxu0
      %v515 = vadd.f32 %v390, %v514
      %v516 = vpop.f32.mrb[0].mxu0
      %v517 = vpop.f32.mrb[0].mxu0
      %v518 = vadd.f32 %v390, %v517
      %v519 = vpop.f32.mrb[0].mxu0
      %520 = vmatprep.mubr.bf16.mxu0 0
      %521 = vmatmul.mubr.bf16.gmra.mrb[0].mxu0 %v354
      %v522 = vpop.f32.mrb[0].mxu0
      %v523 = vadd.f32 %v390, %v522
      %v524 = vpop.f32.mrb[0].mxu0
      %v525 = vpop.f32.mrb[0].mxu0
      %v526 = vadd.f32 %v390, %v525
      %v527 = vpop.f32.mrb[0].mxu0
      %528 = vmatprep.mubr.bf16.mxu0 0
      %529 = vmatmul.mubr.bf16.gmra.mrb[0].mxu0 %v355
      %v530 = vpop.f32.mrb[0].mxu0
      %v531 = vadd.f32 %v390, %v530
      %v532 = vpop.f32.mrb[0].mxu0
      %v533 = vpop.f32.mrb[0].mxu0
      %v534 = vadd.f32 %v390, %v533
      %v535 = vpop.f32.mrb[0].mxu0
      %536 = vmatprep.mubr.bf16.mxu0 0
      %537 = vmatmul.mubr.bf16.gmra.mrb[0].mxu0 %v356
      %v538 = vpop.f32.mrb[0].mxu0
      %v539 = vadd.f32 %v390, %v538
      %v540 = vpop.f32.mrb[0].mxu0
      %v541 = vpop.f32.mrb[0].mxu0
      %v542 = vadd.f32 %v390, %v541
      %v543 = vpop.f32.mrb[0].mxu0
      %544 = vmatprep.mubr.bf16.mxu0 0
      %545 = vmatmul.mubr.bf16.gmra.mrb[0].mxu0 %v357
      %v546 = vpop.f32.mrb[0].mxu0
      %v547 = vadd.f32 %v390, %v546
      %v548 = vpop.f32.mrb[0].mxu0
      %v549 = vpop.f32.mrb[0].mxu0
      %v550 = vadd.f32 %v390, %v549
      %v551 = vpop.f32.mrb[0].mxu0
      %552 = vmatprep.mubr.bf16.mxu0 0
      %553 = vmatmul.mubr.bf16.gmra.mrb[0].mxu0 %v358
      %v554 = vpop.f32.mrb[0].mxu0
      %v555 = vadd.f32 %v390, %v554
      %v556 = vpop.f32.mrb[0].mxu0
      %v557 = vpop.f32.mrb[0].mxu0
      %v558 = vadd.f32 %v390, %v557
      %v559 = vpop.f32.mrb[0].mxu0
      %560 = vmatprep.mubr.bf16.mxu0 0
      %561 = vmatmul.mubr.bf16.gmra.mrb[0].mxu0 %v359
      %v562 = vpop.f32.mrb[0].mxu0
      %v563 = vadd.f32 %v390, %v562
      %v564 = vpop.f32.mrb[0].mxu0
      %v565 = vpop.f32.mrb[0].mxu0
      %v566 = vadd.f32 %v390, %v565
      %v567 = vpop.f32.mrb[0].mxu0
      %568 = vmatprep.mubr.bf16.mxu0 0
      %569 = vmatmul.mubr.bf16.gmra.mrb[0].mxu0 %v360
      %v570 = vpop.f32.mrb[0].mxu0
      %v571 = vadd.f32 %v390, %v570
      %v572 = vpop.f32.mrb[0].mxu0
      %v573 = vpop.f32.mrb[0].mxu0
      %v574 = vadd.f32 %v390, %v573
      %v575 = vpop.f32.mrb[0].mxu0
      %576 = vmatprep.mubr.bf16.mxu0 0
      %577 = vmatmul.mubr.bf16.gmra.mrb[0].mxu0 %v361
      %v578 = vpop.f32.mrb[0].mxu0
      %v579 = vadd.f32 %v390, %v578
      %v580 = vpop.f32.mrb[0].mxu0
      %v581 = vpop.f32.mrb[0].mxu0
      %v582 = vadd.f32 %v390, %v581
      %v583 = vpop.f32.mrb[0].mxu0
      %584 = vmatprep.mubr.bf16.mxu0 0
      %585 = vmatmul.mubr.bf16.gmra.mrb[0].mxu0 %v362
      %v586 = vpop.f32.mrb[0].mxu0
      %v587 = vadd.f32 %v390, %v586
      %v588 = vpop.f32.mrb[0].mxu0
      %v589 = vpop.f32.mrb[0].mxu0
      %v590 = vadd.f32 %v390, %v589
      %v591 = vpop.f32.mrb[0].mxu0
      %592 = vmatprep.mubr.bf16.mxu0 0
      %593 = vmatmul.mubr.bf16.gmra.mrb[0].mxu0 %v363
      %v594 = vpop.f32.mrb[0].mxu0
      %v595 = vadd.f32 %v390, %v594
      %v596 = vpop.f32.mrb[0].mxu0
      %v597 = vpop.f32.mrb[0].mxu0
      %v598 = vadd.f32 %v390, %v597
      %v599 = vpop.f32.mrb[0].mxu0
      %600 = vmatprep.mubr.bf16.mxu0 0
      %601 = vmatmul.mubr.bf16.gmra.mrb[0].mxu0 %v364
      %v602 = vpop.f32.mrb[0].mxu0
      %v603 = vadd.f32 %v390, %v602
      %v604 = vpop.f32.mrb[0].mxu0
      %v605 = vpop.f32.mrb[0].mxu0
      %v606 = vadd.f32 %v390, %v605
      %v607 = vpop.f32.mrb[0].mxu0
      %608 = vmatprep.mubr.bf16.mxu0 0
      %609 = vmatmul.mubr.bf16.gmra.mrb[0].mxu0 %v365
      %v610 = vpop.f32.mrb[0].mxu0
      %v611 = vadd.f32 %v390, %v610
      %v612 = vpop.f32.mrb[0].mxu0
      %v613 = vpop.f32.mrb[0].mxu0
      %v614 = vadd.f32 %v390, %v613
      %v615 = vpop.f32.mrb[0].mxu0
      %616 = vmatprep.mubr.bf16.mxu0 0
      %617 = vmatmul.mubr.bf16.gmra.mrb[0].mxu0 %v366
      %v618 = vpop.f32.mrb[0].mxu0
      %v619 = vadd.f32 %v390, %v618
      %v620 = vpop.f32.mrb[0].mxu0
      %v621 = vpop.f32.mrb[0].mxu0
      %v622 = vadd.f32 %v390, %v621
      %v623 = vpop.f32.mrb[0].mxu0
      %624 = vmatprep.mubr.bf16.mxu0 0
      %625 = vmatmul.mubr.bf16.gmra.mrb[0].mxu0 %v367
      %v626 = vpop.f32.mrb[0].mxu0
      %v627 = vadd.f32 %v390, %v626
      %v628 = vpop.f32.mrb[0].mxu0
      %v629 = vpop.f32.mrb[0].mxu0
      %v630 = vadd.f32 %v390, %v629
      %v631 = vpop.f32.mrb[0].mxu0
      %632 = vmatprep.mubr.bf16.mxu0 0
      %633 = vmatmul.mubr.bf16.gmra.mrb[0].mxu0 %v368
      %v634 = vpop.f32.mrb[0].mxu0
      %v635 = vadd.f32 %v390, %v634
      %v636 = vpop.f32.mrb[0].mxu0
      %v637 = vpop.f32.mrb[0].mxu0
      %v638 = vpop.f32.mrb[0].mxu0
      %639 = vdwg.mxu0
      %v640 = vmax.f32 %v475, 0.0
      %v641 = vmax.f32 %v478, 0.0
      %v642 = vmax.f32 %v483, 0.0
      %v643 = vmax.f32 %v486, 0.0
      %v644 = vmax.f32 %v491, 0.0
      %v645 = vmax.f32 %v494, 0.0
      %v646 = vmax.f32 %v499, 0.0
      %v647 = vmax.f32 %v502, 0.0
      %v648 = vmax.f32 %v507, 0.0
      %v649 = vmax.f32 %v510, 0.0
      %v650 = vmax.f32 %v515, 0.0
      %v651 = vmax.f32 %v518, 0.0
      %v652 = vmax.f32 %v523, 0.0
      %v653 = vmax.f32 %v526, 0.0
      %v654 = vmax.f32 %v531, 0.0
      %v655 = vmax.f32 %v534, 0.0
      %v656 = vmax.f32 %v539, 0.0
      %v657 = vmax.f32 %v542, 0.0
      %v658 = vmax.f32 %v547, 0.0
      %v659 = vmax.f32 %v550, 0.0
      %v660 = vmax.f32 %v555, 0.0
      %v661 = vmax.f32 %v558, 0.0
      %v662 = vmax.f32 %v563, 0.0
      %v663 = vmax.f32 %v566, 0.0
      %v664 = vmax.f32 %v571, 0.0
      %v665 = vmax.f32 %v574, 0.0
      %v666 = vmax.f32 %v579, 0.0
      %v667 = vmax.f32 %v582, 0.0
      %v668 = vmax.f32 %v587, 0.0
      %v669 = vmax.f32 %v590, 0.0
      %v670 = vmax.f32 %v595, 0.0
      %v671 = vmax.f32 %v598, 0.0
      %v672 = vmax.f32 %v603, 0.0
      %v673 = vmax.f32 %v606, 0.0
      %v674 = vmax.f32 %v611, 0.0
      %v675 = vmax.f32 %v614, 0.0
      %v676 = vmax.f32 %v619, 0.0
      %v677 = vmax.f32 %v622, 0.0
      %v678 = vmax.f32 %v627, 0.0
      %v679 = vmax.f32 %v630, 0.0
      %v680 = vmax.f32 %v635, 0.0
      %v681 = vld [vmem:[%s1] sm:$0xff]
      %v682 = vld [vmem:[%s1 + $0x8] sm:$0xff]
      %v683 = vld [vmem:[%s1 + $0x10] sm:$0xff]
      %v684 = vld [vmem:[%s1 + $0x18] sm:$0xff]
      %v685 = vld [vmem:[%s1 + $0x20] sm:$0xff]
      %v686 = vld [vmem:[%s1 + $0x28] sm:$0xff]
      %v687 = vld [vmem:[%s1 + $0x30] sm:$0xff]
      %v688 = vld [vmem:[%s1 + $0x38] sm:$0xff]
      %v689 = vld [vmem:[%s1 + $0x40] sm:$0xff]
      %v690 = vld [vmem:[%s1 + $0x48] sm:$0xff]
      %v691 = vld [vmem:[%s1 + $0x50] sm:$0xff]
      %v692 = vld [vmem:[%s1 + $0x58] sm:$0xff]
      %v693 = vld [vmem:[%s1 + $0x60] sm:$0xff]
      %v694 = vld [vmem:[%s1 + $0x68] sm:$0xff]
      %v695 = vld [vmem:[%s1 + $0x70] sm:$0xff]
      %v696 = vld [vmem:[%s1 + $0x78] sm:$0xff]
      %v697 = vld [vmem:[%s1 + $0x80] sm:$0xff]
      %v698 = vld [vmem:[%s1 + $0x88] sm:$0xff]
      %v699 = vld [vmem:[%s1 + $0x90] sm:$0xff]
      %v700 = vld [vmem:[%s1 + $0x98] sm:$0xff]
      %v701 = vld [vmem:[%s1 + $0xa0] sm:$0xff]
      %v702 = vld [vmem:[%s1 + $0xa8] sm:$0xff]
      %v703 = vld [vmem:[%s1 + $0xb0] sm:$0xff]
      %v704 = vld [vmem:[%s1 + $0xb8] sm:$0xff]
      %v705 = vld [vmem:[%s1 + $0xc0] sm:$0xff]
      %v706 = vld [vmem:[%s1 + $0xc8] sm:$0xff]
      %v707 = vld [vmem:[%s1 + $0xd0] sm:$0xff]
      %v708 = vld [vmem:[%s1 + $0xd8] sm:$0xff]
      %v709 = vld [vmem:[%s1 + $0xe0] sm:$0xff]
      %v710 = vld [vmem:[%s1 + $0xe8] sm:$0xff]
      %v711 = vld [vmem:[%s1 + $0xf0] sm:$0xff]
      %v712 = vld [vmem:[%s1 + $0xf8] sm:$0xff]
      %v713 = vld [vmem:[%s1 + $0x100] sm:$0xff]
      %v714 = vld [vmem:[%s1 + $0x108] sm:$0xff]
      %v715 = vld [vmem:[%s1 + $0x110] sm:$0xff]
      %v716 = vld [vmem:[%s1 + $0x118] sm:$0xff]
      %v717 = vld [vmem:[%s1 + $0x120] sm:$0xff]
      %v718 = vld [vmem:[%s1 + $0x128] sm:$0xff]
      %v719 = vld [vmem:[%s1 + $0x130] sm:$0xff]
      %v720 = vld [vmem:[%s1 + $0x138] sm:$0xff]
      %v721 = vld [vmem:[%s1 + $0x140] sm:$0xf]
      %723 = vset.pattern.permute.xlu0 0
      %724 = vperm.xlu0 %723, %v681
      %v725 = vpop.permute.xlu0 %724
      %728 = vset.pattern.permute.xlu0 0
      %729 = vperm.xlu0 %728, %v682
      %v730 = vpop.permute.xlu0 %729
      %733 = vset.pattern.permute.xlu0 0
      %734 = vperm.xlu0 %733, %v683
      %v735 = vpop.permute.xlu0 %734
      %738 = vset.pattern.permute.xlu0 0
      %739 = vperm.xlu0 %738, %v684
      %v740 = vpop.permute.xlu0 %739
      %743 = vset.pattern.permute.xlu0 0
      %744 = vperm.xlu0 %743, %v685
      %v745 = vpop.permute.xlu0 %744
      %748 = vset.pattern.permute.xlu0 0
      %749 = vperm.xlu0 %748, %v686
      %v750 = vpop.permute.xlu0 %749
      %753 = vset.pattern.permute.xlu0 0
      %754 = vperm.xlu0 %753, %v687
      %v755 = vpop.permute.xlu0 %754
      %758 = vset.pattern.permute.xlu0 0
      %759 = vperm.xlu0 %758, %v688
      %v760 = vpop.permute.xlu0 %759
      %763 = vset.pattern.permute.xlu0 0
      %764 = vperm.xlu0 %763, %v689
      %v765 = vpop.permute.xlu0 %764
      %768 = vset.pattern.permute.xlu0 0
      %769 = vperm.xlu0 %768, %v690
      %v770 = vpop.permute.xlu0 %769
      %773 = vset.pattern.permute.xlu0 0
      %774 = vperm.xlu0 %773, %v691
      %v775 = vpop.permute.xlu0 %774
      %778 = vset.pattern.permute.xlu0 0
      %779 = vperm.xlu0 %778, %v692
      %v780 = vpop.permute.xlu0 %779
      %783 = vset.pattern.permute.xlu0 0
      %784 = vperm.xlu0 %783, %v693
      %v785 = vpop.permute.xlu0 %784
      %788 = vset.pattern.permute.xlu0 0
      %789 = vperm.xlu0 %788, %v694
      %v790 = vpop.permute.xlu0 %789
      %793 = vset.pattern.permute.xlu0 0
      %794 = vperm.xlu0 %793, %v695
      %v795 = vpop.permute.xlu0 %794
      %798 = vset.pattern.permute.xlu0 0
      %799 = vperm.xlu0 %798, %v696
      %v800 = vpop.permute.xlu0 %799
      %803 = vset.pattern.permute.xlu0 0
      %804 = vperm.xlu0 %803, %v697
      %v805 = vpop.permute.xlu0 %804
      %808 = vset.pattern.permute.xlu0 0
      %809 = vperm.xlu0 %808, %v698
      %v810 = vpop.permute.xlu0 %809
      %813 = vset.pattern.permute.xlu0 0
      %814 = vperm.xlu0 %813, %v699
      %v815 = vpop.permute.xlu0 %814
      %818 = vset.pattern.permute.xlu0 0
      %819 = vperm.xlu0 %818, %v700
      %v820 = vpop.permute.xlu0 %819
      %823 = vset.pattern.permute.xlu0 0
      %824 = vperm.xlu0 %823, %v701
      %v825 = vpop.permute.xlu0 %824
      %828 = vset.pattern.permute.xlu0 0
      %829 = vperm.xlu0 %828, %v702
      %v830 = vpop.permute.xlu0 %829
      %833 = vset.pattern.permute.xlu0 0
      %834 = vperm.xlu0 %833, %v703
      %v835 = vpop.permute.xlu0 %834
      %838 = vset.pattern.permute.xlu0 0
      %839 = vperm.xlu0 %838, %v704
      %v840 = vpop.permute.xlu0 %839
      %843 = vset.pattern.permute.xlu0 0
      %844 = vperm.xlu0 %843, %v705
      %v845 = vpop.permute.xlu0 %844
      %848 = vset.pattern.permute.xlu0 0
      %849 = vperm.xlu0 %848, %v706
      %v850 = vpop.permute.xlu0 %849
      %853 = vset.pattern.permute.xlu0 0
      %854 = vperm.xlu0 %853, %v707
      %v855 = vpop.permute.xlu0 %854
      %858 = vset.pattern.permute.xlu0 0
      %859 = vperm.xlu0 %858, %v708
      %v860 = vpop.permute.xlu0 %859
      %863 = vset.pattern.permute.xlu0 0
      %864 = vperm.xlu0 %863, %v709
      %v865 = vpop.permute.xlu0 %864
      %868 = vset.pattern.permute.xlu0 0
      %869 = vperm.xlu0 %868, %v710
      %v870 = vpop.permute.xlu0 %869
      %873 = vset.pattern.permute.xlu0 0
      %874 = vperm.xlu0 %873, %v711
      %v875 = vpop.permute.xlu0 %874
      %878 = vset.pattern.permute.xlu0 0
      %879 = vperm.xlu0 %878, %v712
      %v880 = vpop.permute.xlu0 %879
      %883 = vset.pattern.permute.xlu0 0
      %884 = vperm.xlu0 %883, %v713
      %v885 = vpop.permute.xlu0 %884
      %888 = vset.pattern.permute.xlu0 0
      %889 = vperm.xlu0 %888, %v714
      %v890 = vpop.permute.xlu0 %889
      %893 = vset.pattern.permute.xlu0 0
      %894 = vperm.xlu0 %893, %v715
      %v895 = vpop.permute.xlu0 %894
      %898 = vset.pattern.permute.xlu0 0
      %899 = vperm.xlu0 %898, %v716
      %v900 = vpop.permute.xlu0 %899
      %903 = vset.pattern.permute.xlu0 0
      %904 = vperm.xlu0 %903, %v717
      %v905 = vpop.permute.xlu0 %904
      %908 = vset.pattern.permute.xlu0 0
      %909 = vperm.xlu0 %908, %v718
      %v910 = vpop.permute.xlu0 %909
      %913 = vset.pattern.permute.xlu0 0
      %914 = vperm.xlu0 %913, %v719
      %v915 = vpop.permute.xlu0 %914
      %918 = vset.pattern.permute.xlu0 0
      %919 = vperm.xlu0 %918, %v720
      %v920 = vpop.permute.xlu0 %919
      %923 = vset.pattern.permute.xlu0 0
      %924 = vperm.xlu0 %923, %v721
      %v925 = vpop.permute.xlu0 %924
      %v927 = vmul.f32 %v640, %v725
      %v928 = vmul.f32 %v641, %v730
      %v929 = vmul.f32 %v642, %v735
      %v930 = vmul.f32 %v643, %v740
      %v931 = vmul.f32 %v644, %v745
      %v932 = vmul.f32 %v645, %v750
      %v933 = vmul.f32 %v646, %v755
      %v934 = vmul.f32 %v647, %v760
      %v935 = vmul.f32 %v648, %v765
      %v936 = vmul.f32 %v649, %v770
      %v937 = vmul.f32 %v650, %v775
      %v938 = vmul.f32 %v651, %v780
      %v939 = vmul.f32 %v652, %v785
      %v940 = vmul.f32 %v653, %v790
      %v941 = vmul.f32 %v654, %v795
      %v942 = vmul.f32 %v655, %v800
      %v943 = vmul.f32 %v656, %v805
      %v944 = vmul.f32 %v657, %v810
      %v945 = vmul.f32 %v658, %v815
      %v946 = vmul.f32 %v659, %v820
      %v947 = vmul.f32 %v660, %v825
      %v948 = vmul.f32 %v661, %v830
      %v949 = vmul.f32 %v662, %v835
      %v950 = vmul.f32 %v663, %v840
      %v951 = vmul.f32 %v664, %v845
      %v952 = vmul.f32 %v665, %v850
      %v953 = vmul.f32 %v666, %v855
      %v954 = vmul.f32 %v667, %v860
      %v955 = vmul.f32 %v668, %v865
      %v956 = vmul.f32 %v669, %v870
      %v957 = vmul.f32 %v670, %v875
      %v958 = vmul.f32 %v671, %v880
      %v959 = vmul.f32 %v672, %v885
      %v960 = vmul.f32 %v673, %v890
      %v961 = vmul.f32 %v674, %v895
      %v962 = vmul.f32 %v675, %v900
      %v963 = vmul.f32 %v676, %v905
      %v964 = vmul.f32 %v677, %v910
      %v965 = vmul.f32 %v678, %v915
      %v966 = vmul.f32 %v679, %v920
      %v967 = vmul.f32 %v680, %v925
      %968 = vst [vmem:[#allocation2] sm:$0xff] 0.0
      %969 = vst [vmem:[#allocation2 + $0x8] sm:$0xff] 0.0
      %970 = vst [vmem:[#allocation2 + $0x10] sm:$0xff] 0.0
      %971 = vst [vmem:[#allocation2 + $0x18] sm:$0xff] 0.0
      %972 = vst [vmem:[#allocation2 + $0x20] sm:$0xff] 0.0
      %973 = vst [vmem:[#allocation2 + $0x28] sm:$0xff] 0.0
      %974 = vst [vmem:[#allocation2 + $0x30] sm:$0xff] 0.0
      %975 = vst [vmem:[#allocation2 + $0x38] sm:$0xff] 0.0
      %976 = vst [vmem:[#allocation2 + $0x40] sm:$0xff] 0.0
      %977 = vst [vmem:[#allocation2 + $0x48] sm:$0xff] 0.0
      %978 = vst [vmem:[#allocation2 + $0x50] sm:$0xff] 0.0
      %979 = vst [vmem:[#allocation2 + $0x58] sm:$0xff] 0.0
      %980 = vst [vmem:[#allocation2 + $0x60] sm:$0xff] 0.0
      %981 = vst [vmem:[#allocation2 + $0x68] sm:$0xff] 0.0
      %982 = vst [vmem:[#allocation2 + $0x70] sm:$0xff] 0.0
      %983 = vst [vmem:[#allocation2 + $0x78] sm:$0xff] 0.0
      %984 = vst [vmem:[#allocation2 + $0x80] sm:$0xff] 0.0
      %985 = vst [vmem:[#allocation2 + $0x88] sm:$0xff] 0.0
      %986 = vst [vmem:[#allocation2 + $0x90] sm:$0xff] 0.0
      %987 = vst [vmem:[#allocation2 + $0x98] sm:$0xff] 0.0
      %988 = vst [vmem:[#allocation2 + $0xa0] sm:$0xff] 0.0
      %989 = vst [vmem:[#allocation2 + $0xa8] sm:$0xff] 0.0
      %990 = vst [vmem:[#allocation2 + $0xb0] sm:$0xff] 0.0
      %991 = vst [vmem:[#allocation2 + $0xb8] sm:$0xff] 0.0
      %992 = vst [vmem:[#allocation2 + $0xc0] sm:$0xff] 0.0
      %993 = vst [vmem:[#allocation2 + $0xc8] sm:$0xff] 0.0
      %994 = vst [vmem:[#allocation2 + $0xd0] sm:$0xff] 0.0
      %995 = vst [vmem:[#allocation2 + $0xd8] sm:$0xff] 0.0
      %996 = vst [vmem:[#allocation2 + $0xe0] sm:$0xff] 0.0
      %997 = vst [vmem:[#allocation2 + $0xe8] sm:$0xff] 0.0
      %998 = vst [vmem:[#allocation2 + $0xf0] sm:$0xff] 0.0
      %999 = vst [vmem:[#allocation2 + $0xf8] sm:$0xff] 0.0
      %1000 = vst [vmem:[#allocation2 + $0x100] sm:$0xff] 0.0
      %1001 = vst [vmem:[#allocation2 + $0x108] sm:$0xff] 0.0
      %1002 = vst [vmem:[#allocation2 + $0x110] sm:$0xff] 0.0
      %1003 = vst [vmem:[#allocation2 + $0x118] sm:$0xff] 0.0
      %1004 = vst [vmem:[#allocation2 + $0x120] sm:$0xff] 0.0
      %1005 = vst [vmem:[#allocation2 + $0x128] sm:$0xff] 0.0
      %1006 = vst [vmem:[#allocation2 + $0x130] sm:$0xff] 0.0
      %1007 = vst [vmem:[#allocation2 + $0x138] sm:$0xff] 0.0
      %1008 = vst [vmem:[#allocation2 + $0x140] sm:$0xff] 0.0
      %1009 = vst [vmem:[#allocation2 + $0x148] sm:$0xff] 0.0
      %1010 = vst [vmem:[#allocation2 + $0x150] sm:$0xff] 0.0
      %1011 = vst [vmem:[#allocation2 + $0x158] sm:$0xff] 0.0
      %1012 = vst [vmem:[#allocation2 + $0x160] sm:$0xff] 0.0
      %1013 = vst [vmem:[#allocation2 + $0x168] sm:$0xff] 0.0
      %1014 = vst [vmem:[#allocation2 + $0x170] sm:$0xf] 0.0
      %1015 = vst [vmem:[#allocation2 + $0x18] sm:$0xff] %v927
      %1016 = vst [vmem:[#allocation2 + $0x20] sm:$0xff] %v928
      %1017 = vst [vmem:[#allocation2 + $0x28] sm:$0xff] %v929
      %1018 = vst [vmem:[#allocation2 + $0x30] sm:$0xff] %v930
      %1019 = vst [vmem:[#allocation2 + $0x38] sm:$0xff] %v931
      %1020 = vst [vmem:[#allocation2 + $0x40] sm:$0xff] %v932
      %1021 = vst [vmem:[#allocation2 + $0x48] sm:$0xff] %v933
      %1022 = vst [vmem:[#allocation2 + $0x50] sm:$0xff] %v934
      %1023 = vst [vmem:[#allocation2 + $0x58] sm:$0xff] %v935
      %1024 = vst [vmem:[#allocation2 + $0x60] sm:$0xff] %v936
      %1025 = vst [vmem:[#allocation2 + $0x68] sm:$0xff] %v937
      %1026 = vst [vmem:[#allocation2 + $0x70] sm:$0xff] %v938
      %1027 = vst [vmem:[#allocation2 + $0x78] sm:$0xff] %v939
      %1028 = vst [vmem:[#allocation2 + $0x80] sm:$0xff] %v940
      %1029 = vst [vmem:[#allocation2 + $0x88] sm:$0xff] %v941
      %1030 = vst [vmem:[#allocation2 + $0x90] sm:$0xff] %v942
      %1031 = vst [vmem:[#allocation2 + $0x98] sm:$0xff] %v943
      %1032 = vst [vmem:[#allocation2 + $0xa0] sm:$0xff] %v944
      %1033 = vst [vmem:[#allocation2 + $0xa8] sm:$0xff] %v945
      %1034 = vst [vmem:[#allocation2 + $0xb0] sm:$0xff] %v946
      %1035 = vst [vmem:[#allocation2 + $0xb8] sm:$0xff] %v947
      %1036 = vst [vmem:[#allocation2 + $0xc0] sm:$0xff] %v948
      %1037 = vst [vmem:[#allocation2 + $0xc8] sm:$0xff] %v949
      %1038 = vst [vmem:[#allocation2 + $0xd0] sm:$0xff] %v950
      %1039 = vst [vmem:[#allocation2 + $0xd8] sm:$0xff] %v951
      %1040 = vst [vmem:[#allocation2 + $0xe0] sm:$0xff] %v952
      %1041 = vst [vmem:[#allocation2 + $0xe8] sm:$0xff] %v953
      %1042 = vst [vmem:[#allocation2 + $0xf0] sm:$0xff] %v954
      %1043 = vst [vmem:[#allocation2 + $0xf8] sm:$0xff] %v955
      %1044 = vst [vmem:[#allocation2 + $0x100] sm:$0xff] %v956
      %1045 = vst [vmem:[#allocation2 + $0x108] sm:$0xff] %v957
      %1046 = vst [vmem:[#allocation2 + $0x110] sm:$0xff] %v958
      %1047 = vst [vmem:[#allocation2 + $0x118] sm:$0xff] %v959
      %1048 = vst [vmem:[#allocation2 + $0x120] sm:$0xff] %v960
      %1049 = vst [vmem:[#allocation2 + $0x128] sm:$0xff] %v961
      %1050 = vst [vmem:[#allocation2 + $0x130] sm:$0xff] %v962
      %1051 = vst [vmem:[#allocation2 + $0x138] sm:$0xff] %v963
      %1052 = vst [vmem:[#allocation2 + $0x140] sm:$0xff] %v964
      %1053 = vst [vmem:[#allocation2 + $0x148] sm:$0xff] %v965
      %1054 = vst [vmem:[#allocation2 + $0x150] sm:$0xff] %v966
      %1055 = vst [vmem:[#allocation2 + $0x158] sm:$0xf] %v967
      %v1056 = vld [vmem:[#allocation2 + $0x5] sm:$0xff]
      %v1057 = vld [vmem:[#allocation2 + $0xd] sm:$0xff]
      %v1058 = vld [vmem:[#allocation2 + $0x15] sm:$0xff]
      %v1059 = vld [vmem:[#allocation2 + $0x1d] sm:$0xff]
      %v1060 = vld [vmem:[#allocation2 + $0x25] sm:$0xff]
      %v1061 = vld [vmem:[#allocation2 + $0x2d] sm:$0xff]
      %v1062 = vld [vmem:[#allocation2 + $0x35] sm:$0xff]
      %v1063 = vld [vmem:[#allocation2 + $0x3d] sm:$0xff]
      %v1064 = vld [vmem:[#allocation2 + $0x45] sm:$0xff]
      %v1065 = vld [vmem:[#allocation2 + $0x4d] sm:$0xff]
      %v1066 = vld [vmem:[#allocation2 + $0x55] sm:$0xff]
      %v1067 = vld [vmem:[#allocation2 + $0x5d] sm:$0xff]
      %v1068 = vld [vmem:[#allocation2 + $0x65] sm:$0xff]
      %v1069 = vld [vmem:[#allocation2 + $0x6d] sm:$0xff]
      %v1070 = vld [vmem:[#allocation2 + $0x75] sm:$0xff]
      %v1071 = vld [vmem:[#allocation2 + $0x7d] sm:$0xff]
      %v1072 = vld [vmem:[#allocation2 + $0x85] sm:$0xff]
      %v1073 = vld [vmem:[#allocation2 + $0x8d] sm:$0xff]
      %v1074 = vld [vmem:[#allocation2 + $0x95] sm:$0xff]
      %v1075 = vld [vmem:[#allocation2 + $0x9d] sm:$0xff]
      %v1076 = vld [vmem:[#allocation2 + $0xa5] sm:$0xff]
      %v1077 = vld [vmem:[#allocation2 + $0xad] sm:$0xff]
      %v1078 = vld [vmem:[#allocation2 + $0xb5] sm:$0xff]
      %v1079 = vld [vmem:[#allocation2 + $0xbd] sm:$0xff]
      %v1080 = vld [vmem:[#allocation2 + $0xc5] sm:$0xff]
      %v1081 = vld [vmem:[#allocation2 + $0xcd] sm:$0xff]
      %v1082 = vld [vmem:[#allocation2 + $0xd5] sm:$0xff]
      %v1083 = vld [vmem:[#allocation2 + $0xdd] sm:$0xff]
      %v1084 = vld [vmem:[#allocation2 + $0xe5] sm:$0xff]
      %v1085 = vld [vmem:[#allocation2 + $0xed] sm:$0xff]
      %v1086 = vld [vmem:[#allocation2 + $0xf5] sm:$0xff]
      %v1087 = vld [vmem:[#allocation2 + $0xfd] sm:$0xff]
      %v1088 = vld [vmem:[#allocation2 + $0x105] sm:$0xff]
      %v1089 = vld [vmem:[#allocation2 + $0x10d] sm:$0xff]
      %v1090 = vld [vmem:[#allocation2 + $0x115] sm:$0xff]
      %v1091 = vld [vmem:[#allocation2 + $0x11d] sm:$0xff]
      %v1092 = vld [vmem:[#allocation2 + $0x125] sm:$0xff]
      %v1093 = vld [vmem:[#allocation2 + $0x12d] sm:$0xff]
      %v1094 = vld [vmem:[#allocation2 + $0x135] sm:$0xff]
      %v1095 = vld [vmem:[#allocation2 + $0x13d] sm:$0xff]
      %v1096 = vld [vmem:[#allocation2 + $0x145] sm:$0xf]
      %v1097 = vpack.c.bf16 %v1057, %v1056
      %v1098 = vpack.c.bf16 %v1059, %v1058
      %v1099 = vpack.c.bf16 %v1061, %v1060
      %v1100 = vpack.c.bf16 %v1063, %v1062
      %v1101 = vpack.c.bf16 %v1065, %v1064
      %v1102 = vpack.c.bf16 %v1067, %v1066
      %v1103 = vpack.c.bf16 %v1069, %v1068
      %v1104 = vpack.c.bf16 %v1071, %v1070
      %v1105 = vpack.c.bf16 %v1073, %v1072
      %v1106 = vpack.c.bf16 %v1075, %v1074
      %v1107 = vpack.c.bf16 %v1077, %v1076
      %v1108 = vpack.c.bf16 %v1079, %v1078
      %v1109 = vpack.c.bf16 %v1081, %v1080
      %v1110 = vpack.c.bf16 %v1083, %v1082
      %v1111 = vpack.c.bf16 %v1085, %v1084
      %v1112 = vpack.c.bf16 %v1087, %v1086
      %v1113 = vpack.c.bf16 %v1089, %v1088
      %v1114 = vpack.c.bf16 %v1091, %v1090
      %v1115 = vpack.c.bf16 %v1093, %v1092
      %v1116 = vpack.c.bf16 %v1095, %v1094
      %v1117 = vpack.c.bf16 %v1096, %v1096
      %v1118 = vld [vmem:[%s4] sm:$0xf]
      %v1119 = vld [vmem:[%s4 + $0x4] sm:$0xf]
      %v1120 = vld [vmem:[%s4 + $0x8] sm:$0xf]
      %v1121 = vld [vmem:[%s4 + $0xc] sm:$0xf]
      %v1122 = vld [vmem:[%s4 + $0x10] sm:$0xf]
      %v1123 = vld [vmem:[%s4 + $0x14] sm:$0xf]
      %v1124 = vld [vmem:[%s4 + $0x18] sm:$0xf]
      %v1125 = vld [vmem:[%s4 + $0x1c] sm:$0xf]
      %v1126 = vld [vmem:[%s4 + $0x20] sm:$0xf]
      %v1127 = vld [vmem:[%s4 + $0x24] sm:$0xf]
      %v1128 = vld [vmem:[%s4 + $0x28] sm:$0xf]
      %v1129 = vld [vmem:[%s4 + $0x2c] sm:$0xf]
      %v1130 = vld [vmem:[%s4 + $0x30] sm:$0xf]
      %v1131 = vld [vmem:[%s4 + $0x34] sm:$0xf]
      %v1132 = vld [vmem:[%s4 + $0x38] sm:$0xf]
      %v1133 = vld [vmem:[%s4 + $0x3c] sm:$0xf]
      %v1134 = vld [vmem:[#allocation2 + $0x6] sm:$0xff]
      %v1135 = vld [vmem:[#allocation2 + $0xe] sm:$0xff]
      %v1136 = vld [vmem:[#allocation2 + $0x16] sm:$0xff]
      %v1137 = vld [vmem:[#allocation2 + $0x1e] sm:$0xff]
      %v1138 = vld [vmem:[#allocation2 + $0x26] sm:$0xff]
      %v1139 = vld [vmem:[#allocation2 + $0x2e] sm:$0xff]
      %v1140 = vld [vmem:[#allocation2 + $0x36] sm:$0xff]
      %v1141 = vld [vmem:[#allocation2 + $0x3e] sm:$0xff]
      %v1142 = vld [vmem:[#allocation2 + $0x46] sm:$0xff]
      %v1143 = vld [vmem:[#allocation2 + $0x4e] sm:$0xff]
      %v1144 = vld [vmem:[#allocation2 + $0x56] sm:$0xff]
      %v1145 = vld [vmem:[#allocation2 + $0x5e] sm:$0xff]
      %v1146 = vld [vmem:[#allocation2 + $0x66] sm:$0xff]
      %v1147 = vld [vmem:[#allocation2 + $0x6e] sm:$0xff]
      %v1148 = vld [vmem:[#allocation2 + $0x76] sm:$0xff]
      %v1149 = vld [vmem:[#allocation2 + $0x7e] sm:$0xff]
      %v1150 = vld [vmem:[#allocation2 + $0x86] sm:$0xff]
      %v1151 = vld [vmem:[#allocation2 + $0x8e] sm:$0xff]
      %v1152 = vld [vmem:[#allocation2 + $0x96] sm:$0xff]
      %v1153 = vld [vmem:[#allocation2 + $0x9e] sm:$0xff]
      %v1154 = vld [vmem:[#allocation2 + $0xa6] sm:$0xff]
      %v1155 = vld [vmem:[#allocation2 + $0xae] sm:$0xff]
      %v1156 = vld [vmem:[#allocation2 + $0xb6] sm:$0xff]
      %v1157 = vld [vmem:[#allocation2 + $0xbe] sm:$0xff]
      %v1158 = vld [vmem:[#allocation2 + $0xc6] sm:$0xff]
      %v1159 = vld [vmem:[#allocation2 + $0xce] sm:$0xff]
      %v1160 = vld [vmem:[#allocation2 + $0xd6] sm:$0xff]
      %v1161 = vld [vmem:[#allocation2 + $0xde] sm:$0xff]
      %v1162 = vld [vmem:[#allocation2 + $0xe6] sm:$0xff]
      %v1163 = vld [vmem:[#allocation2 + $0xee] sm:$0xff]
      %v1164 = vld [vmem:[#allocation2 + $0xf6] sm:$0xff]
      %v1165 = vld [vmem:[#allocation2 + $0xfe] sm:$0xff]
      %v1166 = vld [vmem:[#allocation2 + $0x106] sm:$0xff]
      %v1167 = vld [vmem:[#allocation2 + $0x10e] sm:$0xff]
      %v1168 = vld [vmem:[#allocation2 + $0x116] sm:$0xff]
      %v1169 = vld [vmem:[#allocation2 + $0x11e] sm:$0xff]
      %v1170 = vld [vmem:[#allocation2 + $0x126] sm:$0xff]
      %v1171 = vld [vmem:[#allocation2 + $0x12e] sm:$0xff]
      %v1172 = vld [vmem:[#allocation2 + $0x136] sm:$0xff]
      %v1173 = vld [vmem:[#allocation2 + $0x13e] sm:$0xff]
      %v1174 = vld [vmem:[#allocation2 + $0x146] sm:$0xf]
      %v1175 = vpack.c.bf16 %v1135, %v1134
      %v1176 = vpack.c.bf16 %v1137, %v1136
      %v1177 = vpack.c.bf16 %v1139, %v1138
      %v1178 = vpack.c.bf16 %v1141, %v1140
      %v1179 = vpack.c.bf16 %v1143, %v1142
      %v1180 = vpack.c.bf16 %v1145, %v1144
      %v1181 = vpack.c.bf16 %v1147, %v1146
      %v1182 = vpack.c.bf16 %v1149, %v1148
      %v1183 = vpack.c.bf16 %v1151, %v1150
      %v1184 = vpack.c.bf16 %v1153, %v1152
      %v1185 = vpack.c.bf16 %v1155, %v1154
      %v1186 = vpack.c.bf16 %v1157, %v1156
      %v1187 = vpack.c.bf16 %v1159, %v1158
      %v1188 = vpack.c.bf16 %v1161, %v1160
      %v1189 = vpack.c.bf16 %v1163, %v1162
      %v1190 = vpack.c.bf16 %v1165, %v1164
      %v1191 = vpack.c.bf16 %v1167, %v1166
      %v1192 = vpack.c.bf16 %v1169, %v1168
      %v1193 = vpack.c.bf16 %v1171, %v1170
      %v1194 = vpack.c.bf16 %v1173, %v1172
      %v1195 = vpack.c.bf16 %v1174, %v1174
      %s1196 = scalar_lea.vmem %s4, 64
      %v1197 = vld [vmem:[%s1196] sm:$0xf]
      %v1198 = vld [vmem:[%s1196 + $0x4] sm:$0xf]
      %v1199 = vld [vmem:[%s1196 + $0x8] sm:$0xf]
      %v1200 = vld [vmem:[%s1196 + $0xc] sm:$0xf]
      %v1201 = vld [vmem:[%s1196 + $0x10] sm:$0xf]
      %v1202 = vld [vmem:[%s1196 + $0x14] sm:$0xf]
      %v1203 = vld [vmem:[%s1196 + $0x18] sm:$0xf]
      %v1204 = vld [vmem:[%s1196 + $0x1c] sm:$0xf]
      %v1205 = vld [vmem:[%s1196 + $0x20] sm:$0xf]
      %v1206 = vld [vmem:[%s1196 + $0x24] sm:$0xf]
      %v1207 = vld [vmem:[%s1196 + $0x28] sm:$0xf]
      %v1208 = vld [vmem:[%s1196 + $0x2c] sm:$0xf]
      %v1209 = vld [vmem:[%s1196 + $0x30] sm:$0xf]
      %v1210 = vld [vmem:[%s1196 + $0x34] sm:$0xf]
      %v1211 = vld [vmem:[%s1196 + $0x38] sm:$0xf]
      %v1212 = vld [vmem:[%s1196 + $0x3c] sm:$0xf]
      %v1229 = vunpack.c.l.b16 %v1197
      %v1230 = vunpack.c.l.b16 %v1198
      %v1231 = vunpack.c.l.b16 %v1199
      %v1232 = vunpack.c.l.b16 %v1200
      %v1233 = vunpack.c.l.b16 %v1201
      %v1234 = vunpack.c.l.b16 %v1202
      %v1235 = vunpack.c.l.b16 %v1203
      %v1236 = vunpack.c.l.b16 %v1204
      %v1237 = vunpack.c.l.b16 %v1205
      %v1238 = vunpack.c.l.b16 %v1206
      %v1239 = vunpack.c.l.b16 %v1207
      %v1240 = vunpack.c.l.b16 %v1208
      %v1241 = vunpack.c.l.b16 %v1209
      %v1242 = vunpack.c.l.b16 %v1210
      %v1243 = vunpack.c.l.b16 %v1211
      %v1244 = vunpack.c.l.b16 %v1212
      %v1245 = vpack.c.b16 %v1230, %v1229
      %v1246 = vpack.c.b16 %v1232, %v1231
      %v1247 = vpack.c.b16 %v1234, %v1233
      %v1248 = vpack.c.b16 %v1236, %v1235
      %v1249 = vpack.c.b16 %v1238, %v1237
      %v1250 = vpack.c.b16 %v1240, %v1239
      %v1251 = vpack.c.b16 %v1242, %v1241
      %v1252 = vpack.c.b16 %v1244, %v1243
      %1261 = vmatprep.subr.bf16.mxu0 0
      %1262 = vmatpush1.bf16.msra.mxu0 %v1245
      %1263 = vmatprep.subr.bf16.mxu0 0
      %1264 = vmatpush1.bf16.msra.mxu0 %v1246
      %1265 = vmatprep.subr.bf16.mxu0 0
      %1266 = vmatpush1.bf16.msra.mxu0 %v1247
      %1267 = vmatprep.subr.bf16.mxu0 0
      %1268 = vmatpush1.bf16.msra.mxu0 %v1248
      %1269 = vmatprep.subr.bf16.mxu0 0
      %1270 = vmatpush1.bf16.msra.mxu0 %v1249
      %1271 = vmatprep.subr.bf16.mxu0 0
      %1272 = vmatpush1.bf16.msra.mxu0 %v1250
      %1273 = vmatprep.subr.bf16.mxu0 0
      %1274 = vmatpush1.bf16.msra.mxu0 %v1251
      %1275 = vmatprep.subr.bf16.mxu0 0
      %1276 = vmatpush1.bf16.msra.mxu0 %v1252
      %1277 = vmatprep.subr.bf16.mxu0 0
      %1278 = vmatpush1.bf16.msra.mxu0 0
      %1279 = vmatprep.subr.bf16.mxu0 0
      %1280 = vmatpush1.bf16.msra.mxu0 0
      %1281 = vmatprep.subr.bf16.mxu0 0
      %1282 = vmatpush1.bf16.msra.mxu0 0
      %1283 = vmatprep.subr.bf16.mxu0 0
      %1284 = vmatpush1.bf16.msra.mxu0 0
      %1285 = vmatprep.subr.bf16.mxu0 0
      %1286 = vmatpush1.bf16.msra.mxu0 0
      %1287 = vmatprep.subr.bf16.mxu0 0
      %1288 = vmatpush1.bf16.msra.mxu0 0
      %1289 = vmatprep.subr.bf16.mxu0 0
      %1290 = vmatpush1.bf16.msra.mxu0 0
      %1291 = vmatprep.subr.bf16.mxu0 0
      %1292 = vmatpush1.bf16.msra.mxu0 0
      %1293 = vmatprep.mubr.bf16.mxu0 0
      %1294 = vmatmul.mubr.bf16.gmra.mrb[0].mxu0 %v1175
      %v1295 = vpop.f32.mrb[0].mxu0
      %v1296 = vadd.f32 0.0, %v1295
      %v1297 = vpop.f32.mrb[0].mxu0
      %v1298 = vpop.f32.mrb[0].mxu0
      %v1299 = vadd.f32 0.0, %v1298
      %v1300 = vpop.f32.mrb[0].mxu0
      %1301 = vmatprep.mubr.bf16.mxu0 0
      %1302 = vmatmul.mubr.bf16.gmra.mrb[0].mxu0 %v1176
      %v1303 = vpop.f32.mrb[0].mxu0
      %v1304 = vadd.f32 0.0, %v1303
      %v1305 = vpop.f32.mrb[0].mxu0
      %v1306 = vpop.f32.mrb[0].mxu0
      %v1307 = vadd.f32 0.0, %v1306
      %v1308 = vpop.f32.mrb[0].mxu0
      %1309 = vmatprep.mubr.bf16.mxu0 0
      %1310 = vmatmul.mubr.bf16.gmra.mrb[0].mxu0 %v1177
      %v1311 = vpop.f32.mrb[0].mxu0
      %v1312 = vadd.f32 0.0, %v1311
      %v1313 = vpop.f32.mrb[0].mxu0
      %v1314 = vpop.f32.mrb[0].mxu0
      %v1315 = vadd.f32 0.0, %v1314
      %v1316 = vpop.f32.mrb[0].mxu0
      %1317 = vmatprep.mubr.bf16.mxu0 0
      %1318 = vmatmul.mubr.bf16.gmra.mrb[0].mxu0 %v1178
      %v1319 = vpop.f32.mrb[0].mxu0
      %v1320 = vadd.f32 0.0, %v1319
      %v1321 = vpop.f32.mrb[0].mxu0
      %v1322 = vpop.f32.mrb[0].mxu0
      %v1323 = vadd.f32 0.0, %v1322
      %v1324 = vpop.f32.mrb[0].mxu0
      %1325 = vmatprep.mubr.bf16.mxu0 0
      %1326 = vmatmul.mubr.bf16.gmra.mrb[0].mxu0 %v1179
      %v1327 = vpop.f32.mrb[0].mxu0
      %v1328 = vadd.f32 0.0, %v1327
      %v1329 = vpop.f32.mrb[0].mxu0
      %v1330 = vpop.f32.mrb[0].mxu0
      %v1331 = vadd.f32 0.0, %v1330
      %v1332 = vpop.f32.mrb[0].mxu0
      %1333 = vmatprep.mubr.bf16.mxu0 0
      %1334 = vmatmul.mubr.bf16.gmra.mrb[0].mxu0 %v1180
      %v1335 = vpop.f32.mrb[0].mxu0
      %v1336 = vadd.f32 0.0, %v1335
      %v1337 = vpop.f32.mrb[0].mxu0
      %v1338 = vpop.f32.mrb[0].mxu0
      %v1339 = vadd.f32 0.0, %v1338
      %v1340 = vpop.f32.mrb[0].mxu0
      %1341 = vmatprep.mubr.bf16.mxu0 0
      %1342 = vmatmul.mubr.bf16.gmra.mrb[0].mxu0 %v1181
      %v1343 = vpop.f32.mrb[0].mxu0
      %v1344 = vadd.f32 0.0, %v1343
      %v1345 = vpop.f32.mrb[0].mxu0
      %v1346 = vpop.f32.mrb[0].mxu0
      %v1347 = vadd.f32 0.0, %v1346
      %v1348 = vpop.f32.mrb[0].mxu0
      %1349 = vmatprep.mubr.bf16.mxu0 0
      %1350 = vmatmul.mubr.bf16.gmra.mrb[0].mxu0 %v1182
      %v1351 = vpop.f32.mrb[0].mxu0
      %v1352 = vadd.f32 0.0, %v1351
      %v1353 = vpop.f32.mrb[0].mxu0
      %v1354 = vpop.f32.mrb[0].mxu0
      %v1355 = vadd.f32 0.0, %v1354
      %v1356 = vpop.f32.mrb[0].mxu0
      %1357 = vmatprep.mubr.bf16.mxu0 0
      %1358 = vmatmul.mubr.bf16.gmra.mrb[0].mxu0 %v1183
      %v1359 = vpop.f32.mrb[0].mxu0
      %v1360 = vadd.f32 0.0, %v1359
      %v1361 = vpop.f32.mrb[0].mxu0
      %v1362 = vpop.f32.mrb[0].mxu0
      %v1363 = vadd.f32 0.0, %v1362
      %v1364 = vpop.f32.mrb[0].mxu0
      %1365 = vmatprep.mubr.bf16.mxu0 0
      %1366 = vmatmul.mubr.bf16.gmra.mrb[0].mxu0 %v1184
      %v1367 = vpop.f32.mrb[0].mxu0
      %v1368 = vadd.f32 0.0, %v1367
      %v1369 = vpop.f32.mrb[0].mxu0
      %v1370 = vpop.f32.mrb[0].mxu0
      %v1371 = vadd.f32 0.0, %v1370
      %v1372 = vpop.f32.mrb[0].mxu0
      %1373 = vmatprep.mubr.bf16.mxu0 0
      %1374 = vmatmul.mubr.bf16.gmra.mrb[0].mxu0 %v1185
      %v1375 = vpop.f32.mrb[0].mxu0
      %v1376 = vadd.f32 0.0, %v1375
      %v1377 = vpop.f32.mrb[0].mxu0
      %v1378 = vpop.f32.mrb[0].mxu0
      %v1379 = vadd.f32 0.0, %v1378
      %v1380 = vpop.f32.mrb[0].mxu0
      %1381 = vmatprep.mubr.bf16.mxu0 0
      %1382 = vmatmul.mubr.bf16.gmra.mrb[0].mxu0 %v1186
      %v1383 = vpop.f32.mrb[0].mxu0
      %v1384 = vadd.f32 0.0, %v1383
      %v1385 = vpop.f32.mrb[0].mxu0
      %v1386 = vpop.f32.mrb[0].mxu0
      %v1387 = vadd.f32 0.0, %v1386
      %v1388 = vpop.f32.mrb[0].mxu0
      %1389 = vmatprep.mubr.bf16.mxu0 0
      %1390 = vmatmul.mubr.bf16.gmra.mrb[0].mxu0 %v1187
      %v1391 = vpop.f32.mrb[0].mxu0
      %v1392 = vadd.f32 0.0, %v1391
      %v1393 = vpop.f32.mrb[0].mxu0
      %v1394 = vpop.f32.mrb[0].mxu0
      %v1395 = vadd.f32 0.0, %v1394
      %v1396 = vpop.f32.mrb[0].mxu0
      %1397 = vmatprep.mubr.bf16.mxu0 0
      %1398 = vmatmul.mubr.bf16.gmra.mrb[0].mxu0 %v1188
      %v1399 = vpop.f32.mrb[0].mxu0
      %v1400 = vadd.f32 0.0, %v1399
      %v1401 = vpop.f32.mrb[0].mxu0
      %v1402 = vpop.f32.mrb[0].mxu0
      %v1403 = vadd.f32 0.0, %v1402
      %v1404 = vpop.f32.mrb[0].mxu0
      %1405 = vmatprep.mubr.bf16.mxu0 0
      %1406 = vmatmul.mubr.bf16.gmra.mrb[0].mxu0 %v1189
      %v1407 = vpop.f32.mrb[0].mxu0
      %v1408 = vadd.f32 0.0, %v1407
      %v1409 = vpop.f32.mrb[0].mxu0
      %v1410 = vpop.f32.mrb[0].mxu0
      %v1411 = vadd.f32 0.0, %v1410
      %v1412 = vpop.f32.mrb[0].mxu0
      %1413 = vmatprep.mubr.bf16.mxu0 0
      %1414 = vmatmul.mubr.bf16.gmra.mrb[0].mxu0 %v1190
      %v1415 = vpop.f32.mrb[0].mxu0
      %v1416 = vadd.f32 0.0, %v1415
      %v1417 = vpop.f32.mrb[0].mxu0
      %v1418 = vpop.f32.mrb[0].mxu0
      %v1419 = vadd.f32 0.0, %v1418
      %v1420 = vpop.f32.mrb[0].mxu0
      %1421 = vmatprep.mubr.bf16.mxu0 0
      %1422 = vmatmul.mubr.bf16.gmra.mrb[0].mxu0 %v1191
      %v1423 = vpop.f32.mrb[0].mxu0
      %v1424 = vadd.f32 0.0, %v1423
      %v1425 = vpop.f32.mrb[0].mxu0
      %v1426 = vpop.f32.mrb[0].mxu0
      %v1427 = vadd.f32 0.0, %v1426
      %v1428 = vpop.f32.mrb[0].mxu0
      %1429 = vmatprep.mubr.bf16.mxu0 0
      %1430 = vmatmul.mubr.bf16.gmra.mrb[0].mxu0 %v1192
      %v1431 = vpop.f32.mrb[0].mxu0
      %v1432 = vadd.f32 0.0, %v1431
      %v1433 = vpop.f32.mrb[0].mxu0
      %v1434 = vpop.f32.mrb[0].mxu0
      %v1435 = vadd.f32 0.0, %v1434
      %v1436 = vpop.f32.mrb[0].mxu0
      %1437 = vmatprep.mubr.bf16.mxu0 0
      %1438 = vmatmul.mubr.bf16.gmra.mrb[0].mxu0 %v1193
      %v1439 = vpop.f32.mrb[0].mxu0
      %v1440 = vadd.f32 0.0, %v1439
      %v1441 = vpop.f32.mrb[0].mxu0
      %v1442 = vpop.f32.mrb[0].mxu0
      %v1443 = vadd.f32 0.0, %v1442
      %v1444 = vpop.f32.mrb[0].mxu0
      %1445 = vmatprep.mubr.bf16.mxu0 0
      %1446 = vmatmul.mubr.bf16.gmra.mrb[0].mxu0 %v1194
      %v1447 = vpop.f32.mrb[0].mxu0
      %v1448 = vadd.f32 0.0, %v1447
      %v1449 = vpop.f32.mrb[0].mxu0
      %v1450 = vpop.f32.mrb[0].mxu0
      %v1451 = vadd.f32 0.0, %v1450
      %v1452 = vpop.f32.mrb[0].mxu0
      %1453 = vmatprep.mubr.bf16.mxu0 0
      %1454 = vmatmul.mubr.bf16.gmra.mrb[0].mxu0 %v1195
      %v1455 = vpop.f32.mrb[0].mxu0
      %v1456 = vadd.f32 0.0, %v1455
      %v1457 = vpop.f32.mrb[0].mxu0
      %v1458 = vpop.f32.mrb[0].mxu0
      %v1459 = vpop.f32.mrb[0].mxu0
      %1460 = vdwg.mxu0
      %v1477 = vunpack.c.l.b16 %v1118
      %v1478 = vunpack.c.l.b16 %v1119
      %v1479 = vunpack.c.l.b16 %v1120
      %v1480 = vunpack.c.l.b16 %v1121
      %v1481 = vunpack.c.l.b16 %v1122
      %v1482 = vunpack.c.l.b16 %v1123
      %v1483 = vunpack.c.l.b16 %v1124
      %v1484 = vunpack.c.l.b16 %v1125
      %v1485 = vunpack.c.l.b16 %v1126
      %v1486 = vunpack.c.l.b16 %v1127
      %v1487 = vunpack.c.l.b16 %v1128
      %v1488 = vunpack.c.l.b16 %v1129
      %v1489 = vunpack.c.l.b16 %v1130
      %v1490 = vunpack.c.l.b16 %v1131
      %v1491 = vunpack.c.l.b16 %v1132
      %v1492 = vunpack.c.l.b16 %v1133
      %v1493 = vpack.c.b16 %v1478, %v1477
      %v1494 = vpack.c.b16 %v1480, %v1479
      %v1495 = vpack.c.b16 %v1482, %v1481
      %v1496 = vpack.c.b16 %v1484, %v1483
      %v1497 = vpack.c.b16 %v1486, %v1485
      %v1498 = vpack.c.b16 %v1488, %v1487
      %v1499 = vpack.c.b16 %v1490, %v1489
      %v1500 = vpack.c.b16 %v1492, %v1491
      %1509 = vmatprep.subr.bf16.mxu0 0
      %1510 = vmatpush1.bf16.msra.mxu0 %v1493
      %1511 = vmatprep.subr.bf16.mxu0 0
      %1512 = vmatpush1.bf16.msra.mxu0 %v1494
      %1513 = vmatprep.subr.bf16.mxu0 0
      %1514 = vmatpush1.bf16.msra.mxu0 %v1495
      %1515 = vmatprep.subr.bf16.mxu0 0
      %1516 = vmatpush1.bf16.msra.mxu0 %v1496
      %1517 = vmatprep.subr.bf16.mxu0 0
      %1518 = vmatpush1.bf16.msra.mxu0 %v1497
      %1519 = vmatprep.subr.bf16.mxu0 0
      %1520 = vmatpush1.bf16.msra.mxu0 %v1498
      %1521 = vmatprep.subr.bf16.mxu0 0
      %1522 = vmatpush1.bf16.msra.mxu0 %v1499
      %1523 = vmatprep.subr.bf16.mxu0 0
      %1524 = vmatpush1.bf16.msra.mxu0 %v1500
      %1525 = vmatprep.subr.bf16.mxu0 0
      %1526 = vmatpush1.bf16.msra.mxu0 0
      %1527 = vmatprep.subr.bf16.mxu0 0
      %1528 = vmatpush1.bf16.msra.mxu0 0
      %1529 = vmatprep.subr.bf16.mxu0 0
      %1530 = vmatpush1.bf16.msra.mxu0 0
      %1531 = vmatprep.subr.bf16.mxu0 0
      %1532 = vmatpush1.bf16.msra.mxu0 0
      %1533 = vmatprep.subr.bf16.mxu0 0
      %1534 = vmatpush1.bf16.msra.mxu0 0
      %1535 = vmatprep.subr.bf16.mxu0 0
      %1536 = vmatpush1.bf16.msra.mxu0 0
      %1537 = vmatprep.subr.bf16.mxu0 0
      %1538 = vmatpush1.bf16.msra.mxu0 0
      %1539 = vmatprep.subr.bf16.mxu0 0
      %1540 = vmatpush1.bf16.msra.mxu0 0
      %1541 = vmatprep.mubr.bf16.mxu0 0
      %1542 = vmatmul.mubr.bf16.gmra.mrb[0].mxu0 %v1097
      %v1543 = vpop.f32.mrb[0].mxu0
      %v1544 = vadd.f32 %v1296, %v1543
      %v1545 = vpop.f32.mrb[0].mxu0
      %v1546 = vpop.f32.mrb[0].mxu0
      %v1547 = vadd.f32 %v1299, %v1546
      %v1548 = vpop.f32.mrb[0].mxu0
      %1549 = vmatprep.mubr.bf16.mxu0 0
      %1550 = vmatmul.mubr.bf16.gmra.mrb[0].mxu0 %v1098
      %v1551 = vpop.f32.mrb[0].mxu0
      %v1552 = vadd.f32 %v1304, %v1551
      %v1553 = vpop.f32.mrb[0].mxu0
      %v1554 = vpop.f32.mrb[0].mxu0
      %v1555 = vadd.f32 %v1307, %v1554
      %v1556 = vpop.f32.mrb[0].mxu0
      %1557 = vmatprep.mubr.bf16.mxu0 0
      %1558 = vmatmul.mubr.bf16.gmra.mrb[0].mxu0 %v1099
      %v1559 = vpop.f32.mrb[0].mxu0
      %v1560 = vadd.f32 %v1312, %v1559
      %v1561 = vpop.f32.mrb[0].mxu0
      %v1562 = vpop.f32.mrb[0].mxu0
      %v1563 = vadd.f32 %v1315, %v1562
      %v1564 = vpop.f32.mrb[0].mxu0
      %1565 = vmatprep.mubr.bf16.mxu0 0
      %1566 = vmatmul.mubr.bf16.gmra.mrb[0].mxu0 %v1100
      %v1567 = vpop.f32.mrb[0].mxu0
      %v1568 = vadd.f32 %v1320, %v1567
      %v1569 = vpop.f32.mrb[0].mxu0
      %v1570 = vpop.f32.mrb[0].mxu0
      %v1571 = vadd.f32 %v1323, %v1570
      %v1572 = vpop.f32.mrb[0].mxu0
      %1573 = vmatprep.mubr.bf16.mxu0 0
      %1574 = vmatmul.mubr.bf16.gmra.mrb[0].mxu0 %v1101
      %v1575 = vpop.f32.mrb[0].mxu0
      %v1576 = vadd.f32 %v1328, %v1575
      %v1577 = vpop.f32.mrb[0].mxu0
      %v1578 = vpop.f32.mrb[0].mxu0
      %v1579 = vadd.f32 %v1331, %v1578
      %v1580 = vpop.f32.mrb[0].mxu0
      %1581 = vmatprep.mubr.bf16.mxu0 0
      %1582 = vmatmul.mubr.bf16.gmra.mrb[0].mxu0 %v1102
      %v1583 = vpop.f32.mrb[0].mxu0
      %v1584 = vadd.f32 %v1336, %v1583
      %v1585 = vpop.f32.mrb[0].mxu0
      %v1586 = vpop.f32.mrb[0].mxu0
      %v1587 = vadd.f32 %v1339, %v1586
      %v1588 = vpop.f32.mrb[0].mxu0
      %1589 = vmatprep.mubr.bf16.mxu0 0
      %1590 = vmatmul.mubr.bf16.gmra.mrb[0].mxu0 %v1103
      %v1591 = vpop.f32.mrb[0].mxu0
      %v1592 = vadd.f32 %v1344, %v1591
      %v1593 = vpop.f32.mrb[0].mxu0
      %v1594 = vpop.f32.mrb[0].mxu0
      %v1595 = vadd.f32 %v1347, %v1594
      %v1596 = vpop.f32.mrb[0].mxu0
      %1597 = vmatprep.mubr.bf16.mxu0 0
      %1598 = vmatmul.mubr.bf16.gmra.mrb[0].mxu0 %v1104
      %v1599 = vpop.f32.mrb[0].mxu0
      %v1600 = vadd.f32 %v1352, %v1599
      %v1601 = vpop.f32.mrb[0].mxu0
      %v1602 = vpop.f32.mrb[0].mxu0
      %v1603 = vadd.f32 %v1355, %v1602
      %v1604 = vpop.f32.mrb[0].mxu0
      %1605 = vmatprep.mubr.bf16.mxu0 0
      %1606 = vmatmul.mubr.bf16.gmra.mrb[0].mxu0 %v1105
      %v1607 = vpop.f32.mrb[0].mxu0
      %v1608 = vadd.f32 %v1360, %v1607
      %v1609 = vpop.f32.mrb[0].mxu0
      %v1610 = vpop.f32.mrb[0].mxu0
      %v1611 = vadd.f32 %v1363, %v1610
      %v1612 = vpop.f32.mrb[0].mxu0
      %1613 = vmatprep.mubr.bf16.mxu0 0
      %1614 = vmatmul.mubr.bf16.gmra.mrb[0].mxu0 %v1106
      %v1615 = vpop.f32.mrb[0].mxu0
      %v1616 = vadd.f32 %v1368, %v1615
      %v1617 = vpop.f32.mrb[0].mxu0
      %v1618 = vpop.f32.mrb[0].mxu0
      %v1619 = vadd.f32 %v1371, %v1618
      %v1620 = vpop.f32.mrb[0].mxu0
      %1621 = vmatprep.mubr.bf16.mxu0 0
      %1622 = vmatmul.mubr.bf16.gmra.mrb[0].mxu0 %v1107
      %v1623 = vpop.f32.mrb[0].mxu0
      %v1624 = vadd.f32 %v1376, %v1623
      %v1625 = vpop.f32.mrb[0].mxu0
      %v1626 = vpop.f32.mrb[0].mxu0
      %v1627 = vadd.f32 %v1379, %v1626
      %v1628 = vpop.f32.mrb[0].mxu0
      %1629 = vmatprep.mubr.bf16.mxu0 0
      %1630 = vmatmul.mubr.bf16.gmra.mrb[0].mxu0 %v1108
      %v1631 = vpop.f32.mrb[0].mxu0
      %v1632 = vadd.f32 %v1384, %v1631
      %v1633 = vpop.f32.mrb[0].mxu0
      %v1634 = vpop.f32.mrb[0].mxu0
      %v1635 = vadd.f32 %v1387, %v1634
      %v1636 = vpop.f32.mrb[0].mxu0
      %1637 = vmatprep.mubr.bf16.mxu0 0
      %1638 = vmatmul.mubr.bf16.gmra.mrb[0].mxu0 %v1109
      %v1639 = vpop.f32.mrb[0].mxu0
      %v1640 = vadd.f32 %v1392, %v1639
      %v1641 = vpop.f32.mrb[0].mxu0
      %v1642 = vpop.f32.mrb[0].mxu0
      %v1643 = vadd.f32 %v1395, %v1642
      %v1644 = vpop.f32.mrb[0].mxu0
      %1645 = vmatprep.mubr.bf16.mxu0 0
      %1646 = vmatmul.mubr.bf16.gmra.mrb[0].mxu0 %v1110
      %v1647 = vpop.f32.mrb[0].mxu0
      %v1648 = vadd.f32 %v1400, %v1647
      %v1649 = vpop.f32.mrb[0].mxu0
      %v1650 = vpop.f32.mrb[0].mxu0
      %v1651 = vadd.f32 %v1403, %v1650
      %v1652 = vpop.f32.mrb[0].mxu0
      %1653 = vmatprep.mubr.bf16.mxu0 0
      %1654 = vmatmul.mubr.bf16.gmra.mrb[0].mxu0 %v1111
      %v1655 = vpop.f32.mrb[0].mxu0
      %v1656 = vadd.f32 %v1408, %v1655
      %v1657 = vpop.f32.mrb[0].mxu0
      %v1658 = vpop.f32.mrb[0].mxu0
      %v1659 = vadd.f32 %v1411, %v1658
      %v1660 = vpop.f32.mrb[0].mxu0
      %1661 = vmatprep.mubr.bf16.mxu0 0
      %1662 = vmatmul.mubr.bf16.gmra.mrb[0].mxu0 %v1112
      %v1663 = vpop.f32.mrb[0].mxu0
      %v1664 = vadd.f32 %v1416, %v1663
      %v1665 = vpop.f32.mrb[0].mxu0
      %v1666 = vpop.f32.mrb[0].mxu0
      %v1667 = vadd.f32 %v1419, %v1666
      %v1668 = vpop.f32.mrb[0].mxu0
      %1669 = vmatprep.mubr.bf16.mxu0 0
      %1670 = vmatmul.mubr.bf16.gmra.mrb[0].mxu0 %v1113
      %v1671 = vpop.f32.mrb[0].mxu0
      %v1672 = vadd.f32 %v1424, %v1671
      %v1673 = vpop.f32.mrb[0].mxu0
      %v1674 = vpop.f32.mrb[0].mxu0
      %v1675 = vadd.f32 %v1427, %v1674
      %v1676 = vpop.f32.mrb[0].mxu0
      %1677 = vmatprep.mubr.bf16.mxu0 0
      %1678 = vmatmul.mubr.bf16.gmra.mrb[0].mxu0 %v1114
      %v1679 = vpop.f32.mrb[0].mxu0
      %v1680 = vadd.f32 %v1432, %v1679
      %v1681 = vpop.f32.mrb[0].mxu0
      %v1682 = vpop.f32.mrb[0].mxu0
      %v1683 = vadd.f32 %v1435, %v1682
      %v1684 = vpop.f32.mrb[0].mxu0
      %1685 = vmatprep.mubr.bf16.mxu0 0
      %1686 = vmatmul.mubr.bf16.gmra.mrb[0].mxu0 %v1115
      %v1687 = vpop.f32.mrb[0].mxu0
      %v1688 = vadd.f32 %v1440, %v1687
      %v1689 = vpop.f32.mrb[0].mxu0
      %v1690 = vpop.f32.mrb[0].mxu0
      %v1691 = vadd.f32 %v1443, %v1690
      %v1692 = vpop.f32.mrb[0].mxu0
      %1693 = vmatprep.mubr.bf16.mxu0 0
      %1694 = vmatmul.mubr.bf16.gmra.mrb[0].mxu0 %v1116
      %v1695 = vpop.f32.mrb[0].mxu0
      %v1696 = vadd.f32 %v1448, %v1695
      %v1697 = vpop.f32.mrb[0].mxu0
      %v1698 = vpop.f32.mrb[0].mxu0
      %v1699 = vadd.f32 %v1451, %v1698
      %v1700 = vpop.f32.mrb[0].mxu0
      %1701 = vmatprep.mubr.bf16.mxu0 0
      %1702 = vmatmul.mubr.bf16.gmra.mrb[0].mxu0 %v1117
      %v1703 = vpop.f32.mrb[0].mxu0
      %v1704 = vadd.f32 %v1456, %v1703
      %v1705 = vpop.f32.mrb[0].mxu0
      %v1706 = vpop.f32.mrb[0].mxu0
      %v1707 = vpop.f32.mrb[0].mxu0
      %1708 = vdwg.mxu0
      %v1709 = vld [vmem:[#allocation2 + $0x7] sm:$0xff]
      %v1710 = vld [vmem:[#allocation2 + $0xf] sm:$0xff]
      %v1711 = vld [vmem:[#allocation2 + $0x17] sm:$0xff]
      %v1712 = vld [vmem:[#allocation2 + $0x1f] sm:$0xff]
      %v1713 = vld [vmem:[#allocation2 + $0x27] sm:$0xff]
      %v1714 = vld [vmem:[#allocation2 + $0x2f] sm:$0xff]
      %v1715 = vld [vmem:[#allocation2 + $0x37] sm:$0xff]
      %v1716 = vld [vmem:[#allocation2 + $0x3f] sm:$0xff]
      %v1717 = vld [vmem:[#allocation2 + $0x47] sm:$0xff]
      %v1718 = vld [vmem:[#allocation2 + $0x4f] sm:$0xff]
      %v1719 = vld [vmem:[#allocation2 + $0x57] sm:$0xff]
      %v1720 = vld [vmem:[#allocation2 + $0x5f] sm:$0xff]
      %v1721 = vld [vmem:[#allocation2 + $0x67] sm:$0xff]
      %v1722 = vld [vmem:[#allocation2 + $0x6f] sm:$0xff]
      %v1723 = vld [vmem:[#allocation2 + $0x77] sm:$0xff]
      %v1724 = vld [vmem:[#allocation2 + $0x7f] sm:$0xff]
      %v1725 = vld [vmem:[#allocation2 + $0x87] sm:$0xff]
      %v1726 = vld [vmem:[#allocation2 + $0x8f] sm:$0xff]
      %v1727 = vld [vmem:[#allocation2 + $0x97] sm:$0xff]
      %v1728 = vld [vmem:[#allocation2 + $0x9f] sm:$0xff]
      %v1729 = vld [vmem:[#allocation2 + $0xa7] sm:$0xff]
      %v1730 = vld [vmem:[#allocation2 + $0xaf] sm:$0xff]
      %v1731 = vld [vmem:[#allocation2 + $0xb7] sm:$0xff]
      %v1732 = vld [vmem:[#allocation2 + $0xbf] sm:$0xff]
      %v1733 = vld [vmem:[#allocation2 + $0xc7] sm:$0xff]
      %v1734 = vld [vmem:[#allocation2 + $0xcf] sm:$0xff]
      %v1735 = vld [vmem:[#allocation2 + $0xd7] sm:$0xff]
      %v1736 = vld [vmem:[#allocation2 + $0xdf] sm:$0xff]
      %v1737 = vld [vmem:[#allocation2 + $0xe7] sm:$0xff]
      %v1738 = vld [vmem:[#allocation2 + $0xef] sm:$0xff]
      %v1739 = vld [vmem:[#allocation2 + $0xf7] sm:$0xff]
      %v1740 = vld [vmem:[#allocation2 + $0xff] sm:$0xff]
      %v1741 = vld [vmem:[#allocation2 + $0x107] sm:$0xff]
      %v1742 = vld [vmem:[#allocation2 + $0x10f] sm:$0xff]
      %v1743 = vld [vmem:[#allocation2 + $0x117] sm:$0xff]
      %v1744 = vld [vmem:[#allocation2 + $0x11f] sm:$0xff]
      %v1745 = vld [vmem:[#allocation2 + $0x127] sm:$0xff]
      %v1746 = vld [vmem:[#allocation2 + $0x12f] sm:$0xff]
      %v1747 = vld [vmem:[#allocation2 + $0x137] sm:$0xff]
      %v1748 = vld [vmem:[#allocation2 + $0x13f] sm:$0xff]
      %v1749 = vld [vmem:[#allocation2 + $0x147] sm:$0xf]
      %v1750 = vpack.c.bf16 %v1710, %v1709
      %v1751 = vpack.c.bf16 %v1712, %v1711
      %v1752 = vpack.c.bf16 %v1714, %v1713
      %v1753 = vpack.c.bf16 %v1716, %v1715
      %v1754 = vpack.c.bf16 %v1718, %v1717
      %v1755 = vpack.c.bf16 %v1720, %v1719
      %v1756 = vpack.c.bf16 %v1722, %v1721
      %v1757 = vpack.c.bf16 %v1724, %v1723
      %v1758 = vpack.c.bf16 %v1726, %v1725
      %v1759 = vpack.c.bf16 %v1728, %v1727
      %v1760 = vpack.c.bf16 %v1730, %v1729
      %v1761 = vpack.c.bf16 %v1732, %v1731
      %v1762 = vpack.c.bf16 %v1734, %v1733
      %v1763 = vpack.c.bf16 %v1736, %v1735
      %v1764 = vpack.c.bf16 %v1738, %v1737
      %v1765 = vpack.c.bf16 %v1740, %v1739
      %v1766 = vpack.c.bf16 %v1742, %v1741
      %v1767 = vpack.c.bf16 %v1744, %v1743
      %v1768 = vpack.c.bf16 %v1746, %v1745
      %v1769 = vpack.c.bf16 %v1748, %v1747
      %v1770 = vpack.c.bf16 %v1749, %v1749
      %s1771 = scalar_lea.vmem %s4, 128
      %v1772 = vld [vmem:[%s1771] sm:$0xf]
      %v1773 = vld [vmem:[%s1771 + $0x4] sm:$0xf]
      %v1774 = vld [vmem:[%s1771 + $0x8] sm:$0xf]
      %v1775 = vld [vmem:[%s1771 + $0xc] sm:$0xf]
      %v1776 = vld [vmem:[%s1771 + $0x10] sm:$0xf]
      %v1777 = vld [vmem:[%s1771 + $0x14] sm:$0xf]
      %v1778 = vld [vmem:[%s1771 + $0x18] sm:$0xf]
      %v1779 = vld [vmem:[%s1771 + $0x1c] sm:$0xf]
      %v1780 = vld [vmem:[%s1771 + $0x20] sm:$0xf]
      %v1781 = vld [vmem:[%s1771 + $0x24] sm:$0xf]
      %v1782 = vld [vmem:[%s1771 + $0x28] sm:$0xf]
      %v1783 = vld [vmem:[%s1771 + $0x2c] sm:$0xf]
      %v1784 = vld [vmem:[%s1771 + $0x30] sm:$0xf]
      %v1785 = vld [vmem:[%s1771 + $0x34] sm:$0xf]
      %v1786 = vld [vmem:[%s1771 + $0x38] sm:$0xf]
      %v1787 = vld [vmem:[%s1771 + $0x3c] sm:$0xf]
      %v1804 = vunpack.c.l.b16 %v1772
      %v1805 = vunpack.c.l.b16 %v1773
      %v1806 = vunpack.c.l.b16 %v1774
      %v1807 = vunpack.c.l.b16 %v1775
      %v1808 = vunpack.c.l.b16 %v1776
      %v1809 = vunpack.c.l.b16 %v1777
      %v1810 = vunpack.c.l.b16 %v1778
      %v1811 = vunpack.c.l.b16 %v1779
      %v1812 = vunpack.c.l.b16 %v1780
      %v1813 = vunpack.c.l.b16 %v1781
      %v1814 = vunpack.c.l.b16 %v1782
      %v1815 = vunpack.c.l.b16 %v1783
      %v1816 = vunpack.c.l.b16 %v1784
      %v1817 = vunpack.c.l.b16 %v1785
      %v1818 = vunpack.c.l.b16 %v1786
      %v1819 = vunpack.c.l.b16 %v1787
      %v1820 = vpack.c.b16 %v1805, %v1804
      %v1821 = vpack.c.b16 %v1807, %v1806
      %v1822 = vpack.c.b16 %v1809, %v1808
      %v1823 = vpack.c.b16 %v1811, %v1810
      %v1824 = vpack.c.b16 %v1813, %v1812
      %v1825 = vpack.c.b16 %v1815, %v1814
      %v1826 = vpack.c.b16 %v1817, %v1816
      %v1827 = vpack.c.b16 %v1819, %v1818
      %1836 = vmatprep.subr.bf16.mxu0 0
      %1837 = vmatpush1.bf16.msra.mxu0 %v1820
      %1838 = vmatprep.subr.bf16.mxu0 0
      %1839 = vmatpush1.bf16.msra.mxu0 %v1821
      %1840 = vmatprep.subr.bf16.mxu0 0
      %1841 = vmatpush1.bf16.msra.mxu0 %v1822
      %1842 = vmatprep.subr.bf16.mxu0 0
      %1843 = vmatpush1.bf16.msra.mxu0 %v1823
      %1844 = vmatprep.subr.bf16.mxu0 0
      %1845 = vmatpush1.bf16.msra.mxu0 %v1824
      %1846 = vmatprep.subr.bf16.mxu0 0
      %1847 = vmatpush1.bf16.msra.mxu0 %v1825
      %1848 = vmatprep.subr.bf16.mxu0 0
      %1849 = vmatpush1.bf16.msra.mxu0 %v1826
      %1850 = vmatprep.subr.bf16.mxu0 0
      %1851 = vmatpush1.bf16.msra.mxu0 %v1827
      %1852 = vmatprep.subr.bf16.mxu0 0
      %1853 = vmatpush1.bf16.msra.mxu0 0
      %1854 = vmatprep.subr.bf16.mxu0 0
      %1855 = vmatpush1.bf16.msra.mxu0 0
      %1856 = vmatprep.subr.bf16.mxu0 0
      %1857 = vmatpush1.bf16.msra.mxu0 0
      %1858 = vmatprep.subr.bf16.mxu0 0
      %1859 = vmatpush1.bf16.msra.mxu0 0
      %1860 = vmatprep.subr.bf16.mxu0 0
      %1861 = vmatpush1.bf16.msra.mxu0 0
      %1862 = vmatprep.subr.bf16.mxu0 0
      %1863 = vmatpush1.bf16.msra.mxu0 0
      %1864 = vmatprep.subr.bf16.mxu0 0
      %1865 = vmatpush1.bf16.msra.mxu0 0
      %1866 = vmatprep.subr.bf16.mxu0 0
      %1867 = vmatpush1.bf16.msra.mxu0 0
      %1868 = vmatprep.mubr.bf16.mxu0 0
      %1869 = vmatmul.mubr.bf16.gmra.mrb[0].mxu0 %v1750
      %v1870 = vpop.f32.mrb[0].mxu0
      %v1871 = vadd.f32 0.0, %v1870
      %v1872 = vpop.f32.mrb[0].mxu0
      %v1873 = vpop.f32.mrb[0].mxu0
      %v1874 = vadd.f32 0.0, %v1873
      %v1875 = vpop.f32.mrb[0].mxu0
      %1876 = vmatprep.mubr.bf16.mxu0 0
      %1877 = vmatmul.mubr.bf16.gmra.mrb[0].mxu0 %v1751
      %v1878 = vpop.f32.mrb[0].mxu0
      %v1879 = vadd.f32 0.0, %v1878
      %v1880 = vpop.f32.mrb[0].mxu0
      %v1881 = vpop.f32.mrb[0].mxu0
      %v1882 = vadd.f32 0.0, %v1881
      %v1883 = vpop.f32.mrb[0].mxu0
      %1884 = vmatprep.mubr.bf16.mxu0 0
      %1885 = vmatmul.mubr.bf16.gmra.mrb[0].mxu0 %v1752
      %v1886 = vpop.f32.mrb[0].mxu0
      %v1887 = vadd.f32 0.0, %v1886
      %v1888 = vpop.f32.mrb[0].mxu0
      %v1889 = vpop.f32.mrb[0].mxu0
      %v1890 = vadd.f32 0.0, %v1889
      %v1891 = vpop.f32.mrb[0].mxu0
      %1892 = vmatprep.mubr.bf16.mxu0 0
      %1893 = vmatmul.mubr.bf16.gmra.mrb[0].mxu0 %v1753
      %v1894 = vpop.f32.mrb[0].mxu0
      %v1895 = vadd.f32 0.0, %v1894
      %v1896 = vpop.f32.mrb[0].mxu0
      %v1897 = vpop.f32.mrb[0].mxu0
      %v1898 = vadd.f32 0.0, %v1897
      %v1899 = vpop.f32.mrb[0].mxu0
      %1900 = vmatprep.mubr.bf16.mxu0 0
      %1901 = vmatmul.mubr.bf16.gmra.mrb[0].mxu0 %v1754
      %v1902 = vpop.f32.mrb[0].mxu0
      %v1903 = vadd.f32 0.0, %v1902
      %v1904 = vpop.f32.mrb[0].mxu0
      %v1905 = vpop.f32.mrb[0].mxu0
      %v1906 = vadd.f32 0.0, %v1905
      %v1907 = vpop.f32.mrb[0].mxu0
      %1908 = vmatprep.mubr.bf16.mxu0 0
      %1909 = vmatmul.mubr.bf16.gmra.mrb[0].mxu0 %v1755
      %v1910 = vpop.f32.mrb[0].mxu0
      %v1911 = vadd.f32 0.0, %v1910
      %v1912 = vpop.f32.mrb[0].mxu0
      %v1913 = vpop.f32.mrb[0].mxu0
      %v1914 = vadd.f32 0.0, %v1913
      %v1915 = vpop.f32.mrb[0].mxu0
      %1916 = vmatprep.mubr.bf16.mxu0 0
      %1917 = vmatmul.mubr.bf16.gmra.mrb[0].mxu0 %v1756
      %v1918 = vpop.f32.mrb[0].mxu0
      %v1919 = vadd.f32 0.0, %v1918
      %v1920 = vpop.f32.mrb[0].mxu0
      %v1921 = vpop.f32.mrb[0].mxu0
      %v1922 = vadd.f32 0.0, %v1921
      %v1923 = vpop.f32.mrb[0].mxu0
      %1924 = vmatprep.mubr.bf16.mxu0 0
      %1925 = vmatmul.mubr.bf16.gmra.mrb[0].mxu0 %v1757
      %v1926 = vpop.f32.mrb[0].mxu0
      %v1927 = vadd.f32 0.0, %v1926
      %v1928 = vpop.f32.mrb[0].mxu0
      %v1929 = vpop.f32.mrb[0].mxu0
      %v1930 = vadd.f32 0.0, %v1929
      %v1931 = vpop.f32.mrb[0].mxu0
      %1932 = vmatprep.mubr.bf16.mxu0 0
      %1933 = vmatmul.mubr.bf16.gmra.mrb[0].mxu0 %v1758
      %v1934 = vpop.f32.mrb[0].mxu0
      %v1935 = vadd.f32 0.0, %v1934
      %v1936 = vpop.f32.mrb[0].mxu0
      %v1937 = vpop.f32.mrb[0].mxu0
      %v1938 = vadd.f32 0.0, %v1937
      %v1939 = vpop.f32.mrb[0].mxu0
      %1940 = vmatprep.mubr.bf16.mxu0 0
      %1941 = vmatmul.mubr.bf16.gmra.mrb[0].mxu0 %v1759
      %v1942 = vpop.f32.mrb[0].mxu0
      %v1943 = vadd.f32 0.0, %v1942
      %v1944 = vpop.f32.mrb[0].mxu0
      %v1945 = vpop.f32.mrb[0].mxu0
      %v1946 = vadd.f32 0.0, %v1945
      %v1947 = vpop.f32.mrb[0].mxu0
      %1948 = vmatprep.mubr.bf16.mxu0 0
      %1949 = vmatmul.mubr.bf16.gmra.mrb[0].mxu0 %v1760
      %v1950 = vpop.f32.mrb[0].mxu0
      %v1951 = vadd.f32 0.0, %v1950
      %v1952 = vpop.f32.mrb[0].mxu0
      %v1953 = vpop.f32.mrb[0].mxu0
      %v1954 = vadd.f32 0.0, %v1953
      %v1955 = vpop.f32.mrb[0].mxu0
      %1956 = vmatprep.mubr.bf16.mxu0 0
      %1957 = vmatmul.mubr.bf16.gmra.mrb[0].mxu0 %v1761
      %v1958 = vpop.f32.mrb[0].mxu0
      %v1959 = vadd.f32 0.0, %v1958
      %v1960 = vpop.f32.mrb[0].mxu0
      %v1961 = vpop.f32.mrb[0].mxu0
      %v1962 = vadd.f32 0.0, %v1961
      %v1963 = vpop.f32.mrb[0].mxu0
      %1964 = vmatprep.mubr.bf16.mxu0 0
      %1965 = vmatmul.mubr.bf16.gmra.mrb[0].mxu0 %v1762
      %v1966 = vpop.f32.mrb[0].mxu0
      %v1967 = vadd.f32 0.0, %v1966
      %v1968 = vpop.f32.mrb[0].mxu0
      %v1969 = vpop.f32.mrb[0].mxu0
      %v1970 = vadd.f32 0.0, %v1969
      %v1971 = vpop.f32.mrb[0].mxu0
      %1972 = vmatprep.mubr.bf16.mxu0 0
      %1973 = vmatmul.mubr.bf16.gmra.mrb[0].mxu0 %v1763
      %v1974 = vpop.f32.mrb[0].mxu0
      %v1975 = vadd.f32 0.0, %v1974
      %v1976 = vpop.f32.mrb[0].mxu0
      %v1977 = vpop.f32.mrb[0].mxu0
      %v1978 = vadd.f32 0.0, %v1977
      %v1979 = vpop.f32.mrb[0].mxu0
      %1980 = vmatprep.mubr.bf16.mxu0 0
      %1981 = vmatmul.mubr.bf16.gmra.mrb[0].mxu0 %v1764
      %v1982 = vpop.f32.mrb[0].mxu0
      %v1983 = vadd.f32 0.0, %v1982
      %v1984 = vpop.f32.mrb[0].mxu0
      %v1985 = vpop.f32.mrb[0].mxu0
      %v1986 = vadd.f32 0.0, %v1985
      %v1987 = vpop.f32.mrb[0].mxu0
      %1988 = vmatprep.mubr.bf16.mxu0 0
      %1989 = vmatmul.mubr.bf16.gmra.mrb[0].mxu0 %v1765
      %v1990 = vpop.f32.mrb[0].mxu0
      %v1991 = vadd.f32 0.0, %v1990
      %v1992 = vpop.f32.mrb[0].mxu0
      %v1993 = vpop.f32.mrb[0].mxu0
      %v1994 = vadd.f32 0.0, %v1993
      %v1995 = vpop.f32.mrb[0].mxu0
      %1996 = vmatprep.mubr.bf16.mxu0 0
      %1997 = vmatmul.mubr.bf16.gmra.mrb[0].mxu0 %v1766
      %v1998 = vpop.f32.mrb[0].mxu0
      %v1999 = vadd.f32 0.0, %v1998
      %v2000 = vpop.f32.mrb[0].mxu0
      %v2001 = vpop.f32.mrb[0].mxu0
      %v2002 = vadd.f32 0.0, %v2001
      %v2003 = vpop.f32.mrb[0].mxu0
      %2004 = vmatprep.mubr.bf16.mxu0 0
      %2005 = vmatmul.mubr.bf16.gmra.mrb[0].mxu0 %v1767
      %v2006 = vpop.f32.mrb[0].mxu0
      %v2007 = vadd.f32 0.0, %v2006
      %v2008 = vpop.f32.mrb[0].mxu0
      %v2009 = vpop.f32.mrb[0].mxu0
      %v2010 = vadd.f32 0.0, %v2009
      %v2011 = vpop.f32.mrb[0].mxu0
      %2012 = vmatprep.mubr.bf16.mxu0 0
      %2013 = vmatmul.mubr.bf16.gmra.mrb[0].mxu0 %v1768
      %v2014 = vpop.f32.mrb[0].mxu0
      %v2015 = vadd.f32 0.0, %v2014
      %v2016 = vpop.f32.mrb[0].mxu0
      %v2017 = vpop.f32.mrb[0].mxu0
      %v2018 = vadd.f32 0.0, %v2017
      %v2019 = vpop.f32.mrb[0].mxu0
      %2020 = vmatprep.mubr.bf16.mxu0 0
      %2021 = vmatmul.mubr.bf16.gmra.mrb[0].mxu0 %v1769
      %v2022 = vpop.f32.mrb[0].mxu0
      %v2023 = vadd.f32 0.0, %v2022
      %v2024 = vpop.f32.mrb[0].mxu0
      %v2025 = vpop.f32.mrb[0].mxu0
      %v2026 = vadd.f32 0.0, %v2025
      %v2027 = vpop.f32.mrb[0].mxu0
      %2028 = vmatprep.mubr.bf16.mxu0 0
      %2029 = vmatmul.mubr.bf16.gmra.mrb[0].mxu0 %v1770
      %v2030 = vpop.f32.mrb[0].mxu0
      %v2031 = vadd.f32 0.0, %v2030
      %v2032 = vpop.f32.mrb[0].mxu0
      %v2033 = vpop.f32.mrb[0].mxu0
      %v2034 = vpop.f32.mrb[0].mxu0
      %2035 = vdwg.mxu0
      %v2036 = vadd.f32 %v1544, %v1871
      %v2037 = vadd.f32 %v1547, %v1874
      %v2038 = vadd.f32 %v1552, %v1879
      %v2039 = vadd.f32 %v1555, %v1882
      %v2040 = vadd.f32 %v1560, %v1887
      %v2041 = vadd.f32 %v1563, %v1890
      %v2042 = vadd.f32 %v1568, %v1895
      %v2043 = vadd.f32 %v1571, %v1898
      %v2044 = vadd.f32 %v1576, %v1903
      %v2045 = vadd.f32 %v1579, %v1906
      %v2046 = vadd.f32 %v1584, %v1911
      %v2047 = vadd.f32 %v1587, %v1914
      %v2048 = vadd.f32 %v1592, %v1919
      %v2049 = vadd.f32 %v1595, %v1922
      %v2050 = vadd.f32 %v1600, %v1927
      %v2051 = vadd.f32 %v1603, %v1930
      %v2052 = vadd.f32 %v1608, %v1935
      %v2053 = vadd.f32 %v1611, %v1938
      %v2054 = vadd.f32 %v1616, %v1943
      %v2055 = vadd.f32 %v1619, %v1946
      %v2056 = vadd.f32 %v1624, %v1951
      %v2057 = vadd.f32 %v1627, %v1954
      %v2058 = vadd.f32 %v1632, %v1959
      %v2059 = vadd.f32 %v1635, %v1962
      %v2060 = vadd.f32 %v1640, %v1967
      %v2061 = vadd.f32 %v1643, %v1970
      %v2062 = vadd.f32 %v1648, %v1975
      %v2063 = vadd.f32 %v1651, %v1978
      %v2064 = vadd.f32 %v1656, %v1983
      %v2065 = vadd.f32 %v1659, %v1986
      %v2066 = vadd.f32 %v1664, %v1991
      %v2067 = vadd.f32 %v1667, %v1994
      %v2068 = vadd.f32 %v1672, %v1999
      %v2069 = vadd.f32 %v1675, %v2002
      %v2070 = vadd.f32 %v1680, %v2007
      %v2071 = vadd.f32 %v1683, %v2010
      %v2072 = vadd.f32 %v1688, %v2015
      %v2073 = vadd.f32 %v1691, %v2018
      %v2074 = vadd.f32 %v1696, %v2023
      %v2075 = vadd.f32 %v1699, %v2026
      %v2076 = vadd.f32 %v1704, %v2031
      %v2077 = vld [vmem:[#allocation2 + $0x17] sm:$0xff]
      %v2078 = vld [vmem:[#allocation2 + $0x1f] sm:$0xff]
      %v2079 = vld [vmem:[#allocation2 + $0x27] sm:$0xff]
      %v2080 = vld [vmem:[#allocation2 + $0x2f] sm:$0xff]
      %v2081 = vld [vmem:[#allocation2 + $0x37] sm:$0xff]
      %v2082 = vld [vmem:[#allocation2 + $0x3f] sm:$0xff]
      %v2083 = vld [vmem:[#allocation2 + $0x47] sm:$0xff]
      %v2084 = vld [vmem:[#allocation2 + $0x4f] sm:$0xff]
      %v2085 = vld [vmem:[#allocation2 + $0x57] sm:$0xff]
      %v2086 = vld [vmem:[#allocation2 + $0x5f] sm:$0xff]
      %v2087 = vld [vmem:[#allocation2 + $0x67] sm:$0xff]
      %v2088 = vld [vmem:[#allocation2 + $0x6f] sm:$0xff]
      %v2089 = vld [vmem:[#allocation2 + $0x77] sm:$0xff]
      %v2090 = vld [vmem:[#allocation2 + $0x7f] sm:$0xff]
      %v2091 = vld [vmem:[#allocation2 + $0x87] sm:$0xff]
      %v2092 = vld [vmem:[#allocation2 + $0x8f] sm:$0xff]
      %v2093 = vld [vmem:[#allocation2 + $0x97] sm:$0xff]
      %v2094 = vld [vmem:[#allocation2 + $0x9f] sm:$0xff]
      %v2095 = vld [vmem:[#allocation2 + $0xa7] sm:$0xff]
      %v2096 = vld [vmem:[#allocation2 + $0xaf] sm:$0xff]
      %v2097 = vld [vmem:[#allocation2 + $0xb7] sm:$0xff]
      %v2098 = vld [vmem:[#allocation2 + $0xbf] sm:$0xff]
      %v2099 = vld [vmem:[#allocation2 + $0xc7] sm:$0xff]
      %v2100 = vld [vmem:[#allocation2 + $0xcf] sm:$0xff]
      %v2101 = vld [vmem:[#allocation2 + $0xd7] sm:$0xff]
      %v2102 = vld [vmem:[#allocation2 + $0xdf] sm:$0xff]
      %v2103 = vld [vmem:[#allocation2 + $0xe7] sm:$0xff]
      %v2104 = vld [vmem:[#allocation2 + $0xef] sm:$0xff]
      %v2105 = vld [vmem:[#allocation2 + $0xf7] sm:$0xff]
      %v2106 = vld [vmem:[#allocation2 + $0xff] sm:$0xff]
      %v2107 = vld [vmem:[#allocation2 + $0x107] sm:$0xff]
      %v2108 = vld [vmem:[#allocation2 + $0x10f] sm:$0xff]
      %v2109 = vld [vmem:[#allocation2 + $0x117] sm:$0xff]
      %v2110 = vld [vmem:[#allocation2 + $0x11f] sm:$0xff]
      %v2111 = vld [vmem:[#allocation2 + $0x127] sm:$0xff]
      %v2112 = vld [vmem:[#allocation2 + $0x12f] sm:$0xff]
      %v2113 = vld [vmem:[#allocation2 + $0x137] sm:$0xff]
      %v2114 = vld [vmem:[#allocation2 + $0x13f] sm:$0xff]
      %v2115 = vld [vmem:[#allocation2 + $0x147] sm:$0xff]
      %v2116 = vld [vmem:[#allocation2 + $0x14f] sm:$0xff]
      %v2117 = vld [vmem:[#allocation2 + $0x157] sm:$0xf]
      %v2118 = vpack.c.bf16 %v2078, %v2077
      %v2119 = vpack.c.bf16 %v2080, %v2079
      %v2120 = vpack.c.bf16 %v2082, %v2081
      %v2121 = vpack.c.bf16 %v2084, %v2083
      %v2122 = vpack.c.bf16 %v2086, %v2085
      %v2123 = vpack.c.bf16 %v2088, %v2087
      %v2124 = vpack.c.bf16 %v2090, %v2089
      %v2125 = vpack.c.bf16 %v2092, %v2091
      %v2126 = vpack.c.bf16 %v2094, %v2093
      %v2127 = vpack.c.bf16 %v2096, %v2095
      %v2128 = vpack.c.bf16 %v2098, %v2097
      %v2129 = vpack.c.bf16 %v2100, %v2099
      %v2130 = vpack.c.bf16 %v2102, %v2101
      %v2131 = vpack.c.bf16 %v2104, %v2103
      %v2132 = vpack.c.bf16 %v2106, %v2105
      %v2133 = vpack.c.bf16 %v2108, %v2107
      %v2134 = vpack.c.bf16 %v2110, %v2109
      %v2135 = vpack.c.bf16 %v2112, %v2111
      %v2136 = vpack.c.bf16 %v2114, %v2113
      %v2137 = vpack.c.bf16 %v2116, %v2115
      %v2138 = vpack.c.bf16 %v2117, %v2117
      %s2139 = scalar_lea.vmem %s4, 192
      %v2140 = vld [vmem:[%s2139] sm:$0xf]
      %v2141 = vld [vmem:[%s2139 + $0x4] sm:$0xf]
      %v2142 = vld [vmem:[%s2139 + $0x8] sm:$0xf]
      %v2143 = vld [vmem:[%s2139 + $0xc] sm:$0xf]
      %v2144 = vld [vmem:[%s2139 + $0x10] sm:$0xf]
      %v2145 = vld [vmem:[%s2139 + $0x14] sm:$0xf]
      %v2146 = vld [vmem:[%s2139 + $0x18] sm:$0xf]
      %v2147 = vld [vmem:[%s2139 + $0x1c] sm:$0xf]
      %v2148 = vld [vmem:[%s2139 + $0x20] sm:$0xf]
      %v2149 = vld [vmem:[%s2139 + $0x24] sm:$0xf]
      %v2150 = vld [vmem:[%s2139 + $0x28] sm:$0xf]
      %v2151 = vld [vmem:[%s2139 + $0x2c] sm:$0xf]
      %v2152 = vld [vmem:[%s2139 + $0x30] sm:$0xf]
      %v2153 = vld [vmem:[%s2139 + $0x34] sm:$0xf]
      %v2154 = vld [vmem:[%s2139 + $0x38] sm:$0xf]
      %v2155 = vld [vmem:[%s2139 + $0x3c] sm:$0xf]
      %v2172 = vunpack.c.l.b16 %v2140
      %v2173 = vunpack.c.l.b16 %v2141
      %v2174 = vunpack.c.l.b16 %v2142
      %v2175 = vunpack.c.l.b16 %v2143
      %v2176 = vunpack.c.l.b16 %v2144
      %v2177 = vunpack.c.l.b16 %v2145
      %v2178 = vunpack.c.l.b16 %v2146
      %v2179 = vunpack.c.l.b16 %v2147
      %v2180 = vunpack.c.l.b16 %v2148
      %v2181 = vunpack.c.l.b16 %v2149
      %v2182 = vunpack.c.l.b16 %v2150
      %v2183 = vunpack.c.l.b16 %v2151
      %v2184 = vunpack.c.l.b16 %v2152
      %v2185 = vunpack.c.l.b16 %v2153
      %v2186 = vunpack.c.l.b16 %v2154
      %v2187 = vunpack.c.l.b16 %v2155
      %v2188 = vpack.c.b16 %v2173, %v2172
      %v2189 = vpack.c.b16 %v2175, %v2174
      %v2190 = vpack.c.b16 %v2177, %v2176
      %v2191 = vpack.c.b16 %v2179, %v2178
      %v2192 = vpack.c.b16 %v2181, %v2180
      %v2193 = vpack.c.b16 %v2183, %v2182
      %v2194 = vpack.c.b16 %v2185, %v2184
      %v2195 = vpack.c.b16 %v2187, %v2186
      %2204 = vmatprep.subr.bf16.mxu0 0
      %2205 = vmatpush1.bf16.msra.mxu0 %v2188
      %2206 = vmatprep.subr.bf16.mxu0 0
      %2207 = vmatpush1.bf16.msra.mxu0 %v2189
      %2208 = vmatprep.subr.bf16.mxu0 0
      %2209 = vmatpush1.bf16.msra.mxu0 %v2190
      %2210 = vmatprep.subr.bf16.mxu0 0
      %2211 = vmatpush1.bf16.msra.mxu0 %v2191
      %2212 = vmatprep.subr.bf16.mxu0 0
      %2213 = vmatpush1.bf16.msra.mxu0 %v2192
      %2214 = vmatprep.subr.bf16.mxu0 0
      %2215 = vmatpush1.bf16.msra.mxu0 %v2193
      %2216 = vmatprep.subr.bf16.mxu0 0
      %2217 = vmatpush1.bf16.msra.mxu0 %v2194
      %2218 = vmatprep.subr.bf16.mxu0 0
      %2219 = vmatpush1.bf16.msra.mxu0 %v2195
      %2220 = vmatprep.subr.bf16.mxu0 0
      %2221 = vmatpush1.bf16.msra.mxu0 0
      %2222 = vmatprep.subr.bf16.mxu0 0
      %2223 = vmatpush1.bf16.msra.mxu0 0
      %2224 = vmatprep.subr.bf16.mxu0 0
      %2225 = vmatpush1.bf16.msra.mxu0 0
      %2226 = vmatprep.subr.bf16.mxu0 0
      %2227 = vmatpush1.bf16.msra.mxu0 0
      %2228 = vmatprep.subr.bf16.mxu0 0
      %2229 = vmatpush1.bf16.msra.mxu0 0
      %2230 = vmatprep.subr.bf16.mxu0 0
      %2231 = vmatpush1.bf16.msra.mxu0 0
      %2232 = vmatprep.subr.bf16.mxu0 0
      %2233 = vmatpush1.bf16.msra.mxu0 0
      %2234 = vmatprep.subr.bf16.mxu0 0
      %2235 = vmatpush1.bf16.msra.mxu0 0
      %2236 = vmatprep.mubr.bf16.mxu0 0
      %2237 = vmatmul.mubr.bf16.gmra.mrb[0].mxu0 %v2118
      %v2238 = vpop.f32.mrb[0].mxu0
      %v2239 = vadd.f32 0.0, %v2238
      %v2240 = vpop.f32.mrb[0].mxu0
      %v2241 = vpop.f32.mrb[0].mxu0
      %v2242 = vadd.f32 0.0, %v2241
      %v2243 = vpop.f32.mrb[0].mxu0
      %2244 = vmatprep.mubr.bf16.mxu0 0
      %2245 = vmatmul.mubr.bf16.gmra.mrb[0].mxu0 %v2119
      %v2246 = vpop.f32.mrb[0].mxu0
      %v2247 = vadd.f32 0.0, %v2246
      %v2248 = vpop.f32.mrb[0].mxu0
      %v2249 = vpop.f32.mrb[0].mxu0
      %v2250 = vadd.f32 0.0, %v2249
      %v2251 = vpop.f32.mrb[0].mxu0
      %2252 = vmatprep.mubr.bf16.mxu0 0
      %2253 = vmatmul.mubr.bf16.gmra.mrb[0].mxu0 %v2120
      %v2254 = vpop.f32.mrb[0].mxu0
      %v2255 = vadd.f32 0.0, %v2254
      %v2256 = vpop.f32.mrb[0].mxu0
      %v2257 = vpop.f32.mrb[0].mxu0
      %v2258 = vadd.f32 0.0, %v2257
      %v2259 = vpop.f32.mrb[0].mxu0
      %2260 = vmatprep.mubr.bf16.mxu0 0
      %2261 = vmatmul.mubr.bf16.gmra.mrb[0].mxu0 %v2121
      %v2262 = vpop.f32.mrb[0].mxu0
      %v2263 = vadd.f32 0.0, %v2262
      %v2264 = vpop.f32.mrb[0].mxu0
      %v2265 = vpop.f32.mrb[0].mxu0
      %v2266 = vadd.f32 0.0, %v2265
      %v2267 = vpop.f32.mrb[0].mxu0
      %2268 = vmatprep.mubr.bf16.mxu0 0
      %2269 = vmatmul.mubr.bf16.gmra.mrb[0].mxu0 %v2122
      %v2270 = vpop.f32.mrb[0].mxu0
      %v2271 = vadd.f32 0.0, %v2270
      %v2272 = vpop.f32.mrb[0].mxu0
      %v2273 = vpop.f32.mrb[0].mxu0
      %v2274 = vadd.f32 0.0, %v2273
      %v2275 = vpop.f32.mrb[0].mxu0
      %2276 = vmatprep.mubr.bf16.mxu0 0
      %2277 = vmatmul.mubr.bf16.gmra.mrb[0].mxu0 %v2123
      %v2278 = vpop.f32.mrb[0].mxu0
      %v2279 = vadd.f32 0.0, %v2278
      %v2280 = vpop.f32.mrb[0].mxu0
      %v2281 = vpop.f32.mrb[0].mxu0
      %v2282 = vadd.f32 0.0, %v2281
      %v2283 = vpop.f32.mrb[0].mxu0
      %2284 = vmatprep.mubr.bf16.mxu0 0
      %2285 = vmatmul.mubr.bf16.gmra.mrb[0].mxu0 %v2124
      %v2286 = vpop.f32.mrb[0].mxu0
      %v2287 = vadd.f32 0.0, %v2286
      %v2288 = vpop.f32.mrb[0].mxu0
      %v2289 = vpop.f32.mrb[0].mxu0
      %v2290 = vadd.f32 0.0, %v2289
      %v2291 = vpop.f32.mrb[0].mxu0
      %2292 = vmatprep.mubr.bf16.mxu0 0
      %2293 = vmatmul.mubr.bf16.gmra.mrb[0].mxu0 %v2125
      %v2294 = vpop.f32.mrb[0].mxu0
      %v2295 = vadd.f32 0.0, %v2294
      %v2296 = vpop.f32.mrb[0].mxu0
      %v2297 = vpop.f32.mrb[0].mxu0
      %v2298 = vadd.f32 0.0, %v2297
      %v2299 = vpop.f32.mrb[0].mxu0
      %2300 = vmatprep.mubr.bf16.mxu0 0
      %2301 = vmatmul.mubr.bf16.gmra.mrb[0].mxu0 %v2126
      %v2302 = vpop.f32.mrb[0].mxu0
      %v2303 = vadd.f32 0.0, %v2302
      %v2304 = vpop.f32.mrb[0].mxu0
      %v2305 = vpop.f32.mrb[0].mxu0
      %v2306 = vadd.f32 0.0, %v2305
      %v2307 = vpop.f32.mrb[0].mxu0
      %2308 = vmatprep.mubr.bf16.mxu0 0
      %2309 = vmatmul.mubr.bf16.gmra.mrb[0].mxu0 %v2127
      %v2310 = vpop.f32.mrb[0].mxu0
      %v2311 = vadd.f32 0.0, %v2310
      %v2312 = vpop.f32.mrb[0].mxu0
      %v2313 = vpop.f32.mrb[0].mxu0
      %v2314 = vadd.f32 0.0, %v2313
      %v2315 = vpop.f32.mrb[0].mxu0
      %2316 = vmatprep.mubr.bf16.mxu0 0
      %2317 = vmatmul.mubr.bf16.gmra.mrb[0].mxu0 %v2128
      %v2318 = vpop.f32.mrb[0].mxu0
      %v2319 = vadd.f32 0.0, %v2318
      %v2320 = vpop.f32.mrb[0].mxu0
      %v2321 = vpop.f32.mrb[0].mxu0
      %v2322 = vadd.f32 0.0, %v2321
      %v2323 = vpop.f32.mrb[0].mxu0
      %2324 = vmatprep.mubr.bf16.mxu0 0
      %2325 = vmatmul.mubr.bf16.gmra.mrb[0].mxu0 %v2129
      %v2326 = vpop.f32.mrb[0].mxu0
      %v2327 = vadd.f32 0.0, %v2326
      %v2328 = vpop.f32.mrb[0].mxu0
      %v2329 = vpop.f32.mrb[0].mxu0
      %v2330 = vadd.f32 0.0, %v2329
      %v2331 = vpop.f32.mrb[0].mxu0
      %2332 = vmatprep.mubr.bf16.mxu0 0
      %2333 = vmatmul.mubr.bf16.gmra.mrb[0].mxu0 %v2130
      %v2334 = vpop.f32.mrb[0].mxu0
      %v2335 = vadd.f32 0.0, %v2334
      %v2336 = vpop.f32.mrb[0].mxu0
      %v2337 = vpop.f32.mrb[0].mxu0
      %v2338 = vadd.f32 0.0, %v2337
      %v2339 = vpop.f32.mrb[0].mxu0
      %2340 = vmatprep.mubr.bf16.mxu0 0
      %2341 = vmatmul.mubr.bf16.gmra.mrb[0].mxu0 %v2131
      %v2342 = vpop.f32.mrb[0].mxu0
      %v2343 = vadd.f32 0.0, %v2342
      %v2344 = vpop.f32.mrb[0].mxu0
      %v2345 = vpop.f32.mrb[0].mxu0
      %v2346 = vadd.f32 0.0, %v2345
      %v2347 = vpop.f32.mrb[0].mxu0
      %2348 = vmatprep.mubr.bf16.mxu0 0
      %2349 = vmatmul.mubr.bf16.gmra.mrb[0].mxu0 %v2132
      %v2350 = vpop.f32.mrb[0].mxu0
      %v2351 = vadd.f32 0.0, %v2350
      %v2352 = vpop.f32.mrb[0].mxu0
      %v2353 = vpop.f32.mrb[0].mxu0
      %v2354 = vadd.f32 0.0, %v2353
      %v2355 = vpop.f32.mrb[0].mxu0
      %2356 = vmatprep.mubr.bf16.mxu0 0
      %2357 = vmatmul.mubr.bf16.gmra.mrb[0].mxu0 %v2133
      %v2358 = vpop.f32.mrb[0].mxu0
      %v2359 = vadd.f32 0.0, %v2358
      %v2360 = vpop.f32.mrb[0].mxu0
      %v2361 = vpop.f32.mrb[0].mxu0
      %v2362 = vadd.f32 0.0, %v2361
      %v2363 = vpop.f32.mrb[0].mxu0
      %2364 = vmatprep.mubr.bf16.mxu0 0
      %2365 = vmatmul.mubr.bf16.gmra.mrb[0].mxu0 %v2134
      %v2366 = vpop.f32.mrb[0].mxu0
      %v2367 = vadd.f32 0.0, %v2366
      %v2368 = vpop.f32.mrb[0].mxu0
      %v2369 = vpop.f32.mrb[0].mxu0
      %v2370 = vadd.f32 0.0, %v2369
      %v2371 = vpop.f32.mrb[0].mxu0
      %2372 = vmatprep.mubr.bf16.mxu0 0
      %2373 = vmatmul.mubr.bf16.gmra.mrb[0].mxu0 %v2135
      %v2374 = vpop.f32.mrb[0].mxu0
      %v2375 = vadd.f32 0.0, %v2374
      %v2376 = vpop.f32.mrb[0].mxu0
      %v2377 = vpop.f32.mrb[0].mxu0
      %v2378 = vadd.f32 0.0, %v2377
      %v2379 = vpop.f32.mrb[0].mxu0
      %2380 = vmatprep.mubr.bf16.mxu0 0
      %2381 = vmatmul.mubr.bf16.gmra.mrb[0].mxu0 %v2136
      %v2382 = vpop.f32.mrb[0].mxu0
      %v2383 = vadd.f32 0.0, %v2382
      %v2384 = vpop.f32.mrb[0].mxu0
      %v2385 = vpop.f32.mrb[0].mxu0
      %v2386 = vadd.f32 0.0, %v2385
      %v2387 = vpop.f32.mrb[0].mxu0
      %2388 = vmatprep.mubr.bf16.mxu0 0
      %2389 = vmatmul.mubr.bf16.gmra.mrb[0].mxu0 %v2137
      %v2390 = vpop.f32.mrb[0].mxu0
      %v2391 = vadd.f32 0.0, %v2390
      %v2392 = vpop.f32.mrb[0].mxu0
      %v2393 = vpop.f32.mrb[0].mxu0
      %v2394 = vadd.f32 0.0, %v2393
      %v2395 = vpop.f32.mrb[0].mxu0
      %2396 = vmatprep.mubr.bf16.mxu0 0
      %2397 = vmatmul.mubr.bf16.gmra.mrb[0].mxu0 %v2138
      %v2398 = vpop.f32.mrb[0].mxu0
      %v2399 = vadd.f32 0.0, %v2398
      %v2400 = vpop.f32.mrb[0].mxu0
      %v2401 = vpop.f32.mrb[0].mxu0
      %v2402 = vpop.f32.mrb[0].mxu0
      %2403 = vdwg.mxu0
      %v2404 = vadd.f32 %v2036, %v2239
      %v2405 = vadd.f32 %v2037, %v2242
      %v2406 = vadd.f32 %v2038, %v2247
      %v2407 = vadd.f32 %v2039, %v2250
      %v2408 = vadd.f32 %v2040, %v2255
      %v2409 = vadd.f32 %v2041, %v2258
      %v2410 = vadd.f32 %v2042, %v2263
      %v2411 = vadd.f32 %v2043, %v2266
      %v2412 = vadd.f32 %v2044, %v2271
      %v2413 = vadd.f32 %v2045, %v2274
      %v2414 = vadd.f32 %v2046, %v2279
      %v2415 = vadd.f32 %v2047, %v2282
      %v2416 = vadd.f32 %v2048, %v2287
      %v2417 = vadd.f32 %v2049, %v2290
      %v2418 = vadd.f32 %v2050, %v2295
      %v2419 = vadd.f32 %v2051, %v2298
      %v2420 = vadd.f32 %v2052, %v2303
      %v2421 = vadd.f32 %v2053, %v2306
      %v2422 = vadd.f32 %v2054, %v2311
      %v2423 = vadd.f32 %v2055, %v2314
      %v2424 = vadd.f32 %v2056, %v2319
      %v2425 = vadd.f32 %v2057, %v2322
      %v2426 = vadd.f32 %v2058, %v2327
      %v2427 = vadd.f32 %v2059, %v2330
      %v2428 = vadd.f32 %v2060, %v2335
      %v2429 = vadd.f32 %v2061, %v2338
      %v2430 = vadd.f32 %v2062, %v2343
      %v2431 = vadd.f32 %v2063, %v2346
      %v2432 = vadd.f32 %v2064, %v2351
      %v2433 = vadd.f32 %v2065, %v2354
      %v2434 = vadd.f32 %v2066, %v2359
      %v2435 = vadd.f32 %v2067, %v2362
      %v2436 = vadd.f32 %v2068, %v2367
      %v2437 = vadd.f32 %v2069, %v2370
      %v2438 = vadd.f32 %v2070, %v2375
      %v2439 = vadd.f32 %v2071, %v2378
      %v2440 = vadd.f32 %v2072, %v2383
      %v2441 = vadd.f32 %v2073, %v2386
      %v2442 = vadd.f32 %v2074, %v2391
      %v2443 = vadd.f32 %v2075, %v2394
      %v2444 = vadd.f32 %v2076, %v2399
      %v2445 = vld [vmem:[#allocation2 + $0x18] sm:$0xff]
      %v2446 = vld [vmem:[#allocation2 + $0x20] sm:$0xff]
      %v2447 = vld [vmem:[#allocation2 + $0x28] sm:$0xff]
      %v2448 = vld [vmem:[#allocation2 + $0x30] sm:$0xff]
      %v2449 = vld [vmem:[#allocation2 + $0x38] sm:$0xff]
      %v2450 = vld [vmem:[#allocation2 + $0x40] sm:$0xff]
      %v2451 = vld [vmem:[#allocation2 + $0x48] sm:$0xff]
      %v2452 = vld [vmem:[#allocation2 + $0x50] sm:$0xff]
      %v2453 = vld [vmem:[#allocation2 + $0x58] sm:$0xff]
      %v2454 = vld [vmem:[#allocation2 + $0x60] sm:$0xff]
      %v2455 = vld [vmem:[#allocation2 + $0x68] sm:$0xff]
      %v2456 = vld [vmem:[#allocation2 + $0x70] sm:$0xff]
      %v2457 = vld [vmem:[#allocation2 + $0x78] sm:$0xff]
      %v2458 = vld [vmem:[#allocation2 + $0x80] sm:$0xff]
      %v2459 = vld [vmem:[#allocation2 + $0x88] sm:$0xff]
      %v2460 = vld [vmem:[#allocation2 + $0x90] sm:$0xff]
      %v2461 = vld [vmem:[#allocation2 + $0x98] sm:$0xff]
      %v2462 = vld [vmem:[#allocation2 + $0xa0] sm:$0xff]
      %v2463 = vld [vmem:[#allocation2 + $0xa8] sm:$0xff]
      %v2464 = vld [vmem:[#allocation2 + $0xb0] sm:$0xff]
      %v2465 = vld [vmem:[#allocation2 + $0xb8] sm:$0xff]
      %v2466 = vld [vmem:[#allocation2 + $0xc0] sm:$0xff]
      %v2467 = vld [vmem:[#allocation2 + $0xc8] sm:$0xff]
      %v2468 = vld [vmem:[#allocation2 + $0xd0] sm:$0xff]
      %v2469 = vld [vmem:[#allocation2 + $0xd8] sm:$0xff]
      %v2470 = vld [vmem:[#allocation2 + $0xe0] sm:$0xff]
      %v2471 = vld [vmem:[#allocation2 + $0xe8] sm:$0xff]
      %v2472 = vld [vmem:[#allocation2 + $0xf0] sm:$0xff]
      %v2473 = vld [vmem:[#allocation2 + $0xf8] sm:$0xff]
      %v2474 = vld [vmem:[#allocation2 + $0x100] sm:$0xff]
      %v2475 = vld [vmem:[#allocation2 + $0x108] sm:$0xff]
      %v2476 = vld [vmem:[#allocation2 + $0x110] sm:$0xff]
      %v2477 = vld [vmem:[#allocation2 + $0x118] sm:$0xff]
      %v2478 = vld [vmem:[#allocation2 + $0x120] sm:$0xff]
      %v2479 = vld [vmem:[#allocation2 + $0x128] sm:$0xff]
      %v2480 = vld [vmem:[#allocation2 + $0x130] sm:$0xff]
      %v2481 = vld [vmem:[#allocation2 + $0x138] sm:$0xff]
      %v2482 = vld [vmem:[#allocation2 + $0x140] sm:$0xff]
      %v2483 = vld [vmem:[#allocation2 + $0x148] sm:$0xff]
      %v2484 = vld [vmem:[#allocation2 + $0x150] sm:$0xff]
      %v2485 = vld [vmem:[#allocation2 + $0x158] sm:$0xf]
      %v2486 = vpack.c.bf16 %v2446, %v2445
      %v2487 = vpack.c.bf16 %v2448, %v2447
      %v2488 = vpack.c.bf16 %v2450, %v2449
      %v2489 = vpack.c.bf16 %v2452, %v2451
      %v2490 = vpack.c.bf16 %v2454, %v2453
      %v2491 = vpack.c.bf16 %v2456, %v2455
      %v2492 = vpack.c.bf16 %v2458, %v2457
      %v2493 = vpack.c.bf16 %v2460, %v2459
      %v2494 = vpack.c.bf16 %v2462, %v2461
      %v2495 = vpack.c.bf16 %v2464, %v2463
      %v2496 = vpack.c.bf16 %v2466, %v2465
      %v2497 = vpack.c.bf16 %v2468, %v2467
      %v2498 = vpack.c.bf16 %v2470, %v2469
      %v2499 = vpack.c.bf16 %v2472, %v2471
      %v2500 = vpack.c.bf16 %v2474, %v2473
      %v2501 = vpack.c.bf16 %v2476, %v2475
      %v2502 = vpack.c.bf16 %v2478, %v2477
      %v2503 = vpack.c.bf16 %v2480, %v2479
      %v2504 = vpack.c.bf16 %v2482, %v2481
      %v2505 = vpack.c.bf16 %v2484, %v2483
      %v2506 = vpack.c.bf16 %v2485, %v2485
      %s2507 = scalar_lea.vmem %s4, 256
      %v2508 = vld [vmem:[%s2507] sm:$0xf]
      %v2509 = vld [vmem:[%s2507 + $0x4] sm:$0xf]
      %v2510 = vld [vmem:[%s2507 + $0x8] sm:$0xf]
      %v2511 = vld [vmem:[%s2507 + $0xc] sm:$0xf]
      %v2512 = vld [vmem:[%s2507 + $0x10] sm:$0xf]
      %v2513 = vld [vmem:[%s2507 + $0x14] sm:$0xf]
      %v2514 = vld [vmem:[%s2507 + $0x18] sm:$0xf]
      %v2515 = vld [vmem:[%s2507 + $0x1c] sm:$0xf]
      %v2516 = vld [vmem:[%s2507 + $0x20] sm:$0xf]
      %v2517 = vld [vmem:[%s2507 + $0x24] sm:$0xf]
      %v2518 = vld [vmem:[%s2507 + $0x28] sm:$0xf]
      %v2519 = vld [vmem:[%s2507 + $0x2c] sm:$0xf]
      %v2520 = vld [vmem:[%s2507 + $0x30] sm:$0xf]
      %v2521 = vld [vmem:[%s2507 + $0x34] sm:$0xf]
      %v2522 = vld [vmem:[%s2507 + $0x38] sm:$0xf]
      %v2523 = vld [vmem:[%s2507 + $0x3c] sm:$0xf]
      %v2540 = vunpack.c.l.b16 %v2508
      %v2541 = vunpack.c.l.b16 %v2509
      %v2542 = vunpack.c.l.b16 %v2510
      %v2543 = vunpack.c.l.b16 %v2511
      %v2544 = vunpack.c.l.b16 %v2512
      %v2545 = vunpack.c.l.b16 %v2513
      %v2546 = vunpack.c.l.b16 %v2514
      %v2547 = vunpack.c.l.b16 %v2515
      %v2548 = vunpack.c.l.b16 %v2516
      %v2549 = vunpack.c.l.b16 %v2517
      %v2550 = vunpack.c.l.b16 %v2518
      %v2551 = vunpack.c.l.b16 %v2519
      %v2552 = vunpack.c.l.b16 %v2520
      %v2553 = vunpack.c.l.b16 %v2521
      %v2554 = vunpack.c.l.b16 %v2522
      %v2555 = vunpack.c.l.b16 %v2523
      %v2556 = vpack.c.b16 %v2541, %v2540
      %v2557 = vpack.c.b16 %v2543, %v2542
      %v2558 = vpack.c.b16 %v2545, %v2544
      %v2559 = vpack.c.b16 %v2547, %v2546
      %v2560 = vpack.c.b16 %v2549, %v2548
      %v2561 = vpack.c.b16 %v2551, %v2550
      %v2562 = vpack.c.b16 %v2553, %v2552
      %v2563 = vpack.c.b16 %v2555, %v2554
      %2572 = vmatprep.subr.bf16.mxu0 0
      %2573 = vmatpush1.bf16.msra.mxu0 %v2556
      %2574 = vmatprep.subr.bf16.mxu0 0
      %2575 = vmatpush1.bf16.msra.mxu0 %v2557
      %2576 = vmatprep.subr.bf16.mxu0 0
      %2577 = vmatpush1.bf16.msra.mxu0 %v2558
      %2578 = vmatprep.subr.bf16.mxu0 0
      %2579 = vmatpush1.bf16.msra.mxu0 %v2559
      %2580 = vmatprep.subr.bf16.mxu0 0
      %2581 = vmatpush1.bf16.msra.mxu0 %v2560
      %2582 = vmatprep.subr.bf16.mxu0 0
      %2583 = vmatpush1.bf16.msra.mxu0 %v2561
      %2584 = vmatprep.subr.bf16.mxu0 0
      %2585 = vmatpush1.bf16.msra.mxu0 %v2562
      %2586 = vmatprep.subr.bf16.mxu0 0
      %2587 = vmatpush1.bf16.msra.mxu0 %v2563
      %2588 = vmatprep.subr.bf16.mxu0 0
      %2589 = vmatpush1.bf16.msra.mxu0 0
      %2590 = vmatprep.subr.bf16.mxu0 0
      %2591 = vmatpush1.bf16.msra.mxu0 0
      %2592 = vmatprep.subr.bf16.mxu0 0
      %2593 = vmatpush1.bf16.msra.mxu0 0
      %2594 = vmatprep.subr.bf16.mxu0 0
      %2595 = vmatpush1.bf16.msra.mxu0 0
      %2596 = vmatprep.subr.bf16.mxu0 0
      %2597 = vmatpush1.bf16.msra.mxu0 0
      %2598 = vmatprep.subr.bf16.mxu0 0
      %2599 = vmatpush1.bf16.msra.mxu0 0
      %2600 = vmatprep.subr.bf16.mxu0 0
      %2601 = vmatpush1.bf16.msra.mxu0 0
      %2602 = vmatprep.subr.bf16.mxu0 0
      %2603 = vmatpush1.bf16.msra.mxu0 0
      %2604 = vmatprep.mubr.bf16.mxu0 0
      %2605 = vmatmul.mubr.bf16.gmra.mrb[0].mxu0 %v2486
      %v2606 = vpop.f32.mrb[0].mxu0
      %v2607 = vadd.f32 0.0, %v2606
      %v2608 = vpop.f32.mrb[0].mxu0
      %v2609 = vpop.f32.mrb[0].mxu0
      %v2610 = vadd.f32 0.0, %v2609
      %v2611 = vpop.f32.mrb[0].mxu0
      %2612 = vmatprep.mubr.bf16.mxu0 0
      %2613 = vmatmul.mubr.bf16.gmra.mrb[0].mxu0 %v2487
      %v2614 = vpop.f32.mrb[0].mxu0
      %v2615 = vadd.f32 0.0, %v2614
      %v2616 = vpop.f32.mrb[0].mxu0
      %v2617 = vpop.f32.mrb[0].mxu0
      %v2618 = vadd.f32 0.0, %v2617
      %v2619 = vpop.f32.mrb[0].mxu0
      %2620 = vmatprep.mubr.bf16.mxu0 0
      %2621 = vmatmul.mubr.bf16.gmra.mrb[0].mxu0 %v2488
      %v2622 = vpop.f32.mrb[0].mxu0
      %v2623 = vadd.f32 0.0, %v2622
      %v2624 = vpop.f32.mrb[0].mxu0
      %v2625 = vpop.f32.mrb[0].mxu0
      %v2626 = vadd.f32 0.0, %v2625
      %v2627 = vpop.f32.mrb[0].mxu0
      %2628 = vmatprep.mubr.bf16.mxu0 0
      %2629 = vmatmul.mubr.bf16.gmra.mrb[0].mxu0 %v2489
      %v2630 = vpop.f32.mrb[0].mxu0
      %v2631 = vadd.f32 0.0, %v2630
      %v2632 = vpop.f32.mrb[0].mxu0
      %v2633 = vpop.f32.mrb[0].mxu0
      %v2634 = vadd.f32 0.0, %v2633
      %v2635 = vpop.f32.mrb[0].mxu0
      %2636 = vmatprep.mubr.bf16.mxu0 0
      %2637 = vmatmul.mubr.bf16.gmra.mrb[0].mxu0 %v2490
      %v2638 = vpop.f32.mrb[0].mxu0
      %v2639 = vadd.f32 0.0, %v2638
      %v2640 = vpop.f32.mrb[0].mxu0
      %v2641 = vpop.f32.mrb[0].mxu0
      %v2642 = vadd.f32 0.0, %v2641
      %v2643 = vpop.f32.mrb[0].mxu0
      %2644 = vmatprep.mubr.bf16.mxu0 0
      %2645 = vmatmul.mubr.bf16.gmra.mrb[0].mxu0 %v2491
      %v2646 = vpop.f32.mrb[0].mxu0
      %v2647 = vadd.f32 0.0, %v2646
      %v2648 = vpop.f32.mrb[0].mxu0
      %v2649 = vpop.f32.mrb[0].mxu0
      %v2650 = vadd.f32 0.0, %v2649
      %v2651 = vpop.f32.mrb[0].mxu0
      %2652 = vmatprep.mubr.bf16.mxu0 0
      %2653 = vmatmul.mubr.bf16.gmra.mrb[0].mxu0 %v2492
      %v2654 = vpop.f32.mrb[0].mxu0
      %v2655 = vadd.f32 0.0, %v2654
      %v2656 = vpop.f32.mrb[0].mxu0
      %v2657 = vpop.f32.mrb[0].mxu0
      %v2658 = vadd.f32 0.0, %v2657
      %v2659 = vpop.f32.mrb[0].mxu0
      %2660 = vmatprep.mubr.bf16.mxu0 0
      %2661 = vmatmul.mubr.bf16.gmra.mrb[0].mxu0 %v2493
      %v2662 = vpop.f32.mrb[0].mxu0
      %v2663 = vadd.f32 0.0, %v2662
      %v2664 = vpop.f32.mrb[0].mxu0
      %v2665 = vpop.f32.mrb[0].mxu0
      %v2666 = vadd.f32 0.0, %v2665
      %v2667 = vpop.f32.mrb[0].mxu0
      %2668 = vmatprep.mubr.bf16.mxu0 0
      %2669 = vmatmul.mubr.bf16.gmra.mrb[0].mxu0 %v2494
      %v2670 = vpop.f32.mrb[0].mxu0
      %v2671 = vadd.f32 0.0, %v2670
      %v2672 = vpop.f32.mrb[0].mxu0
      %v2673 = vpop.f32.mrb[0].mxu0
      %v2674 = vadd.f32 0.0, %v2673
      %v2675 = vpop.f32.mrb[0].mxu0
      %2676 = vmatprep.mubr.bf16.mxu0 0
      %2677 = vmatmul.mubr.bf16.gmra.mrb[0].mxu0 %v2495
      %v2678 = vpop.f32.mrb[0].mxu0
      %v2679 = vadd.f32 0.0, %v2678
      %v2680 = vpop.f32.mrb[0].mxu0
      %v2681 = vpop.f32.mrb[0].mxu0
      %v2682 = vadd.f32 0.0, %v2681
      %v2683 = vpop.f32.mrb[0].mxu0
      %2684 = vmatprep.mubr.bf16.mxu0 0
      %2685 = vmatmul.mubr.bf16.gmra.mrb[0].mxu0 %v2496
      %v2686 = vpop.f32.mrb[0].mxu0
      %v2687 = vadd.f32 0.0, %v2686
      %v2688 = vpop.f32.mrb[0].mxu0
      %v2689 = vpop.f32.mrb[0].mxu0
      %v2690 = vadd.f32 0.0, %v2689
      %v2691 = vpop.f32.mrb[0].mxu0
      %2692 = vmatprep.mubr.bf16.mxu0 0
      %2693 = vmatmul.mubr.bf16.gmra.mrb[0].mxu0 %v2497
      %v2694 = vpop.f32.mrb[0].mxu0
      %v2695 = vadd.f32 0.0, %v2694
      %v2696 = vpop.f32.mrb[0].mxu0
      %v2697 = vpop.f32.mrb[0].mxu0
      %v2698 = vadd.f32 0.0, %v2697
      %v2699 = vpop.f32.mrb[0].mxu0
      %2700 = vmatprep.mubr.bf16.mxu0 0
      %2701 = vmatmul.mubr.bf16.gmra.mrb[0].mxu0 %v2498
      %v2702 = vpop.f32.mrb[0].mxu0
      %v2703 = vadd.f32 0.0, %v2702
      %v2704 = vpop.f32.mrb[0].mxu0
      %v2705 = vpop.f32.mrb[0].mxu0
      %v2706 = vadd.f32 0.0, %v2705
      %v2707 = vpop.f32.mrb[0].mxu0
      %2708 = vmatprep.mubr.bf16.mxu0 0
      %2709 = vmatmul.mubr.bf16.gmra.mrb[0].mxu0 %v2499
      %v2710 = vpop.f32.mrb[0].mxu0
      %v2711 = vadd.f32 0.0, %v2710
      %v2712 = vpop.f32.mrb[0].mxu0
      %v2713 = vpop.f32.mrb[0].mxu0
      %v2714 = vadd.f32 0.0, %v2713
      %v2715 = vpop.f32.mrb[0].mxu0
      %2716 = vmatprep.mubr.bf16.mxu0 0
      %2717 = vmatmul.mubr.bf16.gmra.mrb[0].mxu0 %v2500
      %v2718 = vpop.f32.mrb[0].mxu0
      %v2719 = vadd.f32 0.0, %v2718
      %v2720 = vpop.f32.mrb[0].mxu0
      %v2721 = vpop.f32.mrb[0].mxu0
      %v2722 = vadd.f32 0.0, %v2721
      %v2723 = vpop.f32.mrb[0].mxu0
      %2724 = vmatprep.mubr.bf16.mxu0 0
      %2725 = vmatmul.mubr.bf16.gmra.mrb[0].mxu0 %v2501
      %v2726 = vpop.f32.mrb[0].mxu0
      %v2727 = vadd.f32 0.0, %v2726
      %v2728 = vpop.f32.mrb[0].mxu0
      %v2729 = vpop.f32.mrb[0].mxu0
      %v2730 = vadd.f32 0.0, %v2729
      %v2731 = vpop.f32.mrb[0].mxu0
      %2732 = vmatprep.mubr.bf16.mxu0 0
      %2733 = vmatmul.mubr.bf16.gmra.mrb[0].mxu0 %v2502
      %v2734 = vpop.f32.mrb[0].mxu0
      %v2735 = vadd.f32 0.0, %v2734
      %v2736 = vpop.f32.mrb[0].mxu0
      %v2737 = vpop.f32.mrb[0].mxu0
      %v2738 = vadd.f32 0.0, %v2737
      %v2739 = vpop.f32.mrb[0].mxu0
      %2740 = vmatprep.mubr.bf16.mxu0 0
      %2741 = vmatmul.mubr.bf16.gmra.mrb[0].mxu0 %v2503
      %v2742 = vpop.f32.mrb[0].mxu0
      %v2743 = vadd.f32 0.0, %v2742
      %v2744 = vpop.f32.mrb[0].mxu0
      %v2745 = vpop.f32.mrb[0].mxu0
      %v2746 = vadd.f32 0.0, %v2745
      %v2747 = vpop.f32.mrb[0].mxu0
      %2748 = vmatprep.mubr.bf16.mxu0 0
      %2749 = vmatmul.mubr.bf16.gmra.mrb[0].mxu0 %v2504
      %v2750 = vpop.f32.mrb[0].mxu0
      %v2751 = vadd.f32 0.0, %v2750
      %v2752 = vpop.f32.mrb[0].mxu0
      %v2753 = vpop.f32.mrb[0].mxu0
      %v2754 = vadd.f32 0.0, %v2753
      %v2755 = vpop.f32.mrb[0].mxu0
      %2756 = vmatprep.mubr.bf16.mxu0 0
      %2757 = vmatmul.mubr.bf16.gmra.mrb[0].mxu0 %v2505
      %v2758 = vpop.f32.mrb[0].mxu0
      %v2759 = vadd.f32 0.0, %v2758
      %v2760 = vpop.f32.mrb[0].mxu0
      %v2761 = vpop.f32.mrb[0].mxu0
      %v2762 = vadd.f32 0.0, %v2761
      %v2763 = vpop.f32.mrb[0].mxu0
      %2764 = vmatprep.mubr.bf16.mxu0 0
      %2765 = vmatmul.mubr.bf16.gmra.mrb[0].mxu0 %v2506
      %v2766 = vpop.f32.mrb[0].mxu0
      %v2767 = vadd.f32 0.0, %v2766
      %v2768 = vpop.f32.mrb[0].mxu0
      %v2769 = vpop.f32.mrb[0].mxu0
      %v2770 = vpop.f32.mrb[0].mxu0
      %2771 = vdwg.mxu0
      %v2772 = vadd.f32 %v2404, %v2607
      %v2773 = vadd.f32 %v2405, %v2610
      %v2774 = vadd.f32 %v2406, %v2615
      %v2775 = vadd.f32 %v2407, %v2618
      %v2776 = vadd.f32 %v2408, %v2623
      %v2777 = vadd.f32 %v2409, %v2626
      %v2778 = vadd.f32 %v2410, %v2631
      %v2779 = vadd.f32 %v2411, %v2634
      %v2780 = vadd.f32 %v2412, %v2639
      %v2781 = vadd.f32 %v2413, %v2642
      %v2782 = vadd.f32 %v2414, %v2647
      %v2783 = vadd.f32 %v2415, %v2650
      %v2784 = vadd.f32 %v2416, %v2655
      %v2785 = vadd.f32 %v2417, %v2658
      %v2786 = vadd.f32 %v2418, %v2663
      %v2787 = vadd.f32 %v2419, %v2666
      %v2788 = vadd.f32 %v2420, %v2671
      %v2789 = vadd.f32 %v2421, %v2674
      %v2790 = vadd.f32 %v2422, %v2679
      %v2791 = vadd.f32 %v2423, %v2682
      %v2792 = vadd.f32 %v2424, %v2687
      %v2793 = vadd.f32 %v2425, %v2690
      %v2794 = vadd.f32 %v2426, %v2695
      %v2795 = vadd.f32 %v2427, %v2698
      %v2796 = vadd.f32 %v2428, %v2703
      %v2797 = vadd.f32 %v2429, %v2706
      %v2798 = vadd.f32 %v2430, %v2711
      %v2799 = vadd.f32 %v2431, %v2714
      %v2800 = vadd.f32 %v2432, %v2719
      %v2801 = vadd.f32 %v2433, %v2722
      %v2802 = vadd.f32 %v2434, %v2727
      %v2803 = vadd.f32 %v2435, %v2730
      %v2804 = vadd.f32 %v2436, %v2735
      %v2805 = vadd.f32 %v2437, %v2738
      %v2806 = vadd.f32 %v2438, %v2743
      %v2807 = vadd.f32 %v2439, %v2746
      %v2808 = vadd.f32 %v2440, %v2751
      %v2809 = vadd.f32 %v2441, %v2754
      %v2810 = vadd.f32 %v2442, %v2759
      %v2811 = vadd.f32 %v2443, %v2762
      %v2812 = vadd.f32 %v2444, %v2767
      %v2813 = vld [vmem:[#allocation2 + $0x19] sm:$0xff]
      %v2814 = vld [vmem:[#allocation2 + $0x21] sm:$0xff]
      %v2815 = vld [vmem:[#allocation2 + $0x29] sm:$0xff]
      %v2816 = vld [vmem:[#allocation2 + $0x31] sm:$0xff]
      %v2817 = vld [vmem:[#allocation2 + $0x39] sm:$0xff]
      %v2818 = vld [vmem:[#allocation2 + $0x41] sm:$0xff]
      %v2819 = vld [vmem:[#allocation2 + $0x49] sm:$0xff]
      %v2820 = vld [vmem:[#allocation2 + $0x51] sm:$0xff]
      %v2821 = vld [vmem:[#allocation2 + $0x59] sm:$0xff]
      %v2822 = vld [vmem:[#allocation2 + $0x61] sm:$0xff]
      %v2823 = vld [vmem:[#allocation2 + $0x69] sm:$0xff]
      %v2824 = vld [vmem:[#allocation2 + $0x71] sm:$0xff]
      %v2825 = vld [vmem:[#allocation2 + $0x79] sm:$0xff]
      %v2826 = vld [vmem:[#allocation2 + $0x81] sm:$0xff]
      %v2827 = vld [vmem:[#allocation2 + $0x89] sm:$0xff]
      %v2828 = vld [vmem:[#allocation2 + $0x91] sm:$0xff]
      %v2829 = vld [vmem:[#allocation2 + $0x99] sm:$0xff]
      %v2830 = vld [vmem:[#allocation2 + $0xa1] sm:$0xff]
      %v2831 = vld [vmem:[#allocation2 + $0xa9] sm:$0xff]
      %v2832 = vld [vmem:[#allocation2 + $0xb1] sm:$0xff]
      %v2833 = vld [vmem:[#allocation2 + $0xb9] sm:$0xff]
      %v2834 = vld [vmem:[#allocation2 + $0xc1] sm:$0xff]
      %v2835 = vld [vmem:[#allocation2 + $0xc9] sm:$0xff]
      %v2836 = vld [vmem:[#allocation2 + $0xd1] sm:$0xff]
      %v2837 = vld [vmem:[#allocation2 + $0xd9] sm:$0xff]
      %v2838 = vld [vmem:[#allocation2 + $0xe1] sm:$0xff]
      %v2839 = vld [vmem:[#allocation2 + $0xe9] sm:$0xff]
      %v2840 = vld [vmem:[#allocation2 + $0xf1] sm:$0xff]
      %v2841 = vld [vmem:[#allocation2 + $0xf9] sm:$0xff]
      %v2842 = vld [vmem:[#allocation2 + $0x101] sm:$0xff]
      %v2843 = vld [vmem:[#allocation2 + $0x109] sm:$0xff]
      %v2844 = vld [vmem:[#allocation2 + $0x111] sm:$0xff]
      %v2845 = vld [vmem:[#allocation2 + $0x119] sm:$0xff]
      %v2846 = vld [vmem:[#allocation2 + $0x121] sm:$0xff]
      %v2847 = vld [vmem:[#allocation2 + $0x129] sm:$0xff]
      %v2848 = vld [vmem:[#allocation2 + $0x131] sm:$0xff]
      %v2849 = vld [vmem:[#allocation2 + $0x139] sm:$0xff]
      %v2850 = vld [vmem:[#allocation2 + $0x141] sm:$0xff]
      %v2851 = vld [vmem:[#allocation2 + $0x149] sm:$0xff]
      %v2852 = vld [vmem:[#allocation2 + $0x151] sm:$0xff]
      %v2853 = vld [vmem:[#allocation2 + $0x159] sm:$0xf]
      %v2854 = vpack.c.bf16 %v2814, %v2813
      %v2855 = vpack.c.bf16 %v2816, %v2815
      %v2856 = vpack.c.bf16 %v2818, %v2817
      %v2857 = vpack.c.bf16 %v2820, %v2819
      %v2858 = vpack.c.bf16 %v2822, %v2821
      %v2859 = vpack.c.bf16 %v2824, %v2823
      %v2860 = vpack.c.bf16 %v2826, %v2825
      %v2861 = vpack.c.bf16 %v2828, %v2827
      %v2862 = vpack.c.bf16 %v2830, %v2829
      %v2863 = vpack.c.bf16 %v2832, %v2831
      %v2864 = vpack.c.bf16 %v2834, %v2833
      %v2865 = vpack.c.bf16 %v2836, %v2835
      %v2866 = vpack.c.bf16 %v2838, %v2837
      %v2867 = vpack.c.bf16 %v2840, %v2839
      %v2868 = vpack.c.bf16 %v2842, %v2841
      %v2869 = vpack.c.bf16 %v2844, %v2843
      %v2870 = vpack.c.bf16 %v2846, %v2845
      %v2871 = vpack.c.bf16 %v2848, %v2847
      %v2872 = vpack.c.bf16 %v2850, %v2849
      %v2873 = vpack.c.bf16 %v2852, %v2851
      %v2874 = vpack.c.bf16 %v2853, %v2853
      %s2875 = scalar_lea.vmem %s4, 320
      %v2876 = vld [vmem:[%s2875] sm:$0xf]
      %v2877 = vld [vmem:[%s2875 + $0x4] sm:$0xf]
      %v2878 = vld [vmem:[%s2875 + $0x8] sm:$0xf]
      %v2879 = vld [vmem:[%s2875 + $0xc] sm:$0xf]
      %v2880 = vld [vmem:[%s2875 + $0x10] sm:$0xf]
      %v2881 = vld [vmem:[%s2875 + $0x14] sm:$0xf]
      %v2882 = vld [vmem:[%s2875 + $0x18] sm:$0xf]
      %v2883 = vld [vmem:[%s2875 + $0x1c] sm:$0xf]
      %v2884 = vld [vmem:[%s2875 + $0x20] sm:$0xf]
      %v2885 = vld [vmem:[%s2875 + $0x24] sm:$0xf]
      %v2886 = vld [vmem:[%s2875 + $0x28] sm:$0xf]
      %v2887 = vld [vmem:[%s2875 + $0x2c] sm:$0xf]
      %v2888 = vld [vmem:[%s2875 + $0x30] sm:$0xf]
      %v2889 = vld [vmem:[%s2875 + $0x34] sm:$0xf]
      %v2890 = vld [vmem:[%s2875 + $0x38] sm:$0xf]
      %v2891 = vld [vmem:[%s2875 + $0x3c] sm:$0xf]
      %v2908 = vunpack.c.l.b16 %v2876
      %v2909 = vunpack.c.l.b16 %v2877
      %v2910 = vunpack.c.l.b16 %v2878
      %v2911 = vunpack.c.l.b16 %v2879
      %v2912 = vunpack.c.l.b16 %v2880
      %v2913 = vunpack.c.l.b16 %v2881
      %v2914 = vunpack.c.l.b16 %v2882
      %v2915 = vunpack.c.l.b16 %v2883
      %v2916 = vunpack.c.l.b16 %v2884
      %v2917 = vunpack.c.l.b16 %v2885
      %v2918 = vunpack.c.l.b16 %v2886
      %v2919 = vunpack.c.l.b16 %v2887
      %v2920 = vunpack.c.l.b16 %v2888
      %v2921 = vunpack.c.l.b16 %v2889
      %v2922 = vunpack.c.l.b16 %v2890
      %v2923 = vunpack.c.l.b16 %v2891
      %v2924 = vpack.c.b16 %v2909, %v2908
      %v2925 = vpack.c.b16 %v2911, %v2910
      %v2926 = vpack.c.b16 %v2913, %v2912
      %v2927 = vpack.c.b16 %v2915, %v2914
      %v2928 = vpack.c.b16 %v2917, %v2916
      %v2929 = vpack.c.b16 %v2919, %v2918
      %v2930 = vpack.c.b16 %v2921, %v2920
      %v2931 = vpack.c.b16 %v2923, %v2922
      %2940 = vmatprep.subr.bf16.mxu0 0
      %2941 = vmatpush1.bf16.msra.mxu0 %v2924
      %2942 = vmatprep.subr.bf16.mxu0 0
      %2943 = vmatpush1.bf16.msra.mxu0 %v2925
      %2944 = vmatprep.subr.bf16.mxu0 0
      %2945 = vmatpush1.bf16.msra.mxu0 %v2926
      %2946 = vmatprep.subr.bf16.mxu0 0
      %2947 = vmatpush1.bf16.msra.mxu0 %v2927
      %2948 = vmatprep.subr.bf16.mxu0 0
      %2949 = vmatpush1.bf16.msra.mxu0 %v2928
      %2950 = vmatprep.subr.bf16.mxu0 0
      %2951 = vmatpush1.bf16.msra.mxu0 %v2929
      %2952 = vmatprep.subr.bf16.mxu0 0
      %2953 = vmatpush1.bf16.msra.mxu0 %v2930
      %2954 = vmatprep.subr.bf16.mxu0 0
      %2955 = vmatpush1.bf16.msra.mxu0 %v2931
      %2956 = vmatprep.subr.bf16.mxu0 0
      %2957 = vmatpush1.bf16.msra.mxu0 0
      %2958 = vmatprep.subr.bf16.mxu0 0
      %2959 = vmatpush1.bf16.msra.mxu0 0
      %2960 = vmatprep.subr.bf16.mxu0 0
      %2961 = vmatpush1.bf16.msra.mxu0 0
      %2962 = vmatprep.subr.bf16.mxu0 0
      %2963 = vmatpush1.bf16.msra.mxu0 0
      %2964 = vmatprep.subr.bf16.mxu0 0
      %2965 = vmatpush1.bf16.msra.mxu0 0
      %2966 = vmatprep.subr.bf16.mxu0 0
      %2967 = vmatpush1.bf16.msra.mxu0 0
      %2968 = vmatprep.subr.bf16.mxu0 0
      %2969 = vmatpush1.bf16.msra.mxu0 0
      %2970 = vmatprep.subr.bf16.mxu0 0
      %2971 = vmatpush1.bf16.msra.mxu0 0
      %2972 = vmatprep.mubr.bf16.mxu0 0
      %2973 = vmatmul.mubr.bf16.gmra.mrb[0].mxu0 %v2854
      %v2974 = vpop.f32.mrb[0].mxu0
      %v2975 = vadd.f32 0.0, %v2974
      %v2976 = vpop.f32.mrb[0].mxu0
      %v2977 = vpop.f32.mrb[0].mxu0
      %v2978 = vadd.f32 0.0, %v2977
      %v2979 = vpop.f32.mrb[0].mxu0
      %2980 = vmatprep.mubr.bf16.mxu0 0
      %2981 = vmatmul.mubr.bf16.gmra.mrb[0].mxu0 %v2855
      %v2982 = vpop.f32.mrb[0].mxu0
      %v2983 = vadd.f32 0.0, %v2982
      %v2984 = vpop.f32.mrb[0].mxu0
      %v2985 = vpop.f32.mrb[0].mxu0
      %v2986 = vadd.f32 0.0, %v2985
      %v2987 = vpop.f32.mrb[0].mxu0
      %2988 = vmatprep.mubr.bf16.mxu0 0
      %2989 = vmatmul.mubr.bf16.gmra.mrb[0].mxu0 %v2856
      %v2990 = vpop.f32.mrb[0].mxu0
      %v2991 = vadd.f32 0.0, %v2990
      %v2992 = vpop.f32.mrb[0].mxu0
      %v2993 = vpop.f32.mrb[0].mxu0
      %v2994 = vadd.f32 0.0, %v2993
      %v2995 = vpop.f32.mrb[0].mxu0
      %2996 = vmatprep.mubr.bf16.mxu0 0
      %2997 = vmatmul.mubr.bf16.gmra.mrb[0].mxu0 %v2857
      %v2998 = vpop.f32.mrb[0].mxu0
      %v2999 = vadd.f32 0.0, %v2998
      %v3000 = vpop.f32.mrb[0].mxu0
      %v3001 = vpop.f32.mrb[0].mxu0
      %v3002 = vadd.f32 0.0, %v3001
      %v3003 = vpop.f32.mrb[0].mxu0
      %3004 = vmatprep.mubr.bf16.mxu0 0
      %3005 = vmatmul.mubr.bf16.gmra.mrb[0].mxu0 %v2858
      %v3006 = vpop.f32.mrb[0].mxu0
      %v3007 = vadd.f32 0.0, %v3006
      %v3008 = vpop.f32.mrb[0].mxu0
      %v3009 = vpop.f32.mrb[0].mxu0
      %v3010 = vadd.f32 0.0, %v3009
      %v3011 = vpop.f32.mrb[0].mxu0
      %3012 = vmatprep.mubr.bf16.mxu0 0
      %3013 = vmatmul.mubr.bf16.gmra.mrb[0].mxu0 %v2859
      %v3014 = vpop.f32.mrb[0].mxu0
      %v3015 = vadd.f32 0.0, %v3014
      %v3016 = vpop.f32.mrb[0].mxu0
      %v3017 = vpop.f32.mrb[0].mxu0
      %v3018 = vadd.f32 0.0, %v3017
      %v3019 = vpop.f32.mrb[0].mxu0
      %3020 = vmatprep.mubr.bf16.mxu0 0
      %3021 = vmatmul.mubr.bf16.gmra.mrb[0].mxu0 %v2860
      %v3022 = vpop.f32.mrb[0].mxu0
      %v3023 = vadd.f32 0.0, %v3022
      %v3024 = vpop.f32.mrb[0].mxu0
      %v3025 = vpop.f32.mrb[0].mxu0
      %v3026 = vadd.f32 0.0, %v3025
      %v3027 = vpop.f32.mrb[0].mxu0
      %3028 = vmatprep.mubr.bf16.mxu0 0
      %3029 = vmatmul.mubr.bf16.gmra.mrb[0].mxu0 %v2861
      %v3030 = vpop.f32.mrb[0].mxu0
      %v3031 = vadd.f32 0.0, %v3030
      %v3032 = vpop.f32.mrb[0].mxu0
      %v3033 = vpop.f32.mrb[0].mxu0
      %v3034 = vadd.f32 0.0, %v3033
      %v3035 = vpop.f32.mrb[0].mxu0
      %3036 = vmatprep.mubr.bf16.mxu0 0
      %3037 = vmatmul.mubr.bf16.gmra.mrb[0].mxu0 %v2862
      %v3038 = vpop.f32.mrb[0].mxu0
      %v3039 = vadd.f32 0.0, %v3038
      %v3040 = vpop.f32.mrb[0].mxu0
      %v3041 = vpop.f32.mrb[0].mxu0
      %v3042 = vadd.f32 0.0, %v3041
      %v3043 = vpop.f32.mrb[0].mxu0
      %3044 = vmatprep.mubr.bf16.mxu0 0
      %3045 = vmatmul.mubr.bf16.gmra.mrb[0].mxu0 %v2863
      %v3046 = vpop.f32.mrb[0].mxu0
      %v3047 = vadd.f32 0.0, %v3046
      %v3048 = vpop.f32.mrb[0].mxu0
      %v3049 = vpop.f32.mrb[0].mxu0
      %v3050 = vadd.f32 0.0, %v3049
      %v3051 = vpop.f32.mrb[0].mxu0
      %3052 = vmatprep.mubr.bf16.mxu0 0
      %3053 = vmatmul.mubr.bf16.gmra.mrb[0].mxu0 %v2864
      %v3054 = vpop.f32.mrb[0].mxu0
      %v3055 = vadd.f32 0.0, %v3054
      %v3056 = vpop.f32.mrb[0].mxu0
      %v3057 = vpop.f32.mrb[0].mxu0
      %v3058 = vadd.f32 0.0, %v3057
      %v3059 = vpop.f32.mrb[0].mxu0
      %3060 = vmatprep.mubr.bf16.mxu0 0
      %3061 = vmatmul.mubr.bf16.gmra.mrb[0].mxu0 %v2865
      %v3062 = vpop.f32.mrb[0].mxu0
      %v3063 = vadd.f32 0.0, %v3062
      %v3064 = vpop.f32.mrb[0].mxu0
      %v3065 = vpop.f32.mrb[0].mxu0
      %v3066 = vadd.f32 0.0, %v3065
      %v3067 = vpop.f32.mrb[0].mxu0
      %3068 = vmatprep.mubr.bf16.mxu0 0
      %3069 = vmatmul.mubr.bf16.gmra.mrb[0].mxu0 %v2866
      %v3070 = vpop.f32.mrb[0].mxu0
      %v3071 = vadd.f32 0.0, %v3070
      %v3072 = vpop.f32.mrb[0].mxu0
      %v3073 = vpop.f32.mrb[0].mxu0
      %v3074 = vadd.f32 0.0, %v3073
      %v3075 = vpop.f32.mrb[0].mxu0
      %3076 = vmatprep.mubr.bf16.mxu0 0
      %3077 = vmatmul.mubr.bf16.gmra.mrb[0].mxu0 %v2867
      %v3078 = vpop.f32.mrb[0].mxu0
      %v3079 = vadd.f32 0.0, %v3078
      %v3080 = vpop.f32.mrb[0].mxu0
      %v3081 = vpop.f32.mrb[0].mxu0
      %v3082 = vadd.f32 0.0, %v3081
      %v3083 = vpop.f32.mrb[0].mxu0
      %3084 = vmatprep.mubr.bf16.mxu0 0
      %3085 = vmatmul.mubr.bf16.gmra.mrb[0].mxu0 %v2868
      %v3086 = vpop.f32.mrb[0].mxu0
      %v3087 = vadd.f32 0.0, %v3086
      %v3088 = vpop.f32.mrb[0].mxu0
      %v3089 = vpop.f32.mrb[0].mxu0
      %v3090 = vadd.f32 0.0, %v3089
      %v3091 = vpop.f32.mrb[0].mxu0
      %3092 = vmatprep.mubr.bf16.mxu0 0
      %3093 = vmatmul.mubr.bf16.gmra.mrb[0].mxu0 %v2869
      %v3094 = vpop.f32.mrb[0].mxu0
      %v3095 = vadd.f32 0.0, %v3094
      %v3096 = vpop.f32.mrb[0].mxu0
      %v3097 = vpop.f32.mrb[0].mxu0
      %v3098 = vadd.f32 0.0, %v3097
      %v3099 = vpop.f32.mrb[0].mxu0
      %3100 = vmatprep.mubr.bf16.mxu0 0
      %3101 = vmatmul.mubr.bf16.gmra.mrb[0].mxu0 %v2870
      %v3102 = vpop.f32.mrb[0].mxu0
      %v3103 = vadd.f32 0.0, %v3102
      %v3104 = vpop.f32.mrb[0].mxu0
      %v3105 = vpop.f32.mrb[0].mxu0
      %v3106 = vadd.f32 0.0, %v3105
      %v3107 = vpop.f32.mrb[0].mxu0
      %3108 = vmatprep.mubr.bf16.mxu0 0
      %3109 = vmatmul.mubr.bf16.gmra.mrb[0].mxu0 %v2871
      %v3110 = vpop.f32.mrb[0].mxu0
      %v3111 = vadd.f32 0.0, %v3110
      %v3112 = vpop.f32.mrb[0].mxu0
      %v3113 = vpop.f32.mrb[0].mxu0
      %v3114 = vadd.f32 0.0, %v3113
      %v3115 = vpop.f32.mrb[0].mxu0
      %3116 = vmatprep.mubr.bf16.mxu0 0
      %3117 = vmatmul.mubr.bf16.gmra.mrb[0].mxu0 %v2872
      %v3118 = vpop.f32.mrb[0].mxu0
      %v3119 = vadd.f32 0.0, %v3118
      %v3120 = vpop.f32.mrb[0].mxu0
      %v3121 = vpop.f32.mrb[0].mxu0
      %v3122 = vadd.f32 0.0, %v3121
      %v3123 = vpop.f32.mrb[0].mxu0
      %3124 = vmatprep.mubr.bf16.mxu0 0
      %3125 = vmatmul.mubr.bf16.gmra.mrb[0].mxu0 %v2873
      %v3126 = vpop.f32.mrb[0].mxu0
      %v3127 = vadd.f32 0.0, %v3126
      %v3128 = vpop.f32.mrb[0].mxu0
      %v3129 = vpop.f32.mrb[0].mxu0
      %v3130 = vadd.f32 0.0, %v3129
      %v3131 = vpop.f32.mrb[0].mxu0
      %3132 = vmatprep.mubr.bf16.mxu0 0
      %3133 = vmatmul.mubr.bf16.gmra.mrb[0].mxu0 %v2874
      %v3134 = vpop.f32.mrb[0].mxu0
      %v3135 = vadd.f32 0.0, %v3134
      %v3136 = vpop.f32.mrb[0].mxu0
      %v3137 = vpop.f32.mrb[0].mxu0
      %v3138 = vpop.f32.mrb[0].mxu0
      %3139 = vdwg.mxu0
      %v3140 = vadd.f32 %v2772, %v2975
      %v3141 = vadd.f32 %v2773, %v2978
      %v3142 = vadd.f32 %v2774, %v2983
      %v3143 = vadd.f32 %v2775, %v2986
      %v3144 = vadd.f32 %v2776, %v2991
      %v3145 = vadd.f32 %v2777, %v2994
      %v3146 = vadd.f32 %v2778, %v2999
      %v3147 = vadd.f32 %v2779, %v3002
      %v3148 = vadd.f32 %v2780, %v3007
      %v3149 = vadd.f32 %v2781, %v3010
      %v3150 = vadd.f32 %v2782, %v3015
      %v3151 = vadd.f32 %v2783, %v3018
      %v3152 = vadd.f32 %v2784, %v3023
      %v3153 = vadd.f32 %v2785, %v3026
      %v3154 = vadd.f32 %v2786, %v3031
      %v3155 = vadd.f32 %v2787, %v3034
      %v3156 = vadd.f32 %v2788, %v3039
      %v3157 = vadd.f32 %v2789, %v3042
      %v3158 = vadd.f32 %v2790, %v3047
      %v3159 = vadd.f32 %v2791, %v3050
      %v3160 = vadd.f32 %v2792, %v3055
      %v3161 = vadd.f32 %v2793, %v3058
      %v3162 = vadd.f32 %v2794, %v3063
      %v3163 = vadd.f32 %v2795, %v3066
      %v3164 = vadd.f32 %v2796, %v3071
      %v3165 = vadd.f32 %v2797, %v3074
      %v3166 = vadd.f32 %v2798, %v3079
      %v3167 = vadd.f32 %v2799, %v3082
      %v3168 = vadd.f32 %v2800, %v3087
      %v3169 = vadd.f32 %v2801, %v3090
      %v3170 = vadd.f32 %v2802, %v3095
      %v3171 = vadd.f32 %v2803, %v3098
      %v3172 = vadd.f32 %v2804, %v3103
      %v3173 = vadd.f32 %v2805, %v3106
      %v3174 = vadd.f32 %v2806, %v3111
      %v3175 = vadd.f32 %v2807, %v3114
      %v3176 = vadd.f32 %v2808, %v3119
      %v3177 = vadd.f32 %v2809, %v3122
      %v3178 = vadd.f32 %v2810, %v3127
      %v3179 = vadd.f32 %v2811, %v3130
      %v3180 = vadd.f32 %v2812, %v3135
      %v3181 = vld [vmem:[#allocation2 + $0x29] sm:$0xff]
      %v3182 = vld [vmem:[#allocation2 + $0x31] sm:$0xff]
      %v3183 = vld [vmem:[#allocation2 + $0x39] sm:$0xff]
      %v3184 = vld [vmem:[#allocation2 + $0x41] sm:$0xff]
      %v3185 = vld [vmem:[#allocation2 + $0x49] sm:$0xff]
      %v3186 = vld [vmem:[#allocation2 + $0x51] sm:$0xff]
      %v3187 = vld [vmem:[#allocation2 + $0x59] sm:$0xff]
      %v3188 = vld [vmem:[#allocation2 + $0x61] sm:$0xff]
      %v3189 = vld [vmem:[#allocation2 + $0x69] sm:$0xff]
      %v3190 = vld [vmem:[#allocation2 + $0x71] sm:$0xff]
      %v3191 = vld [vmem:[#allocation2 + $0x79] sm:$0xff]
      %v3192 = vld [vmem:[#allocation2 + $0x81] sm:$0xff]
      %v3193 = vld [vmem:[#allocation2 + $0x89] sm:$0xff]
      %v3194 = vld [vmem:[#allocation2 + $0x91] sm:$0xff]
      %v3195 = vld [vmem:[#allocation2 + $0x99] sm:$0xff]
      %v3196 = vld [vmem:[#allocation2 + $0xa1] sm:$0xff]
      %v3197 = vld [vmem:[#allocation2 + $0xa9] sm:$0xff]
      %v3198 = vld [vmem:[#allocation2 + $0xb1] sm:$0xff]
      %v3199 = vld [vmem:[#allocation2 + $0xb9] sm:$0xff]
      %v3200 = vld [vmem:[#allocation2 + $0xc1] sm:$0xff]
      %v3201 = vld [vmem:[#allocation2 + $0xc9] sm:$0xff]
      %v3202 = vld [vmem:[#allocation2 + $0xd1] sm:$0xff]
      %v3203 = vld [vmem:[#allocation2 + $0xd9] sm:$0xff]
      %v3204 = vld [vmem:[#allocation2 + $0xe1] sm:$0xff]
      %v3205 = vld [vmem:[#allocation2 + $0xe9] sm:$0xff]
      %v3206 = vld [vmem:[#allocation2 + $0xf1] sm:$0xff]
      %v3207 = vld [vmem:[#allocation2 + $0xf9] sm:$0xff]
      %v3208 = vld [vmem:[#allocation2 + $0x101] sm:$0xff]
      %v3209 = vld [vmem:[#allocation2 + $0x109] sm:$0xff]
      %v3210 = vld [vmem:[#allocation2 + $0x111] sm:$0xff]
      %v3211 = vld [vmem:[#allocation2 + $0x119] sm:$0xff]
      %v3212 = vld [vmem:[#allocation2 + $0x121] sm:$0xff]
      %v3213 = vld [vmem:[#allocation2 + $0x129] sm:$0xff]
      %v3214 = vld [vmem:[#allocation2 + $0x131] sm:$0xff]
      %v3215 = vld [vmem:[#allocation2 + $0x139] sm:$0xff]
      %v3216 = vld [vmem:[#allocation2 + $0x141] sm:$0xff]
      %v3217 = vld [vmem:[#allocation2 + $0x149] sm:$0xff]
      %v3218 = vld [vmem:[#allocation2 + $0x151] sm:$0xff]
      %v3219 = vld [vmem:[#allocation2 + $0x159] sm:$0xff]
      %v3220 = vld [vmem:[#allocation2 + $0x161] sm:$0xff]
      %v3221 = vld [vmem:[#allocation2 + $0x169] sm:$0xf]
      %v3222 = vpack.c.bf16 %v3182, %v3181
      %v3223 = vpack.c.bf16 %v3184, %v3183
      %v3224 = vpack.c.bf16 %v3186, %v3185
      %v3225 = vpack.c.bf16 %v3188, %v3187
      %v3226 = vpack.c.bf16 %v3190, %v3189
      %v3227 = vpack.c.bf16 %v3192, %v3191
      %v3228 = vpack.c.bf16 %v3194, %v3193
      %v3229 = vpack.c.bf16 %v3196, %v3195
      %v3230 = vpack.c.bf16 %v3198, %v3197
      %v3231 = vpack.c.bf16 %v3200, %v3199
      %v3232 = vpack.c.bf16 %v3202, %v3201
      %v3233 = vpack.c.bf16 %v3204, %v3203
      %v3234 = vpack.c.bf16 %v3206, %v3205
      %v3235 = vpack.c.bf16 %v3208, %v3207
      %v3236 = vpack.c.bf16 %v3210, %v3209
      %v3237 = vpack.c.bf16 %v3212, %v3211
      %v3238 = vpack.c.bf16 %v3214, %v3213
      %v3239 = vpack.c.bf16 %v3216, %v3215
      %v3240 = vpack.c.bf16 %v3218, %v3217
      %v3241 = vpack.c.bf16 %v3220, %v3219
      %v3242 = vpack.c.bf16 %v3221, %v3221
      %s3243 = scalar_lea.vmem %s4, 384
      %v3244 = vld [vmem:[%s3243] sm:$0xf]
      %v3245 = vld [vmem:[%s3243 + $0x4] sm:$0xf]
      %v3246 = vld [vmem:[%s3243 + $0x8] sm:$0xf]
      %v3247 = vld [vmem:[%s3243 + $0xc] sm:$0xf]
      %v3248 = vld [vmem:[%s3243 + $0x10] sm:$0xf]
      %v3249 = vld [vmem:[%s3243 + $0x14] sm:$0xf]
      %v3250 = vld [vmem:[%s3243 + $0x18] sm:$0xf]
      %v3251 = vld [vmem:[%s3243 + $0x1c] sm:$0xf]
      %v3252 = vld [vmem:[%s3243 + $0x20] sm:$0xf]
      %v3253 = vld [vmem:[%s3243 + $0x24] sm:$0xf]
      %v3254 = vld [vmem:[%s3243 + $0x28] sm:$0xf]
      %v3255 = vld [vmem:[%s3243 + $0x2c] sm:$0xf]
      %v3256 = vld [vmem:[%s3243 + $0x30] sm:$0xf]
      %v3257 = vld [vmem:[%s3243 + $0x34] sm:$0xf]
      %v3258 = vld [vmem:[%s3243 + $0x38] sm:$0xf]
      %v3259 = vld [vmem:[%s3243 + $0x3c] sm:$0xf]
      %v3276 = vunpack.c.l.b16 %v3244
      %v3277 = vunpack.c.l.b16 %v3245
      %v3278 = vunpack.c.l.b16 %v3246
      %v3279 = vunpack.c.l.b16 %v3247
      %v3280 = vunpack.c.l.b16 %v3248
      %v3281 = vunpack.c.l.b16 %v3249
      %v3282 = vunpack.c.l.b16 %v3250
      %v3283 = vunpack.c.l.b16 %v3251
      %v3284 = vunpack.c.l.b16 %v3252
      %v3285 = vunpack.c.l.b16 %v3253
      %v3286 = vunpack.c.l.b16 %v3254
      %v3287 = vunpack.c.l.b16 %v3255
      %v3288 = vunpack.c.l.b16 %v3256
      %v3289 = vunpack.c.l.b16 %v3257
      %v3290 = vunpack.c.l.b16 %v3258
      %v3291 = vunpack.c.l.b16 %v3259
      %v3292 = vpack.c.b16 %v3277, %v3276
      %v3293 = vpack.c.b16 %v3279, %v3278
      %v3294 = vpack.c.b16 %v3281, %v3280
      %v3295 = vpack.c.b16 %v3283, %v3282
      %v3296 = vpack.c.b16 %v3285, %v3284
      %v3297 = vpack.c.b16 %v3287, %v3286
      %v3298 = vpack.c.b16 %v3289, %v3288
      %v3299 = vpack.c.b16 %v3291, %v3290
      %3308 = vmatprep.subr.bf16.mxu0 0
      %3309 = vmatpush1.bf16.msra.mxu0 %v3292
      %3310 = vmatprep.subr.bf16.mxu0 0
      %3311 = vmatpush1.bf16.msra.mxu0 %v3293
      %3312 = vmatprep.subr.bf16.mxu0 0
      %3313 = vmatpush1.bf16.msra.mxu0 %v3294
      %3314 = vmatprep.subr.bf16.mxu0 0
      %3315 = vmatpush1.bf16.msra.mxu0 %v3295
      %3316 = vmatprep.subr.bf16.mxu0 0
      %3317 = vmatpush1.bf16.msra.mxu0 %v3296
      %3318 = vmatprep.subr.bf16.mxu0 0
      %3319 = vmatpush1.bf16.msra.mxu0 %v3297
      %3320 = vmatprep.subr.bf16.mxu0 0
      %3321 = vmatpush1.bf16.msra.mxu0 %v3298
      %3322 = vmatprep.subr.bf16.mxu0 0
      %3323 = vmatpush1.bf16.msra.mxu0 %v3299
      %3324 = vmatprep.subr.bf16.mxu0 0
      %3325 = vmatpush1.bf16.msra.mxu0 0
      %3326 = vmatprep.subr.bf16.mxu0 0
      %3327 = vmatpush1.bf16.msra.mxu0 0
      %3328 = vmatprep.subr.bf16.mxu0 0
      %3329 = vmatpush1.bf16.msra.mxu0 0
      %3330 = vmatprep.subr.bf16.mxu0 0
      %3331 = vmatpush1.bf16.msra.mxu0 0
      %3332 = vmatprep.subr.bf16.mxu0 0
      %3333 = vmatpush1.bf16.msra.mxu0 0
      %3334 = vmatprep.subr.bf16.mxu0 0
      %3335 = vmatpush1.bf16.msra.mxu0 0
      %3336 = vmatprep.subr.bf16.mxu0 0
      %3337 = vmatpush1.bf16.msra.mxu0 0
      %3338 = vmatprep.subr.bf16.mxu0 0
      %3339 = vmatpush1.bf16.msra.mxu0 0
      %3340 = vmatprep.mubr.bf16.mxu0 0
      %3341 = vmatmul.mubr.bf16.gmra.mrb[0].mxu0 %v3222
      %v3342 = vpop.f32.mrb[0].mxu0
      %v3343 = vadd.f32 0.0, %v3342
      %v3344 = vpop.f32.mrb[0].mxu0
      %v3345 = vpop.f32.mrb[0].mxu0
      %v3346 = vadd.f32 0.0, %v3345
      %v3347 = vpop.f32.mrb[0].mxu0
      %3348 = vmatprep.mubr.bf16.mxu0 0
      %3349 = vmatmul.mubr.bf16.gmra.mrb[0].mxu0 %v3223
      %v3350 = vpop.f32.mrb[0].mxu0
      %v3351 = vadd.f32 0.0, %v3350
      %v3352 = vpop.f32.mrb[0].mxu0
      %v3353 = vpop.f32.mrb[0].mxu0
      %v3354 = vadd.f32 0.0, %v3353
      %v3355 = vpop.f32.mrb[0].mxu0
      %3356 = vmatprep.mubr.bf16.mxu0 0
      %3357 = vmatmul.mubr.bf16.gmra.mrb[0].mxu0 %v3224
      %v3358 = vpop.f32.mrb[0].mxu0
      %v3359 = vadd.f32 0.0, %v3358
      %v3360 = vpop.f32.mrb[0].mxu0
      %v3361 = vpop.f32.mrb[0].mxu0
      %v3362 = vadd.f32 0.0, %v3361
      %v3363 = vpop.f32.mrb[0].mxu0
      %3364 = vmatprep.mubr.bf16.mxu0 0
      %3365 = vmatmul.mubr.bf16.gmra.mrb[0].mxu0 %v3225
      %v3366 = vpop.f32.mrb[0].mxu0
      %v3367 = vadd.f32 0.0, %v3366
      %v3368 = vpop.f32.mrb[0].mxu0
      %v3369 = vpop.f32.mrb[0].mxu0
      %v3370 = vadd.f32 0.0, %v3369
      %v3371 = vpop.f32.mrb[0].mxu0
      %3372 = vmatprep.mubr.bf16.mxu0 0
      %3373 = vmatmul.mubr.bf16.gmra.mrb[0].mxu0 %v3226
      %v3374 = vpop.f32.mrb[0].mxu0
      %v3375 = vadd.f32 0.0, %v3374
      %v3376 = vpop.f32.mrb[0].mxu0
      %v3377 = vpop.f32.mrb[0].mxu0
      %v3378 = vadd.f32 0.0, %v3377
      %v3379 = vpop.f32.mrb[0].mxu0
      %3380 = vmatprep.mubr.bf16.mxu0 0
      %3381 = vmatmul.mubr.bf16.gmra.mrb[0].mxu0 %v3227
      %v3382 = vpop.f32.mrb[0].mxu0
      %v3383 = vadd.f32 0.0, %v3382
      %v3384 = vpop.f32.mrb[0].mxu0
      %v3385 = vpop.f32.mrb[0].mxu0
      %v3386 = vadd.f32 0.0, %v3385
      %v3387 = vpop.f32.mrb[0].mxu0
      %3388 = vmatprep.mubr.bf16.mxu0 0
      %3389 = vmatmul.mubr.bf16.gmra.mrb[0].mxu0 %v3228
      %v3390 = vpop.f32.mrb[0].mxu0
      %v3391 = vadd.f32 0.0, %v3390
      %v3392 = vpop.f32.mrb[0].mxu0
      %v3393 = vpop.f32.mrb[0].mxu0
      %v3394 = vadd.f32 0.0, %v3393
      %v3395 = vpop.f32.mrb[0].mxu0
      %3396 = vmatprep.mubr.bf16.mxu0 0
      %3397 = vmatmul.mubr.bf16.gmra.mrb[0].mxu0 %v3229
      %v3398 = vpop.f32.mrb[0].mxu0
      %v3399 = vadd.f32 0.0, %v3398
      %v3400 = vpop.f32.mrb[0].mxu0
      %v3401 = vpop.f32.mrb[0].mxu0
      %v3402 = vadd.f32 0.0, %v3401
      %v3403 = vpop.f32.mrb[0].mxu0
      %3404 = vmatprep.mubr.bf16.mxu0 0
      %3405 = vmatmul.mubr.bf16.gmra.mrb[0].mxu0 %v3230
      %v3406 = vpop.f32.mrb[0].mxu0
      %v3407 = vadd.f32 0.0, %v3406
      %v3408 = vpop.f32.mrb[0].mxu0
      %v3409 = vpop.f32.mrb[0].mxu0
      %v3410 = vadd.f32 0.0, %v3409
      %v3411 = vpop.f32.mrb[0].mxu0
      %3412 = vmatprep.mubr.bf16.mxu0 0
      %3413 = vmatmul.mubr.bf16.gmra.mrb[0].mxu0 %v3231
      %v3414 = vpop.f32.mrb[0].mxu0
      %v3415 = vadd.f32 0.0, %v3414
      %v3416 = vpop.f32.mrb[0].mxu0
      %v3417 = vpop.f32.mrb[0].mxu0
      %v3418 = vadd.f32 0.0, %v3417
      %v3419 = vpop.f32.mrb[0].mxu0
      %3420 = vmatprep.mubr.bf16.mxu0 0
      %3421 = vmatmul.mubr.bf16.gmra.mrb[0].mxu0 %v3232
      %v3422 = vpop.f32.mrb[0].mxu0
      %v3423 = vadd.f32 0.0, %v3422
      %v3424 = vpop.f32.mrb[0].mxu0
      %v3425 = vpop.f32.mrb[0].mxu0
      %v3426 = vadd.f32 0.0, %v3425
      %v3427 = vpop.f32.mrb[0].mxu0
      %3428 = vmatprep.mubr.bf16.mxu0 0
      %3429 = vmatmul.mubr.bf16.gmra.mrb[0].mxu0 %v3233
      %v3430 = vpop.f32.mrb[0].mxu0
      %v3431 = vadd.f32 0.0, %v3430
      %v3432 = vpop.f32.mrb[0].mxu0
      %v3433 = vpop.f32.mrb[0].mxu0
      %v3434 = vadd.f32 0.0, %v3433
      %v3435 = vpop.f32.mrb[0].mxu0
      %3436 = vmatprep.mubr.bf16.mxu0 0
      %3437 = vmatmul.mubr.bf16.gmra.mrb[0].mxu0 %v3234
      %v3438 = vpop.f32.mrb[0].mxu0
      %v3439 = vadd.f32 0.0, %v3438
      %v3440 = vpop.f32.mrb[0].mxu0
      %v3441 = vpop.f32.mrb[0].mxu0
      %v3442 = vadd.f32 0.0, %v3441
      %v3443 = vpop.f32.mrb[0].mxu0
      %3444 = vmatprep.mubr.bf16.mxu0 0
      %3445 = vmatmul.mubr.bf16.gmra.mrb[0].mxu0 %v3235
      %v3446 = vpop.f32.mrb[0].mxu0
      %v3447 = vadd.f32 0.0, %v3446
      %v3448 = vpop.f32.mrb[0].mxu0
      %v3449 = vpop.f32.mrb[0].mxu0
      %v3450 = vadd.f32 0.0, %v3449
      %v3451 = vpop.f32.mrb[0].mxu0
      %3452 = vmatprep.mubr.bf16.mxu0 0
      %3453 = vmatmul.mubr.bf16.gmra.mrb[0].mxu0 %v3236
      %v3454 = vpop.f32.mrb[0].mxu0
      %v3455 = vadd.f32 0.0, %v3454
      %v3456 = vpop.f32.mrb[0].mxu0
      %v3457 = vpop.f32.mrb[0].mxu0
      %v3458 = vadd.f32 0.0, %v3457
      %v3459 = vpop.f32.mrb[0].mxu0
      %3460 = vmatprep.mubr.bf16.mxu0 0
      %3461 = vmatmul.mubr.bf16.gmra.mrb[0].mxu0 %v3237
      %v3462 = vpop.f32.mrb[0].mxu0
      %v3463 = vadd.f32 0.0, %v3462
      %v3464 = vpop.f32.mrb[0].mxu0
      %v3465 = vpop.f32.mrb[0].mxu0
      %v3466 = vadd.f32 0.0, %v3465
      %v3467 = vpop.f32.mrb[0].mxu0
      %3468 = vmatprep.mubr.bf16.mxu0 0
      %3469 = vmatmul.mubr.bf16.gmra.mrb[0].mxu0 %v3238
      %v3470 = vpop.f32.mrb[0].mxu0
      %v3471 = vadd.f32 0.0, %v3470
      %v3472 = vpop.f32.mrb[0].mxu0
      %v3473 = vpop.f32.mrb[0].mxu0
      %v3474 = vadd.f32 0.0, %v3473
      %v3475 = vpop.f32.mrb[0].mxu0
      %3476 = vmatprep.mubr.bf16.mxu0 0
      %3477 = vmatmul.mubr.bf16.gmra.mrb[0].mxu0 %v3239
      %v3478 = vpop.f32.mrb[0].mxu0
      %v3479 = vadd.f32 0.0, %v3478
      %v3480 = vpop.f32.mrb[0].mxu0
      %v3481 = vpop.f32.mrb[0].mxu0
      %v3482 = vadd.f32 0.0, %v3481
      %v3483 = vpop.f32.mrb[0].mxu0
      %3484 = vmatprep.mubr.bf16.mxu0 0
      %3485 = vmatmul.mubr.bf16.gmra.mrb[0].mxu0 %v3240
      %v3486 = vpop.f32.mrb[0].mxu0
      %v3487 = vadd.f32 0.0, %v3486
      %v3488 = vpop.f32.mrb[0].mxu0
      %v3489 = vpop.f32.mrb[0].mxu0
      %v3490 = vadd.f32 0.0, %v3489
      %v3491 = vpop.f32.mrb[0].mxu0
      %3492 = vmatprep.mubr.bf16.mxu0 0
      %3493 = vmatmul.mubr.bf16.gmra.mrb[0].mxu0 %v3241
      %v3494 = vpop.f32.mrb[0].mxu0
      %v3495 = vadd.f32 0.0, %v3494
      %v3496 = vpop.f32.mrb[0].mxu0
      %v3497 = vpop.f32.mrb[0].mxu0
      %v3498 = vadd.f32 0.0, %v3497
      %v3499 = vpop.f32.mrb[0].mxu0
      %3500 = vmatprep.mubr.bf16.mxu0 0
      %3501 = vmatmul.mubr.bf16.gmra.mrb[0].mxu0 %v3242
      %v3502 = vpop.f32.mrb[0].mxu0
      %v3503 = vadd.f32 0.0, %v3502
      %v3504 = vpop.f32.mrb[0].mxu0
      %v3505 = vpop.f32.mrb[0].mxu0
      %v3506 = vpop.f32.mrb[0].mxu0
      %3507 = vdwg.mxu0
      %v3508 = vadd.f32 %v3140, %v3343
      %v3509 = vadd.f32 %v3141, %v3346
      %v3510 = vadd.f32 %v3142, %v3351
      %v3511 = vadd.f32 %v3143, %v3354
      %v3512 = vadd.f32 %v3144, %v3359
      %v3513 = vadd.f32 %v3145, %v3362
      %v3514 = vadd.f32 %v3146, %v3367
      %v3515 = vadd.f32 %v3147, %v3370
      %v3516 = vadd.f32 %v3148, %v3375
      %v3517 = vadd.f32 %v3149, %v3378
      %v3518 = vadd.f32 %v3150, %v3383
      %v3519 = vadd.f32 %v3151, %v3386
      %v3520 = vadd.f32 %v3152, %v3391
      %v3521 = vadd.f32 %v3153, %v3394
      %v3522 = vadd.f32 %v3154, %v3399
      %v3523 = vadd.f32 %v3155, %v3402
      %v3524 = vadd.f32 %v3156, %v3407
      %v3525 = vadd.f32 %v3157, %v3410
      %v3526 = vadd.f32 %v3158, %v3415
      %v3527 = vadd.f32 %v3159, %v3418
      %v3528 = vadd.f32 %v3160, %v3423
      %v3529 = vadd.f32 %v3161, %v3426
      %v3530 = vadd.f32 %v3162, %v3431
      %v3531 = vadd.f32 %v3163, %v3434
      %v3532 = vadd.f32 %v3164, %v3439
      %v3533 = vadd.f32 %v3165, %v3442
      %v3534 = vadd.f32 %v3166, %v3447
      %v3535 = vadd.f32 %v3167, %v3450
      %v3536 = vadd.f32 %v3168, %v3455
      %v3537 = vadd.f32 %v3169, %v3458
      %v3538 = vadd.f32 %v3170, %v3463
      %v3539 = vadd.f32 %v3171, %v3466
      %v3540 = vadd.f32 %v3172, %v3471
      %v3541 = vadd.f32 %v3173, %v3474
      %v3542 = vadd.f32 %v3174, %v3479
      %v3543 = vadd.f32 %v3175, %v3482
      %v3544 = vadd.f32 %v3176, %v3487
      %v3545 = vadd.f32 %v3177, %v3490
      %v3546 = vadd.f32 %v3178, %v3495
      %v3547 = vadd.f32 %v3179, %v3498
      %v3548 = vadd.f32 %v3180, %v3503
      %v3549 = vld [vmem:[#allocation2 + $0x2a] sm:$0xff]
      %v3550 = vld [vmem:[#allocation2 + $0x32] sm:$0xff]
      %v3551 = vld [vmem:[#allocation2 + $0x3a] sm:$0xff]
      %v3552 = vld [vmem:[#allocation2 + $0x42] sm:$0xff]
      %v3553 = vld [vmem:[#allocation2 + $0x4a] sm:$0xff]
      %v3554 = vld [vmem:[#allocation2 + $0x52] sm:$0xff]
      %v3555 = vld [vmem:[#allocation2 + $0x5a] sm:$0xff]
      %v3556 = vld [vmem:[#allocation2 + $0x62] sm:$0xff]
      %v3557 = vld [vmem:[#allocation2 + $0x6a] sm:$0xff]
      %v3558 = vld [vmem:[#allocation2 + $0x72] sm:$0xff]
      %v3559 = vld [vmem:[#allocation2 + $0x7a] sm:$0xff]
      %v3560 = vld [vmem:[#allocation2 + $0x82] sm:$0xff]
      %v3561 = vld [vmem:[#allocation2 + $0x8a] sm:$0xff]
      %v3562 = vld [vmem:[#allocation2 + $0x92] sm:$0xff]
      %v3563 = vld [vmem:[#allocation2 + $0x9a] sm:$0xff]
      %v3564 = vld [vmem:[#allocation2 + $0xa2] sm:$0xff]
      %v3565 = vld [vmem:[#allocation2 + $0xaa] sm:$0xff]
      %v3566 = vld [vmem:[#allocation2 + $0xb2] sm:$0xff]
      %v3567 = vld [vmem:[#allocation2 + $0xba] sm:$0xff]
      %v3568 = vld [vmem:[#allocation2 + $0xc2] sm:$0xff]
      %v3569 = vld [vmem:[#allocation2 + $0xca] sm:$0xff]
      %v3570 = vld [vmem:[#allocation2 + $0xd2] sm:$0xff]
      %v3571 = vld [vmem:[#allocation2 + $0xda] sm:$0xff]
      %v3572 = vld [vmem:[#allocation2 + $0xe2] sm:$0xff]
      %v3573 = vld [vmem:[#allocation2 + $0xea] sm:$0xff]
      %v3574 = vld [vmem:[#allocation2 + $0xf2] sm:$0xff]
      %v3575 = vld [vmem:[#allocation2 + $0xfa] sm:$0xff]
      %v3576 = vld [vmem:[#allocation2 + $0x102] sm:$0xff]
      %v3577 = vld [vmem:[#allocation2 + $0x10a] sm:$0xff]
      %v3578 = vld [vmem:[#allocation2 + $0x112] sm:$0xff]
      %v3579 = vld [vmem:[#allocation2 + $0x11a] sm:$0xff]
      %v3580 = vld [vmem:[#allocation2 + $0x122] sm:$0xff]
      %v3581 = vld [vmem:[#allocation2 + $0x12a] sm:$0xff]
      %v3582 = vld [vmem:[#allocation2 + $0x132] sm:$0xff]
      %v3583 = vld [vmem:[#allocation2 + $0x13a] sm:$0xff]
      %v3584 = vld [vmem:[#allocation2 + $0x142] sm:$0xff]
      %v3585 = vld [vmem:[#allocation2 + $0x14a] sm:$0xff]
      %v3586 = vld [vmem:[#allocation2 + $0x152] sm:$0xff]
      %v3587 = vld [vmem:[#allocation2 + $0x15a] sm:$0xff]
      %v3588 = vld [vmem:[#allocation2 + $0x162] sm:$0xff]
      %v3589 = vld [vmem:[#allocation2 + $0x16a] sm:$0xf]
      %v3590 = vpack.c.bf16 %v3550, %v3549
      %v3591 = vpack.c.bf16 %v3552, %v3551
      %v3592 = vpack.c.bf16 %v3554, %v3553
      %v3593 = vpack.c.bf16 %v3556, %v3555
      %v3594 = vpack.c.bf16 %v3558, %v3557
      %v3595 = vpack.c.bf16 %v3560, %v3559
      %v3596 = vpack.c.bf16 %v3562, %v3561
      %v3597 = vpack.c.bf16 %v3564, %v3563
      %v3598 = vpack.c.bf16 %v3566, %v3565
      %v3599 = vpack.c.bf16 %v3568, %v3567
      %v3600 = vpack.c.bf16 %v3570, %v3569
      %v3601 = vpack.c.bf16 %v3572, %v3571
      %v3602 = vpack.c.bf16 %v3574, %v3573
      %v3603 = vpack.c.bf16 %v3576, %v3575
      %v3604 = vpack.c.bf16 %v3578, %v3577
      %v3605 = vpack.c.bf16 %v3580, %v3579
      %v3606 = vpack.c.bf16 %v3582, %v3581
      %v3607 = vpack.c.bf16 %v3584, %v3583
      %v3608 = vpack.c.bf16 %v3586, %v3585
      %v3609 = vpack.c.bf16 %v3588, %v3587
      %v3610 = vpack.c.bf16 %v3589, %v3589
      %s3611 = scalar_lea.vmem %s4, 448
      %v3612 = vld [vmem:[%s3611] sm:$0xf]
      %v3613 = vld [vmem:[%s3611 + $0x4] sm:$0xf]
      %v3614 = vld [vmem:[%s3611 + $0x8] sm:$0xf]
      %v3615 = vld [vmem:[%s3611 + $0xc] sm:$0xf]
      %v3616 = vld [vmem:[%s3611 + $0x10] sm:$0xf]
      %v3617 = vld [vmem:[%s3611 + $0x14] sm:$0xf]
      %v3618 = vld [vmem:[%s3611 + $0x18] sm:$0xf]
      %v3619 = vld [vmem:[%s3611 + $0x1c] sm:$0xf]
      %v3620 = vld [vmem:[%s3611 + $0x20] sm:$0xf]
      %v3621 = vld [vmem:[%s3611 + $0x24] sm:$0xf]
      %v3622 = vld [vmem:[%s3611 + $0x28] sm:$0xf]
      %v3623 = vld [vmem:[%s3611 + $0x2c] sm:$0xf]
      %v3624 = vld [vmem:[%s3611 + $0x30] sm:$0xf]
      %v3625 = vld [vmem:[%s3611 + $0x34] sm:$0xf]
      %v3626 = vld [vmem:[%s3611 + $0x38] sm:$0xf]
      %v3627 = vld [vmem:[%s3611 + $0x3c] sm:$0xf]
      %v3644 = vunpack.c.l.b16 %v3612
      %v3645 = vunpack.c.l.b16 %v3613
      %v3646 = vunpack.c.l.b16 %v3614
      %v3647 = vunpack.c.l.b16 %v3615
      %v3648 = vunpack.c.l.b16 %v3616
      %v3649 = vunpack.c.l.b16 %v3617
      %v3650 = vunpack.c.l.b16 %v3618
      %v3651 = vunpack.c.l.b16 %v3619
      %v3652 = vunpack.c.l.b16 %v3620
      %v3653 = vunpack.c.l.b16 %v3621
      %v3654 = vunpack.c.l.b16 %v3622
      %v3655 = vunpack.c.l.b16 %v3623
      %v3656 = vunpack.c.l.b16 %v3624
      %v3657 = vunpack.c.l.b16 %v3625
      %v3658 = vunpack.c.l.b16 %v3626
      %v3659 = vunpack.c.l.b16 %v3627
      %v3660 = vpack.c.b16 %v3645, %v3644
      %v3661 = vpack.c.b16 %v3647, %v3646
      %v3662 = vpack.c.b16 %v3649, %v3648
      %v3663 = vpack.c.b16 %v3651, %v3650
      %v3664 = vpack.c.b16 %v3653, %v3652
      %v3665 = vpack.c.b16 %v3655, %v3654
      %v3666 = vpack.c.b16 %v3657, %v3656
      %v3667 = vpack.c.b16 %v3659, %v3658
      %3676 = vmatprep.subr.bf16.mxu0 0
      %3677 = vmatpush1.bf16.msra.mxu0 %v3660
      %3678 = vmatprep.subr.bf16.mxu0 0
      %3679 = vmatpush1.bf16.msra.mxu0 %v3661
      %3680 = vmatprep.subr.bf16.mxu0 0
      %3681 = vmatpush1.bf16.msra.mxu0 %v3662
      %3682 = vmatprep.subr.bf16.mxu0 0
      %3683 = vmatpush1.bf16.msra.mxu0 %v3663
      %3684 = vmatprep.subr.bf16.mxu0 0
      %3685 = vmatpush1.bf16.msra.mxu0 %v3664
      %3686 = vmatprep.subr.bf16.mxu0 0
      %3687 = vmatpush1.bf16.msra.mxu0 %v3665
      %3688 = vmatprep.subr.bf16.mxu0 0
      %3689 = vmatpush1.bf16.msra.mxu0 %v3666
      %3690 = vmatprep.subr.bf16.mxu0 0
      %3691 = vmatpush1.bf16.msra.mxu0 %v3667
      %3692 = vmatprep.subr.bf16.mxu0 0
      %3693 = vmatpush1.bf16.msra.mxu0 0
      %3694 = vmatprep.subr.bf16.mxu0 0
      %3695 = vmatpush1.bf16.msra.mxu0 0
      %3696 = vmatprep.subr.bf16.mxu0 0
      %3697 = vmatpush1.bf16.msra.mxu0 0
      %3698 = vmatprep.subr.bf16.mxu0 0
      %3699 = vmatpush1.bf16.msra.mxu0 0
      %3700 = vmatprep.subr.bf16.mxu0 0
      %3701 = vmatpush1.bf16.msra.mxu0 0
      %3702 = vmatprep.subr.bf16.mxu0 0
      %3703 = vmatpush1.bf16.msra.mxu0 0
      %3704 = vmatprep.subr.bf16.mxu0 0
      %3705 = vmatpush1.bf16.msra.mxu0 0
      %3706 = vmatprep.subr.bf16.mxu0 0
      %3707 = vmatpush1.bf16.msra.mxu0 0
      %3708 = vmatprep.mubr.bf16.mxu0 0
      %3709 = vmatmul.mubr.bf16.gmra.mrb[0].mxu0 %v3590
      %v3710 = vpop.f32.mrb[0].mxu0
      %v3711 = vadd.f32 0.0, %v3710
      %v3712 = vpop.f32.mrb[0].mxu0
      %v3713 = vpop.f32.mrb[0].mxu0
      %v3714 = vadd.f32 0.0, %v3713
      %v3715 = vpop.f32.mrb[0].mxu0
      %3716 = vmatprep.mubr.bf16.mxu0 0
      %3717 = vmatmul.mubr.bf16.gmra.mrb[0].mxu0 %v3591
      %v3718 = vpop.f32.mrb[0].mxu0
      %v3719 = vadd.f32 0.0, %v3718
      %v3720 = vpop.f32.mrb[0].mxu0
      %v3721 = vpop.f32.mrb[0].mxu0
      %v3722 = vadd.f32 0.0, %v3721
      %v3723 = vpop.f32.mrb[0].mxu0
      %3724 = vmatprep.mubr.bf16.mxu0 0
      %3725 = vmatmul.mubr.bf16.gmra.mrb[0].mxu0 %v3592
      %v3726 = vpop.f32.mrb[0].mxu0
      %v3727 = vadd.f32 0.0, %v3726
      %v3728 = vpop.f32.mrb[0].mxu0
      %v3729 = vpop.f32.mrb[0].mxu0
      %v3730 = vadd.f32 0.0, %v3729
      %v3731 = vpop.f32.mrb[0].mxu0
      %3732 = vmatprep.mubr.bf16.mxu0 0
      %3733 = vmatmul.mubr.bf16.gmra.mrb[0].mxu0 %v3593
      %v3734 = vpop.f32.mrb[0].mxu0
      %v3735 = vadd.f32 0.0, %v3734
      %v3736 = vpop.f32.mrb[0].mxu0
      %v3737 = vpop.f32.mrb[0].mxu0
      %v3738 = vadd.f32 0.0, %v3737
      %v3739 = vpop.f32.mrb[0].mxu0
      %3740 = vmatprep.mubr.bf16.mxu0 0
      %3741 = vmatmul.mubr.bf16.gmra.mrb[0].mxu0 %v3594
      %v3742 = vpop.f32.mrb[0].mxu0
      %v3743 = vadd.f32 0.0, %v3742
      %v3744 = vpop.f32.mrb[0].mxu0
      %v3745 = vpop.f32.mrb[0].mxu0
      %v3746 = vadd.f32 0.0, %v3745
      %v3747 = vpop.f32.mrb[0].mxu0
      %3748 = vmatprep.mubr.bf16.mxu0 0
      %3749 = vmatmul.mubr.bf16.gmra.mrb[0].mxu0 %v3595
      %v3750 = vpop.f32.mrb[0].mxu0
      %v3751 = vadd.f32 0.0, %v3750
      %v3752 = vpop.f32.mrb[0].mxu0
      %v3753 = vpop.f32.mrb[0].mxu0
      %v3754 = vadd.f32 0.0, %v3753
      %v3755 = vpop.f32.mrb[0].mxu0
      %3756 = vmatprep.mubr.bf16.mxu0 0
      %3757 = vmatmul.mubr.bf16.gmra.mrb[0].mxu0 %v3596
      %v3758 = vpop.f32.mrb[0].mxu0
      %v3759 = vadd.f32 0.0, %v3758
      %v3760 = vpop.f32.mrb[0].mxu0
      %v3761 = vpop.f32.mrb[0].mxu0
      %v3762 = vadd.f32 0.0, %v3761
      %v3763 = vpop.f32.mrb[0].mxu0
      %3764 = vmatprep.mubr.bf16.mxu0 0
      %3765 = vmatmul.mubr.bf16.gmra.mrb[0].mxu0 %v3597
      %v3766 = vpop.f32.mrb[0].mxu0
      %v3767 = vadd.f32 0.0, %v3766
      %v3768 = vpop.f32.mrb[0].mxu0
      %v3769 = vpop.f32.mrb[0].mxu0
      %v3770 = vadd.f32 0.0, %v3769
      %v3771 = vpop.f32.mrb[0].mxu0
      %3772 = vmatprep.mubr.bf16.mxu0 0
      %3773 = vmatmul.mubr.bf16.gmra.mrb[0].mxu0 %v3598
      %v3774 = vpop.f32.mrb[0].mxu0
      %v3775 = vadd.f32 0.0, %v3774
      %v3776 = vpop.f32.mrb[0].mxu0
      %v3777 = vpop.f32.mrb[0].mxu0
      %v3778 = vadd.f32 0.0, %v3777
      %v3779 = vpop.f32.mrb[0].mxu0
      %3780 = vmatprep.mubr.bf16.mxu0 0
      %3781 = vmatmul.mubr.bf16.gmra.mrb[0].mxu0 %v3599
      %v3782 = vpop.f32.mrb[0].mxu0
      %v3783 = vadd.f32 0.0, %v3782
      %v3784 = vpop.f32.mrb[0].mxu0
      %v3785 = vpop.f32.mrb[0].mxu0
      %v3786 = vadd.f32 0.0, %v3785
      %v3787 = vpop.f32.mrb[0].mxu0
      %3788 = vmatprep.mubr.bf16.mxu0 0
      %3789 = vmatmul.mubr.bf16.gmra.mrb[0].mxu0 %v3600
      %v3790 = vpop.f32.mrb[0].mxu0
      %v3791 = vadd.f32 0.0, %v3790
      %v3792 = vpop.f32.mrb[0].mxu0
      %v3793 = vpop.f32.mrb[0].mxu0
      %v3794 = vadd.f32 0.0, %v3793
      %v3795 = vpop.f32.mrb[0].mxu0
      %3796 = vmatprep.mubr.bf16.mxu0 0
      %3797 = vmatmul.mubr.bf16.gmra.mrb[0].mxu0 %v3601
      %v3798 = vpop.f32.mrb[0].mxu0
      %v3799 = vadd.f32 0.0, %v3798
      %v3800 = vpop.f32.mrb[0].mxu0
      %v3801 = vpop.f32.mrb[0].mxu0
      %v3802 = vadd.f32 0.0, %v3801
      %v3803 = vpop.f32.mrb[0].mxu0
      %3804 = vmatprep.mubr.bf16.mxu0 0
      %3805 = vmatmul.mubr.bf16.gmra.mrb[0].mxu0 %v3602
      %v3806 = vpop.f32.mrb[0].mxu0
      %v3807 = vadd.f32 0.0, %v3806
      %v3808 = vpop.f32.mrb[0].mxu0
      %v3809 = vpop.f32.mrb[0].mxu0
      %v3810 = vadd.f32 0.0, %v3809
      %v3811 = vpop.f32.mrb[0].mxu0
      %3812 = vmatprep.mubr.bf16.mxu0 0
      %3813 = vmatmul.mubr.bf16.gmra.mrb[0].mxu0 %v3603
      %v3814 = vpop.f32.mrb[0].mxu0
      %v3815 = vadd.f32 0.0, %v3814
      %v3816 = vpop.f32.mrb[0].mxu0
      %v3817 = vpop.f32.mrb[0].mxu0
      %v3818 = vadd.f32 0.0, %v3817
      %v3819 = vpop.f32.mrb[0].mxu0
      %3820 = vmatprep.mubr.bf16.mxu0 0
      %3821 = vmatmul.mubr.bf16.gmra.mrb[0].mxu0 %v3604
      %v3822 = vpop.f32.mrb[0].mxu0
      %v3823 = vadd.f32 0.0, %v3822
      %v3824 = vpop.f32.mrb[0].mxu0
      %v3825 = vpop.f32.mrb[0].mxu0
      %v3826 = vadd.f32 0.0, %v3825
      %v3827 = vpop.f32.mrb[0].mxu0
      %3828 = vmatprep.mubr.bf16.mxu0 0
      %3829 = vmatmul.mubr.bf16.gmra.mrb[0].mxu0 %v3605
      %v3830 = vpop.f32.mrb[0].mxu0
      %v3831 = vadd.f32 0.0, %v3830
      %v3832 = vpop.f32.mrb[0].mxu0
      %v3833 = vpop.f32.mrb[0].mxu0
      %v3834 = vadd.f32 0.0, %v3833
      %v3835 = vpop.f32.mrb[0].mxu0
      %3836 = vmatprep.mubr.bf16.mxu0 0
      %3837 = vmatmul.mubr.bf16.gmra.mrb[0].mxu0 %v3606
      %v3838 = vpop.f32.mrb[0].mxu0
      %v3839 = vadd.f32 0.0, %v3838
      %v3840 = vpop.f32.mrb[0].mxu0
      %v3841 = vpop.f32.mrb[0].mxu0
      %v3842 = vadd.f32 0.0, %v3841
      %v3843 = vpop.f32.mrb[0].mxu0
      %3844 = vmatprep.mubr.bf16.mxu0 0
      %3845 = vmatmul.mubr.bf16.gmra.mrb[0].mxu0 %v3607
      %v3846 = vpop.f32.mrb[0].mxu0
      %v3847 = vadd.f32 0.0, %v3846
      %v3848 = vpop.f32.mrb[0].mxu0
      %v3849 = vpop.f32.mrb[0].mxu0
      %v3850 = vadd.f32 0.0, %v3849
      %v3851 = vpop.f32.mrb[0].mxu0
      %3852 = vmatprep.mubr.bf16.mxu0 0
      %3853 = vmatmul.mubr.bf16.gmra.mrb[0].mxu0 %v3608
      %v3854 = vpop.f32.mrb[0].mxu0
      %v3855 = vadd.f32 0.0, %v3854
      %v3856 = vpop.f32.mrb[0].mxu0
      %v3857 = vpop.f32.mrb[0].mxu0
      %v3858 = vadd.f32 0.0, %v3857
      %v3859 = vpop.f32.mrb[0].mxu0
      %3860 = vmatprep.mubr.bf16.mxu0 0
      %3861 = vmatmul.mubr.bf16.gmra.mrb[0].mxu0 %v3609
      %v3862 = vpop.f32.mrb[0].mxu0
      %v3863 = vadd.f32 0.0, %v3862
      %v3864 = vpop.f32.mrb[0].mxu0
      %v3865 = vpop.f32.mrb[0].mxu0
      %v3866 = vadd.f32 0.0, %v3865
      %v3867 = vpop.f32.mrb[0].mxu0
      %3868 = vmatprep.mubr.bf16.mxu0 0
      %3869 = vmatmul.mubr.bf16.gmra.mrb[0].mxu0 %v3610
      %v3870 = vpop.f32.mrb[0].mxu0
      %v3871 = vadd.f32 0.0, %v3870
      %v3872 = vpop.f32.mrb[0].mxu0
      %v3873 = vpop.f32.mrb[0].mxu0
      %v3874 = vpop.f32.mrb[0].mxu0
      %3875 = vdwg.mxu0
      %v3876 = vadd.f32 %v3508, %v3711
      %v3877 = vadd.f32 %v3509, %v3714
      %v3878 = vadd.f32 %v3510, %v3719
      %v3879 = vadd.f32 %v3511, %v3722
      %v3880 = vadd.f32 %v3512, %v3727
      %v3881 = vadd.f32 %v3513, %v3730
      %v3882 = vadd.f32 %v3514, %v3735
      %v3883 = vadd.f32 %v3515, %v3738
      %v3884 = vadd.f32 %v3516, %v3743
      %v3885 = vadd.f32 %v3517, %v3746
      %v3886 = vadd.f32 %v3518, %v3751
      %v3887 = vadd.f32 %v3519, %v3754
      %v3888 = vadd.f32 %v3520, %v3759
      %v3889 = vadd.f32 %v3521, %v3762
      %v3890 = vadd.f32 %v3522, %v3767
      %v3891 = vadd.f32 %v3523, %v3770
      %v3892 = vadd.f32 %v3524, %v3775
      %v3893 = vadd.f32 %v3525, %v3778
      %v3894 = vadd.f32 %v3526, %v3783
      %v3895 = vadd.f32 %v3527, %v3786
      %v3896 = vadd.f32 %v3528, %v3791
      %v3897 = vadd.f32 %v3529, %v3794
      %v3898 = vadd.f32 %v3530, %v3799
      %v3899 = vadd.f32 %v3531, %v3802
      %v3900 = vadd.f32 %v3532, %v3807
      %v3901 = vadd.f32 %v3533, %v3810
      %v3902 = vadd.f32 %v3534, %v3815
      %v3903 = vadd.f32 %v3535, %v3818
      %v3904 = vadd.f32 %v3536, %v3823
      %v3905 = vadd.f32 %v3537, %v3826
      %v3906 = vadd.f32 %v3538, %v3831
      %v3907 = vadd.f32 %v3539, %v3834
      %v3908 = vadd.f32 %v3540, %v3839
      %v3909 = vadd.f32 %v3541, %v3842
      %v3910 = vadd.f32 %v3542, %v3847
      %v3911 = vadd.f32 %v3543, %v3850
      %v3912 = vadd.f32 %v3544, %v3855
      %v3913 = vadd.f32 %v3545, %v3858
      %v3914 = vadd.f32 %v3546, %v3863
      %v3915 = vadd.f32 %v3547, %v3866
      %v3916 = vadd.f32 %v3548, %v3871
      %v3917 = vld [vmem:[#allocation2 + $0x2b] sm:$0xff]
      %v3918 = vld [vmem:[#allocation2 + $0x33] sm:$0xff]
      %v3919 = vld [vmem:[#allocation2 + $0x3b] sm:$0xff]
      %v3920 = vld [vmem:[#allocation2 + $0x43] sm:$0xff]
      %v3921 = vld [vmem:[#allocation2 + $0x4b] sm:$0xff]
      %v3922 = vld [vmem:[#allocation2 + $0x53] sm:$0xff]
      %v3923 = vld [vmem:[#allocation2 + $0x5b] sm:$0xff]
      %v3924 = vld [vmem:[#allocation2 + $0x63] sm:$0xff]
      %v3925 = vld [vmem:[#allocation2 + $0x6b] sm:$0xff]
      %v3926 = vld [vmem:[#allocation2 + $0x73] sm:$0xff]
      %v3927 = vld [vmem:[#allocation2 + $0x7b] sm:$0xff]
      %v3928 = vld [vmem:[#allocation2 + $0x83] sm:$0xff]
      %v3929 = vld [vmem:[#allocation2 + $0x8b] sm:$0xff]
      %v3930 = vld [vmem:[#allocation2 + $0x93] sm:$0xff]
      %v3931 = vld [vmem:[#allocation2 + $0x9b] sm:$0xff]
      %v3932 = vld [vmem:[#allocation2 + $0xa3] sm:$0xff]
      %v3933 = vld [vmem:[#allocation2 + $0xab] sm:$0xff]
      %v3934 = vld [vmem:[#allocation2 + $0xb3] sm:$0xff]
      %v3935 = vld [vmem:[#allocation2 + $0xbb] sm:$0xff]
      %v3936 = vld [vmem:[#allocation2 + $0xc3] sm:$0xff]
      %v3937 = vld [vmem:[#allocation2 + $0xcb] sm:$0xff]
      %v3938 = vld [vmem:[#allocation2 + $0xd3] sm:$0xff]
      %v3939 = vld [vmem:[#allocation2 + $0xdb] sm:$0xff]
      %v3940 = vld [vmem:[#allocation2 + $0xe3] sm:$0xff]
      %v3941 = vld [vmem:[#allocation2 + $0xeb] sm:$0xff]
      %v3942 = vld [vmem:[#allocation2 + $0xf3] sm:$0xff]
      %v3943 = vld [vmem:[#allocation2 + $0xfb] sm:$0xff]
      %v3944 = vld [vmem:[#allocation2 + $0x103] sm:$0xff]
      %v3945 = vld [vmem:[#allocation2 + $0x10b] sm:$0xff]
      %v3946 = vld [vmem:[#allocation2 + $0x113] sm:$0xff]
      %v3947 = vld [vmem:[#allocation2 + $0x11b] sm:$0xff]
      %v3948 = vld [vmem:[#allocation2 + $0x123] sm:$0xff]
      %v3949 = vld [vmem:[#allocation2 + $0x12b] sm:$0xff]
      %v3950 = vld [vmem:[#allocation2 + $0x133] sm:$0xff]
      %v3951 = vld [vmem:[#allocation2 + $0x13b] sm:$0xff]
      %v3952 = vld [vmem:[#allocation2 + $0x143] sm:$0xff]
      %v3953 = vld [vmem:[#allocation2 + $0x14b] sm:$0xff]
      %v3954 = vld [vmem:[#allocation2 + $0x153] sm:$0xff]
      %v3955 = vld [vmem:[#allocation2 + $0x15b] sm:$0xff]
      %v3956 = vld [vmem:[#allocation2 + $0x163] sm:$0xff]
      %v3957 = vld [vmem:[#allocation2 + $0x16b] sm:$0xf]
      %v3958 = vpack.c.bf16 %v3918, %v3917
      %v3959 = vpack.c.bf16 %v3920, %v3919
      %v3960 = vpack.c.bf16 %v3922, %v3921
      %v3961 = vpack.c.bf16 %v3924, %v3923
      %v3962 = vpack.c.bf16 %v3926, %v3925
      %v3963 = vpack.c.bf16 %v3928, %v3927
      %v3964 = vpack.c.bf16 %v3930, %v3929
      %v3965 = vpack.c.bf16 %v3932, %v3931
      %v3966 = vpack.c.bf16 %v3934, %v3933
      %v3967 = vpack.c.bf16 %v3936, %v3935
      %v3968 = vpack.c.bf16 %v3938, %v3937
      %v3969 = vpack.c.bf16 %v3940, %v3939
      %v3970 = vpack.c.bf16 %v3942, %v3941
      %v3971 = vpack.c.bf16 %v3944, %v3943
      %v3972 = vpack.c.bf16 %v3946, %v3945
      %v3973 = vpack.c.bf16 %v3948, %v3947
      %v3974 = vpack.c.bf16 %v3950, %v3949
      %v3975 = vpack.c.bf16 %v3952, %v3951
      %v3976 = vpack.c.bf16 %v3954, %v3953
      %v3977 = vpack.c.bf16 %v3956, %v3955
      %v3978 = vpack.c.bf16 %v3957, %v3957
      %s3979 = scalar_lea.vmem %s4, 512
      %v3980 = vld [vmem:[%s3979] sm:$0xf]
      %v3981 = vld [vmem:[%s3979 + $0x4] sm:$0xf]
      %v3982 = vld [vmem:[%s3979 + $0x8] sm:$0xf]
      %v3983 = vld [vmem:[%s3979 + $0xc] sm:$0xf]
      %v3984 = vld [vmem:[%s3979 + $0x10] sm:$0xf]
      %v3985 = vld [vmem:[%s3979 + $0x14] sm:$0xf]
      %v3986 = vld [vmem:[%s3979 + $0x18] sm:$0xf]
      %v3987 = vld [vmem:[%s3979 + $0x1c] sm:$0xf]
      %v3988 = vld [vmem:[%s3979 + $0x20] sm:$0xf]
      %v3989 = vld [vmem:[%s3979 + $0x24] sm:$0xf]
      %v3990 = vld [vmem:[%s3979 + $0x28] sm:$0xf]
      %v3991 = vld [vmem:[%s3979 + $0x2c] sm:$0xf]
      %v3992 = vld [vmem:[%s3979 + $0x30] sm:$0xf]
      %v3993 = vld [vmem:[%s3979 + $0x34] sm:$0xf]
      %v3994 = vld [vmem:[%s3979 + $0x38] sm:$0xf]
      %v3995 = vld [vmem:[%s3979 + $0x3c] sm:$0xf]
      %v4012 = vunpack.c.l.b16 %v3980
      %v4013 = vunpack.c.l.b16 %v3981
      %v4014 = vunpack.c.l.b16 %v3982
      %v4015 = vunpack.c.l.b16 %v3983
      %v4016 = vunpack.c.l.b16 %v3984
      %v4017 = vunpack.c.l.b16 %v3985
      %v4018 = vunpack.c.l.b16 %v3986
      %v4019 = vunpack.c.l.b16 %v3987
      %v4020 = vunpack.c.l.b16 %v3988
      %v4021 = vunpack.c.l.b16 %v3989
      %v4022 = vunpack.c.l.b16 %v3990
      %v4023 = vunpack.c.l.b16 %v3991
      %v4024 = vunpack.c.l.b16 %v3992
      %v4025 = vunpack.c.l.b16 %v3993
      %v4026 = vunpack.c.l.b16 %v3994
      %v4027 = vunpack.c.l.b16 %v3995
      %v4028 = vpack.c.b16 %v4013, %v4012
      %v4029 = vpack.c.b16 %v4015, %v4014
      %v4030 = vpack.c.b16 %v4017, %v4016
      %v4031 = vpack.c.b16 %v4019, %v4018
      %v4032 = vpack.c.b16 %v4021, %v4020
      %v4033 = vpack.c.b16 %v4023, %v4022
      %v4034 = vpack.c.b16 %v4025, %v4024
      %v4035 = vpack.c.b16 %v4027, %v4026
      %4044 = vmatprep.subr.bf16.mxu0 0
      %4045 = vmatpush1.bf16.msra.mxu0 %v4028
      %4046 = vmatprep.subr.bf16.mxu0 0
      %4047 = vmatpush1.bf16.msra.mxu0 %v4029
      %4048 = vmatprep.subr.bf16.mxu0 0
      %4049 = vmatpush1.bf16.msra.mxu0 %v4030
      %4050 = vmatprep.subr.bf16.mxu0 0
      %4051 = vmatpush1.bf16.msra.mxu0 %v4031
      %4052 = vmatprep.subr.bf16.mxu0 0
      %4053 = vmatpush1.bf16.msra.mxu0 %v4032
      %4054 = vmatprep.subr.bf16.mxu0 0
      %4055 = vmatpush1.bf16.msra.mxu0 %v4033
      %4056 = vmatprep.subr.bf16.mxu0 0
      %4057 = vmatpush1.bf16.msra.mxu0 %v4034
      %4058 = vmatprep.subr.bf16.mxu0 0
      %4059 = vmatpush1.bf16.msra.mxu0 %v4035
      %4060 = vmatprep.subr.bf16.mxu0 0
      %4061 = vmatpush1.bf16.msra.mxu0 0
      %4062 = vmatprep.subr.bf16.mxu0 0
      %4063 = vmatpush1.bf16.msra.mxu0 0
      %4064 = vmatprep.subr.bf16.mxu0 0
      %4065 = vmatpush1.bf16.msra.mxu0 0
      %4066 = vmatprep.subr.bf16.mxu0 0
      %4067 = vmatpush1.bf16.msra.mxu0 0
      %4068 = vmatprep.subr.bf16.mxu0 0
      %4069 = vmatpush1.bf16.msra.mxu0 0
      %4070 = vmatprep.subr.bf16.mxu0 0
      %4071 = vmatpush1.bf16.msra.mxu0 0
      %4072 = vmatprep.subr.bf16.mxu0 0
      %4073 = vmatpush1.bf16.msra.mxu0 0
      %4074 = vmatprep.subr.bf16.mxu0 0
      %4075 = vmatpush1.bf16.msra.mxu0 0
      %4076 = vmatprep.mubr.bf16.mxu0 0
      %4077 = vmatmul.mubr.bf16.gmra.mrb[0].mxu0 %v3958
      %v4078 = vpop.f32.mrb[0].mxu0
      %v4079 = vadd.f32 0.0, %v4078
      %v4080 = vpop.f32.mrb[0].mxu0
      %v4081 = vpop.f32.mrb[0].mxu0
      %v4082 = vadd.f32 0.0, %v4081
      %v4083 = vpop.f32.mrb[0].mxu0
      %4084 = vmatprep.mubr.bf16.mxu0 0
      %4085 = vmatmul.mubr.bf16.gmra.mrb[0].mxu0 %v3959
      %v4086 = vpop.f32.mrb[0].mxu0
      %v4087 = vadd.f32 0.0, %v4086
      %v4088 = vpop.f32.mrb[0].mxu0
      %v4089 = vpop.f32.mrb[0].mxu0
      %v4090 = vadd.f32 0.0, %v4089
      %v4091 = vpop.f32.mrb[0].mxu0
      %4092 = vmatprep.mubr.bf16.mxu0 0
      %4093 = vmatmul.mubr.bf16.gmra.mrb[0].mxu0 %v3960
      %v4094 = vpop.f32.mrb[0].mxu0
      %v4095 = vadd.f32 0.0, %v4094
      %v4096 = vpop.f32.mrb[0].mxu0
      %v4097 = vpop.f32.mrb[0].mxu0
      %v4098 = vadd.f32 0.0, %v4097
      %v4099 = vpop.f32.mrb[0].mxu0
      %4100 = vmatprep.mubr.bf16.mxu0 0
      %4101 = vmatmul.mubr.bf16.gmra.mrb[0].mxu0 %v3961
      %v4102 = vpop.f32.mrb[0].mxu0
      %v4103 = vadd.f32 0.0, %v4102
      %v4104 = vpop.f32.mrb[0].mxu0
      %v4105 = vpop.f32.mrb[0].mxu0
      %v4106 = vadd.f32 0.0, %v4105
      %v4107 = vpop.f32.mrb[0].mxu0
      %4108 = vmatprep.mubr.bf16.mxu0 0
      %4109 = vmatmul.mubr.bf16.gmra.mrb[0].mxu0 %v3962
      %v4110 = vpop.f32.mrb[0].mxu0
      %v4111 = vadd.f32 0.0, %v4110
      %v4112 = vpop.f32.mrb[0].mxu0
      %v4113 = vpop.f32.mrb[0].mxu0
      %v4114 = vadd.f32 0.0, %v4113
      %v4115 = vpop.f32.mrb[0].mxu0
      %4116 = vmatprep.mubr.bf16.mxu0 0
      %4117 = vmatmul.mubr.bf16.gmra.mrb[0].mxu0 %v3963
      %v4118 = vpop.f32.mrb[0].mxu0
      %v4119 = vadd.f32 0.0, %v4118
      %v4120 = vpop.f32.mrb[0].mxu0
      %v4121 = vpop.f32.mrb[0].mxu0
      %v4122 = vadd.f32 0.0, %v4121
      %v4123 = vpop.f32.mrb[0].mxu0
      %4124 = vmatprep.mubr.bf16.mxu0 0
      %4125 = vmatmul.mubr.bf16.gmra.mrb[0].mxu0 %v3964
      %v4126 = vpop.f32.mrb[0].mxu0
      %v4127 = vadd.f32 0.0, %v4126
      %v4128 = vpop.f32.mrb[0].mxu0
      %v4129 = vpop.f32.mrb[0].mxu0
      %v4130 = vadd.f32 0.0, %v4129
      %v4131 = vpop.f32.mrb[0].mxu0
      %4132 = vmatprep.mubr.bf16.mxu0 0
      %4133 = vmatmul.mubr.bf16.gmra.mrb[0].mxu0 %v3965
      %v4134 = vpop.f32.mrb[0].mxu0
      %v4135 = vadd.f32 0.0, %v4134
      %v4136 = vpop.f32.mrb[0].mxu0
      %v4137 = vpop.f32.mrb[0].mxu0
      %v4138 = vadd.f32 0.0, %v4137
      %v4139 = vpop.f32.mrb[0].mxu0
      %4140 = vmatprep.mubr.bf16.mxu0 0
      %4141 = vmatmul.mubr.bf16.gmra.mrb[0].mxu0 %v3966
      %v4142 = vpop.f32.mrb[0].mxu0
      %v4143 = vadd.f32 0.0, %v4142
      %v4144 = vpop.f32.mrb[0].mxu0
      %v4145 = vpop.f32.mrb[0].mxu0
      %v4146 = vadd.f32 0.0, %v4145
      %v4147 = vpop.f32.mrb[0].mxu0
      %4148 = vmatprep.mubr.bf16.mxu0 0
      %4149 = vmatmul.mubr.bf16.gmra.mrb[0].mxu0 %v3967
      %v4150 = vpop.f32.mrb[0].mxu0
      %v4151 = vadd.f32 0.0, %v4150
      %v4152 = vpop.f32.mrb[0].mxu0
      %v4153 = vpop.f32.mrb[0].mxu0
      %v4154 = vadd.f32 0.0, %v4153
      %v4155 = vpop.f32.mrb[0].mxu0
      %4156 = vmatprep.mubr.bf16.mxu0 0
      %4157 = vmatmul.mubr.bf16.gmra.mrb[0].mxu0 %v3968
      %v4158 = vpop.f32.mrb[0].mxu0
      %v4159 = vadd.f32 0.0, %v4158
      %v4160 = vpop.f32.mrb[0].mxu0
      %v4161 = vpop.f32.mrb[0].mxu0
      %v4162 = vadd.f32 0.0, %v4161
      %v4163 = vpop.f32.mrb[0].mxu0
      %4164 = vmatprep.mubr.bf16.mxu0 0
      %4165 = vmatmul.mubr.bf16.gmra.mrb[0].mxu0 %v3969
      %v4166 = vpop.f32.mrb[0].mxu0
      %v4167 = vadd.f32 0.0, %v4166
      %v4168 = vpop.f32.mrb[0].mxu0
      %v4169 = vpop.f32.mrb[0].mxu0
      %v4170 = vadd.f32 0.0, %v4169
      %v4171 = vpop.f32.mrb[0].mxu0
      %4172 = vmatprep.mubr.bf16.mxu0 0
      %4173 = vmatmul.mubr.bf16.gmra.mrb[0].mxu0 %v3970
      %v4174 = vpop.f32.mrb[0].mxu0
      %v4175 = vadd.f32 0.0, %v4174
      %v4176 = vpop.f32.mrb[0].mxu0
      %v4177 = vpop.f32.mrb[0].mxu0
      %v4178 = vadd.f32 0.0, %v4177
      %v4179 = vpop.f32.mrb[0].mxu0
      %4180 = vmatprep.mubr.bf16.mxu0 0
      %4181 = vmatmul.mubr.bf16.gmra.mrb[0].mxu0 %v3971
      %v4182 = vpop.f32.mrb[0].mxu0
      %v4183 = vadd.f32 0.0, %v4182
      %v4184 = vpop.f32.mrb[0].mxu0
      %v4185 = vpop.f32.mrb[0].mxu0
      %v4186 = vadd.f32 0.0, %v4185
      %v4187 = vpop.f32.mrb[0].mxu0
      %4188 = vmatprep.mubr.bf16.mxu0 0
      %4189 = vmatmul.mubr.bf16.gmra.mrb[0].mxu0 %v3972
      %v4190 = vpop.f32.mrb[0].mxu0
      %v4191 = vadd.f32 0.0, %v4190
      %v4192 = vpop.f32.mrb[0].mxu0
      %v4193 = vpop.f32.mrb[0].mxu0
      %v4194 = vadd.f32 0.0, %v4193
      %v4195 = vpop.f32.mrb[0].mxu0
      %4196 = vmatprep.mubr.bf16.mxu0 0
      %4197 = vmatmul.mubr.bf16.gmra.mrb[0].mxu0 %v3973
      %v4198 = vpop.f32.mrb[0].mxu0
      %v4199 = vadd.f32 0.0, %v4198
      %v4200 = vpop.f32.mrb[0].mxu0
      %v4201 = vpop.f32.mrb[0].mxu0
      %v4202 = vadd.f32 0.0, %v4201
      %v4203 = vpop.f32.mrb[0].mxu0
      %4204 = vmatprep.mubr.bf16.mxu0 0
      %4205 = vmatmul.mubr.bf16.gmra.mrb[0].mxu0 %v3974
      %v4206 = vpop.f32.mrb[0].mxu0
      %v4207 = vadd.f32 0.0, %v4206
      %v4208 = vpop.f32.mrb[0].mxu0
      %v4209 = vpop.f32.mrb[0].mxu0
      %v4210 = vadd.f32 0.0, %v4209
      %v4211 = vpop.f32.mrb[0].mxu0
      %4212 = vmatprep.mubr.bf16.mxu0 0
      %4213 = vmatmul.mubr.bf16.gmra.mrb[0].mxu0 %v3975
      %v4214 = vpop.f32.mrb[0].mxu0
      %v4215 = vadd.f32 0.0, %v4214
      %v4216 = vpop.f32.mrb[0].mxu0
      %v4217 = vpop.f32.mrb[0].mxu0
      %v4218 = vadd.f32 0.0, %v4217
      %v4219 = vpop.f32.mrb[0].mxu0
      %4220 = vmatprep.mubr.bf16.mxu0 0
      %4221 = vmatmul.mubr.bf16.gmra.mrb[0].mxu0 %v3976
      %v4222 = vpop.f32.mrb[0].mxu0
      %v4223 = vadd.f32 0.0, %v4222
      %v4224 = vpop.f32.mrb[0].mxu0
      %v4225 = vpop.f32.mrb[0].mxu0
      %v4226 = vadd.f32 0.0, %v4225
      %v4227 = vpop.f32.mrb[0].mxu0
      %4228 = vmatprep.mubr.bf16.mxu0 0
      %4229 = vmatmul.mubr.bf16.gmra.mrb[0].mxu0 %v3977
      %v4230 = vpop.f32.mrb[0].mxu0
      %v4231 = vadd.f32 0.0, %v4230
      %v4232 = vpop.f32.mrb[0].mxu0
      %v4233 = vpop.f32.mrb[0].mxu0
      %v4234 = vadd.f32 0.0, %v4233
      %v4235 = vpop.f32.mrb[0].mxu0
      %4236 = vmatprep.mubr.bf16.mxu0 0
      %4237 = vmatmul.mubr.bf16.gmra.mrb[0].mxu0 %v3978
      %v4238 = vpop.f32.mrb[0].mxu0
      %v4239 = vadd.f32 0.0, %v4238
      %v4240 = vpop.f32.mrb[0].mxu0
      %v4241 = vpop.f32.mrb[0].mxu0
      %v4242 = vpop.f32.mrb[0].mxu0
      %4243 = vdwg.mxu0
      %v4244 = vadd.f32 %v3876, %v4079
      %v4245 = vadd.f32 %v3877, %v4082
      %v4246 = vadd.f32 %v3878, %v4087
      %v4247 = vadd.f32 %v3879, %v4090
      %v4248 = vadd.f32 %v3880, %v4095
      %v4249 = vadd.f32 %v3881, %v4098
      %v4250 = vadd.f32 %v3882, %v4103
      %v4251 = vadd.f32 %v3883, %v4106
      %v4252 = vadd.f32 %v3884, %v4111
      %v4253 = vadd.f32 %v3885, %v4114
      %v4254 = vadd.f32 %v3886, %v4119
      %v4255 = vadd.f32 %v3887, %v4122
      %v4256 = vadd.f32 %v3888, %v4127
      %v4257 = vadd.f32 %v3889, %v4130
      %v4258 = vadd.f32 %v3890, %v4135
      %v4259 = vadd.f32 %v3891, %v4138
      %v4260 = vadd.f32 %v3892, %v4143
      %v4261 = vadd.f32 %v3893, %v4146
      %v4262 = vadd.f32 %v3894, %v4151
      %v4263 = vadd.f32 %v3895, %v4154
      %v4264 = vadd.f32 %v3896, %v4159
      %v4265 = vadd.f32 %v3897, %v4162
      %v4266 = vadd.f32 %v3898, %v4167
      %v4267 = vadd.f32 %v3899, %v4170
      %v4268 = vadd.f32 %v3900, %v4175
      %v4269 = vadd.f32 %v3901, %v4178
      %v4270 = vadd.f32 %v3902, %v4183
      %v4271 = vadd.f32 %v3903, %v4186
      %v4272 = vadd.f32 %v3904, %v4191
      %v4273 = vadd.f32 %v3905, %v4194
      %v4274 = vadd.f32 %v3906, %v4199
      %v4275 = vadd.f32 %v3907, %v4202
      %v4276 = vadd.f32 %v3908, %v4207
      %v4277 = vadd.f32 %v3909, %v4210
      %v4278 = vadd.f32 %v3910, %v4215
      %v4279 = vadd.f32 %v3911, %v4218
      %v4280 = vadd.f32 %v3912, %v4223
      %v4281 = vadd.f32 %v3913, %v4226
      %v4282 = vadd.f32 %v3914, %v4231
      %v4283 = vadd.f32 %v3915, %v4234
      %v4284 = vadd.f32 %v3916, %v4239
      %v4285 = vld [vmem:[%s5] sm:$0x1]
      %v4287 = vlaneseq
      %v4288 = vshrl.u32 %v4287, 7
      %v4289 = vsub.s32 0, %v4288
      %v4290 = vrot.slane %v4285, %v4289
      %v4292 = vadd.f32 %v4244, %v4290
      %v4293 = vadd.f32 %v4245, %v4290
      %v4294 = vadd.f32 %v4246, %v4290
      %v4295 = vadd.f32 %v4247, %v4290
      %v4296 = vadd.f32 %v4248, %v4290
      %v4297 = vadd.f32 %v4249, %v4290
      %v4298 = vadd.f32 %v4250, %v4290
      %v4299 = vadd.f32 %v4251, %v4290
      %v4300 = vadd.f32 %v4252, %v4290
      %v4301 = vadd.f32 %v4253, %v4290
      %v4302 = vadd.f32 %v4254, %v4290
      %v4303 = vadd.f32 %v4255, %v4290
      %v4304 = vadd.f32 %v4256, %v4290
      %v4305 = vadd.f32 %v4257, %v4290
      %v4306 = vadd.f32 %v4258, %v4290
      %v4307 = vadd.f32 %v4259, %v4290
      %v4308 = vadd.f32 %v4260, %v4290
      %v4309 = vadd.f32 %v4261, %v4290
      %v4310 = vadd.f32 %v4262, %v4290
      %v4311 = vadd.f32 %v4263, %v4290
      %v4312 = vadd.f32 %v4264, %v4290
      %v4313 = vadd.f32 %v4265, %v4290
      %v4314 = vadd.f32 %v4266, %v4290
      %v4315 = vadd.f32 %v4267, %v4290
      %v4316 = vadd.f32 %v4268, %v4290
      %v4317 = vadd.f32 %v4269, %v4290
      %v4318 = vadd.f32 %v4270, %v4290
      %v4319 = vadd.f32 %v4271, %v4290
      %v4320 = vadd.f32 %v4272, %v4290
      %v4321 = vadd.f32 %v4273, %v4290
      %v4322 = vadd.f32 %v4274, %v4290
      %v4323 = vadd.f32 %v4275, %v4290
      %v4324 = vadd.f32 %v4276, %v4290
      %v4325 = vadd.f32 %v4277, %v4290
      %v4326 = vadd.f32 %v4278, %v4290
      %v4327 = vadd.f32 %v4279, %v4290
      %v4328 = vadd.f32 %v4280, %v4290
      %v4329 = vadd.f32 %v4281, %v4290
      %v4330 = vadd.f32 %v4282, %v4290
      %v4331 = vadd.f32 %v4283, %v4290
      %v4332 = vadd.f32 %v4284, %v4290
      %v4333 = vmax.f32 %v4292, 0.0
      %v4334 = vmax.f32 %v4293, 0.0
      %v4335 = vmax.f32 %v4294, 0.0
      %v4336 = vmax.f32 %v4295, 0.0
      %v4337 = vmax.f32 %v4296, 0.0
      %v4338 = vmax.f32 %v4297, 0.0
      %v4339 = vmax.f32 %v4298, 0.0
      %v4340 = vmax.f32 %v4299, 0.0
      %v4341 = vmax.f32 %v4300, 0.0
      %v4342 = vmax.f32 %v4301, 0.0
      %v4343 = vmax.f32 %v4302, 0.0
      %v4344 = vmax.f32 %v4303, 0.0
      %v4345 = vmax.f32 %v4304, 0.0
      %v4346 = vmax.f32 %v4305, 0.0
      %v4347 = vmax.f32 %v4306, 0.0
      %v4348 = vmax.f32 %v4307, 0.0
      %v4349 = vmax.f32 %v4308, 0.0
      %v4350 = vmax.f32 %v4309, 0.0
      %v4351 = vmax.f32 %v4310, 0.0
      %v4352 = vmax.f32 %v4311, 0.0
      %v4353 = vmax.f32 %v4312, 0.0
      %v4354 = vmax.f32 %v4313, 0.0
      %v4355 = vmax.f32 %v4314, 0.0
      %v4356 = vmax.f32 %v4315, 0.0
      %v4357 = vmax.f32 %v4316, 0.0
      %v4358 = vmax.f32 %v4317, 0.0
      %v4359 = vmax.f32 %v4318, 0.0
      %v4360 = vmax.f32 %v4319, 0.0
      %v4361 = vmax.f32 %v4320, 0.0
      %v4362 = vmax.f32 %v4321, 0.0
      %v4363 = vmax.f32 %v4322, 0.0
      %v4364 = vmax.f32 %v4323, 0.0
      %v4365 = vmax.f32 %v4324, 0.0
      %v4366 = vmax.f32 %v4325, 0.0
      %v4367 = vmax.f32 %v4326, 0.0
      %v4368 = vmax.f32 %v4327, 0.0
      %v4369 = vmax.f32 %v4328, 0.0
      %v4370 = vmax.f32 %v4329, 0.0
      %v4371 = vmax.f32 %v4330, 0.0
      %v4372 = vmax.f32 %v4331, 0.0
      %v4373 = vmax.f32 %v4332, 0.0
      %v4374 = vpack.c.bf16 %v4334, %v4333
      %v4375 = vpack.c.bf16 %v4336, %v4335
      %v4376 = vpack.c.bf16 %v4338, %v4337
      %v4377 = vpack.c.bf16 %v4340, %v4339
      %v4378 = vpack.c.bf16 %v4342, %v4341
      %v4379 = vpack.c.bf16 %v4344, %v4343
      %v4380 = vpack.c.bf16 %v4346, %v4345
      %v4381 = vpack.c.bf16 %v4348, %v4347
      %v4382 = vpack.c.bf16 %v4350, %v4349
      %v4383 = vpack.c.bf16 %v4352, %v4351
      %v4384 = vpack.c.bf16 %v4354, %v4353
      %v4385 = vpack.c.bf16 %v4356, %v4355
      %v4386 = vpack.c.bf16 %v4358, %v4357
      %v4387 = vpack.c.bf16 %v4360, %v4359
      %v4388 = vpack.c.bf16 %v4362, %v4361
      %v4389 = vpack.c.bf16 %v4364, %v4363
      %v4390 = vpack.c.bf16 %v4366, %v4365
      %v4391 = vpack.c.bf16 %v4368, %v4367
      %v4392 = vpack.c.bf16 %v4370, %v4369
      %v4393 = vpack.c.bf16 %v4372, %v4371
      %v4394 = vpack.c.bf16 %v4373, %v4373
      %v4395 = vld [vmem:[%s6] sm:$0xf]
      %v4396 = vld [vmem:[%s6 + $0x4] sm:$0xf]
      %v4397 = vld [vmem:[%s6 + $0x8] sm:$0xf]
      %v4398 = vld [vmem:[%s6 + $0xc] sm:$0xf]
      %v4399 = vld [vmem:[%s6 + $0x10] sm:$0xf]
      %v4400 = vld [vmem:[%s6 + $0x14] sm:$0xf]
      %v4401 = vld [vmem:[%s6 + $0x18] sm:$0xf]
      %v4402 = vld [vmem:[%s6 + $0x1c] sm:$0xf]
      %v4403 = vld [vmem:[%s6 + $0x20] sm:$0xf]
      %v4404 = vld [vmem:[%s6 + $0x24] sm:$0xf]
      %v4405 = vld [vmem:[%s6 + $0x28] sm:$0xf]
      %v4406 = vld [vmem:[%s6 + $0x2c] sm:$0xf]
      %v4407 = vld [vmem:[%s6 + $0x30] sm:$0xf]
      %v4408 = vld [vmem:[%s6 + $0x34] sm:$0xf]
      %v4409 = vld [vmem:[%s6 + $0x38] sm:$0xf]
      %v4410 = vld [vmem:[%s6 + $0x3c] sm:$0xf]
      %v4411 = vld [vmem:[%s7] sm:$0x1]
      %v4413 = vlaneseq
      %v4414 = vshrl.u32 %v4413, 7
      %v4415 = vsub.s32 0, %v4414
      %v4416 = vrot.slane %v4411, %v4415
      %v4434 = vunpack.c.l.b16 %v4395
      %v4435 = vunpack.c.l.b16 %v4396
      %v4436 = vunpack.c.l.b16 %v4397
      %v4437 = vunpack.c.l.b16 %v4398
      %v4438 = vunpack.c.l.b16 %v4399
      %v4439 = vunpack.c.l.b16 %v4400
      %v4440 = vunpack.c.l.b16 %v4401
      %v4441 = vunpack.c.l.b16 %v4402
      %v4442 = vunpack.c.l.b16 %v4403
      %v4443 = vunpack.c.l.b16 %v4404
      %v4444 = vunpack.c.l.b16 %v4405
      %v4445 = vunpack.c.l.b16 %v4406
      %v4446 = vunpack.c.l.b16 %v4407
      %v4447 = vunpack.c.l.b16 %v4408
      %v4448 = vunpack.c.l.b16 %v4409
      %v4449 = vunpack.c.l.b16 %v4410
      %v4450 = vpack.c.b16 %v4435, %v4434
      %v4451 = vpack.c.b16 %v4437, %v4436
      %v4452 = vpack.c.b16 %v4439, %v4438
      %v4453 = vpack.c.b16 %v4441, %v4440
      %v4454 = vpack.c.b16 %v4443, %v4442
      %v4455 = vpack.c.b16 %v4445, %v4444
      %v4456 = vpack.c.b16 %v4447, %v4446
      %v4457 = vpack.c.b16 %v4449, %v4448
      %4466 = vmatprep.subr.bf16.mxu0 0
      %4467 = vmatpush1.bf16.msra.mxu0 %v4450
      %4468 = vmatprep.subr.bf16.mxu0 0
      %4469 = vmatpush1.bf16.msra.mxu0 %v4451
      %4470 = vmatprep.subr.bf16.mxu0 0
      %4471 = vmatpush1.bf16.msra.mxu0 %v4452
      %4472 = vmatprep.subr.bf16.mxu0 0
      %4473 = vmatpush1.bf16.msra.mxu0 %v4453
      %4474 = vmatprep.subr.bf16.mxu0 0
      %4475 = vmatpush1.bf16.msra.mxu0 %v4454
      %4476 = vmatprep.subr.bf16.mxu0 0
      %4477 = vmatpush1.bf16.msra.mxu0 %v4455
      %4478 = vmatprep.subr.bf16.mxu0 0
      %4479 = vmatpush1.bf16.msra.mxu0 %v4456
      %4480 = vmatprep.subr.bf16.mxu0 0
      %4481 = vmatpush1.bf16.msra.mxu0 %v4457
      %4482 = vmatprep.subr.bf16.mxu0 0
      %4483 = vmatpush1.bf16.msra.mxu0 0
      %4484 = vmatprep.subr.bf16.mxu0 0
      %4485 = vmatpush1.bf16.msra.mxu0 0
      %4486 = vmatprep.subr.bf16.mxu0 0
      %4487 = vmatpush1.bf16.msra.mxu0 0
      %4488 = vmatprep.subr.bf16.mxu0 0
      %4489 = vmatpush1.bf16.msra.mxu0 0
      %4490 = vmatprep.subr.bf16.mxu0 0
      %4491 = vmatpush1.bf16.msra.mxu0 0
      %4492 = vmatprep.subr.bf16.mxu0 0
      %4493 = vmatpush1.bf16.msra.mxu0 0
      %4494 = vmatprep.subr.bf16.mxu0 0
      %4495 = vmatpush1.bf16.msra.mxu0 0
      %4496 = vmatprep.subr.bf16.mxu0 0
      %4497 = vmatpush1.bf16.msra.mxu0 0
      %4498 = vmatprep.mubr.bf16.mxu0 0
      %4499 = vmatmul.mubr.bf16.gmra.mrb[0].mxu0 %v4374
      %v4500 = vpop.f32.mrb[0].mxu0
      %v4501 = vadd.f32 %v4416, %v4500
      %v4502 = vpop.f32.mrb[0].mxu0
      %v4503 = vpop.f32.mrb[0].mxu0
      %v4504 = vadd.f32 %v4416, %v4503
      %v4505 = vpop.f32.mrb[0].mxu0
      %4506 = vmatprep.mubr.bf16.mxu0 0
      %4507 = vmatmul.mubr.bf16.gmra.mrb[0].mxu0 %v4375
      %v4508 = vpop.f32.mrb[0].mxu0
      %v4509 = vadd.f32 %v4416, %v4508
      %v4510 = vpop.f32.mrb[0].mxu0
      %v4511 = vpop.f32.mrb[0].mxu0
      %v4512 = vadd.f32 %v4416, %v4511
      %v4513 = vpop.f32.mrb[0].mxu0
      %4514 = vmatprep.mubr.bf16.mxu0 0
      %4515 = vmatmul.mubr.bf16.gmra.mrb[0].mxu0 %v4376
      %v4516 = vpop.f32.mrb[0].mxu0
      %v4517 = vadd.f32 %v4416, %v4516
      %v4518 = vpop.f32.mrb[0].mxu0
      %v4519 = vpop.f32.mrb[0].mxu0
      %v4520 = vadd.f32 %v4416, %v4519
      %v4521 = vpop.f32.mrb[0].mxu0
      %4522 = vmatprep.mubr.bf16.mxu0 0
      %4523 = vmatmul.mubr.bf16.gmra.mrb[0].mxu0 %v4377
      %v4524 = vpop.f32.mrb[0].mxu0
      %v4525 = vadd.f32 %v4416, %v4524
      %v4526 = vpop.f32.mrb[0].mxu0
      %v4527 = vpop.f32.mrb[0].mxu0
      %v4528 = vadd.f32 %v4416, %v4527
      %v4529 = vpop.f32.mrb[0].mxu0
      %4530 = vmatprep.mubr.bf16.mxu0 0
      %4531 = vmatmul.mubr.bf16.gmra.mrb[0].mxu0 %v4378
      %v4532 = vpop.f32.mrb[0].mxu0
      %v4533 = vadd.f32 %v4416, %v4532
      %v4534 = vpop.f32.mrb[0].mxu0
      %v4535 = vpop.f32.mrb[0].mxu0
      %v4536 = vadd.f32 %v4416, %v4535
      %v4537 = vpop.f32.mrb[0].mxu0
      %4538 = vmatprep.mubr.bf16.mxu0 0
      %4539 = vmatmul.mubr.bf16.gmra.mrb[0].mxu0 %v4379
      %v4540 = vpop.f32.mrb[0].mxu0
      %v4541 = vadd.f32 %v4416, %v4540
      %v4542 = vpop.f32.mrb[0].mxu0
      %v4543 = vpop.f32.mrb[0].mxu0
      %v4544 = vadd.f32 %v4416, %v4543
      %v4545 = vpop.f32.mrb[0].mxu0
      %4546 = vmatprep.mubr.bf16.mxu0 0
      %4547 = vmatmul.mubr.bf16.gmra.mrb[0].mxu0 %v4380
      %v4548 = vpop.f32.mrb[0].mxu0
      %v4549 = vadd.f32 %v4416, %v4548
      %v4550 = vpop.f32.mrb[0].mxu0
      %v4551 = vpop.f32.mrb[0].mxu0
      %v4552 = vadd.f32 %v4416, %v4551
      %v4553 = vpop.f32.mrb[0].mxu0
      %4554 = vmatprep.mubr.bf16.mxu0 0
      %4555 = vmatmul.mubr.bf16.gmra.mrb[0].mxu0 %v4381
      %v4556 = vpop.f32.mrb[0].mxu0
      %v4557 = vadd.f32 %v4416, %v4556
      %v4558 = vpop.f32.mrb[0].mxu0
      %v4559 = vpop.f32.mrb[0].mxu0
      %v4560 = vadd.f32 %v4416, %v4559
      %v4561 = vpop.f32.mrb[0].mxu0
      %4562 = vmatprep.mubr.bf16.mxu0 0
      %4563 = vmatmul.mubr.bf16.gmra.mrb[0].mxu0 %v4382
      %v4564 = vpop.f32.mrb[0].mxu0
      %v4565 = vadd.f32 %v4416, %v4564
      %v4566 = vpop.f32.mrb[0].mxu0
      %v4567 = vpop.f32.mrb[0].mxu0
      %v4568 = vadd.f32 %v4416, %v4567
      %v4569 = vpop.f32.mrb[0].mxu0
      %4570 = vmatprep.mubr.bf16.mxu0 0
      %4571 = vmatmul.mubr.bf16.gmra.mrb[0].mxu0 %v4383
      %v4572 = vpop.f32.mrb[0].mxu0
      %v4573 = vadd.f32 %v4416, %v4572
      %v4574 = vpop.f32.mrb[0].mxu0
      %v4575 = vpop.f32.mrb[0].mxu0
      %v4576 = vadd.f32 %v4416, %v4575
      %v4577 = vpop.f32.mrb[0].mxu0
      %4578 = vmatprep.mubr.bf16.mxu0 0
      %4579 = vmatmul.mubr.bf16.gmra.mrb[0].mxu0 %v4384
      %v4580 = vpop.f32.mrb[0].mxu0
      %v4581 = vadd.f32 %v4416, %v4580
      %v4582 = vpop.f32.mrb[0].mxu0
      %v4583 = vpop.f32.mrb[0].mxu0
      %v4584 = vadd.f32 %v4416, %v4583
      %v4585 = vpop.f32.mrb[0].mxu0
      %4586 = vmatprep.mubr.bf16.mxu0 0
      %4587 = vmatmul.mubr.bf16.gmra.mrb[0].mxu0 %v4385
      %v4588 = vpop.f32.mrb[0].mxu0
      %v4589 = vadd.f32 %v4416, %v4588
      %v4590 = vpop.f32.mrb[0].mxu0
      %v4591 = vpop.f32.mrb[0].mxu0
      %v4592 = vadd.f32 %v4416, %v4591
      %v4593 = vpop.f32.mrb[0].mxu0
      %4594 = vmatprep.mubr.bf16.mxu0 0
      %4595 = vmatmul.mubr.bf16.gmra.mrb[0].mxu0 %v4386
      %v4596 = vpop.f32.mrb[0].mxu0
      %v4597 = vadd.f32 %v4416, %v4596
      %v4598 = vpop.f32.mrb[0].mxu0
      %v4599 = vpop.f32.mrb[0].mxu0
      %v4600 = vadd.f32 %v4416, %v4599
      %v4601 = vpop.f32.mrb[0].mxu0
      %4602 = vmatprep.mubr.bf16.mxu0 0
      %4603 = vmatmul.mubr.bf16.gmra.mrb[0].mxu0 %v4387
      %v4604 = vpop.f32.mrb[0].mxu0
      %v4605 = vadd.f32 %v4416, %v4604
      %v4606 = vpop.f32.mrb[0].mxu0
      %v4607 = vpop.f32.mrb[0].mxu0
      %v4608 = vadd.f32 %v4416, %v4607
      %v4609 = vpop.f32.mrb[0].mxu0
      %4610 = vmatprep.mubr.bf16.mxu0 0
      %4611 = vmatmul.mubr.bf16.gmra.mrb[0].mxu0 %v4388
      %v4612 = vpop.f32.mrb[0].mxu0
      %v4613 = vadd.f32 %v4416, %v4612
      %v4614 = vpop.f32.mrb[0].mxu0
      %v4615 = vpop.f32.mrb[0].mxu0
      %v4616 = vadd.f32 %v4416, %v4615
      %v4617 = vpop.f32.mrb[0].mxu0
      %4618 = vmatprep.mubr.bf16.mxu0 0
      %4619 = vmatmul.mubr.bf16.gmra.mrb[0].mxu0 %v4389
      %v4620 = vpop.f32.mrb[0].mxu0
      %v4621 = vadd.f32 %v4416, %v4620
      %v4622 = vpop.f32.mrb[0].mxu0
      %v4623 = vpop.f32.mrb[0].mxu0
      %v4624 = vadd.f32 %v4416, %v4623
      %v4625 = vpop.f32.mrb[0].mxu0
      %4626 = vmatprep.mubr.bf16.mxu0 0
      %4627 = vmatmul.mubr.bf16.gmra.mrb[0].mxu0 %v4390
      %v4628 = vpop.f32.mrb[0].mxu0
      %v4629 = vadd.f32 %v4416, %v4628
      %v4630 = vpop.f32.mrb[0].mxu0
      %v4631 = vpop.f32.mrb[0].mxu0
      %v4632 = vadd.f32 %v4416, %v4631
      %v4633 = vpop.f32.mrb[0].mxu0
      %4634 = vmatprep.mubr.bf16.mxu0 0
      %4635 = vmatmul.mubr.bf16.gmra.mrb[0].mxu0 %v4391
      %v4636 = vpop.f32.mrb[0].mxu0
      %v4637 = vadd.f32 %v4416, %v4636
      %v4638 = vpop.f32.mrb[0].mxu0
      %v4639 = vpop.f32.mrb[0].mxu0
      %v4640 = vadd.f32 %v4416, %v4639
      %v4641 = vpop.f32.mrb[0].mxu0
      %4642 = vmatprep.mubr.bf16.mxu0 0
      %4643 = vmatmul.mubr.bf16.gmra.mrb[0].mxu0 %v4392
      %v4644 = vpop.f32.mrb[0].mxu0
      %v4645 = vadd.f32 %v4416, %v4644
      %v4646 = vpop.f32.mrb[0].mxu0
      %v4647 = vpop.f32.mrb[0].mxu0
      %v4648 = vadd.f32 %v4416, %v4647
      %v4649 = vpop.f32.mrb[0].mxu0
      %4650 = vmatprep.mubr.bf16.mxu0 0
      %4651 = vmatmul.mubr.bf16.gmra.mrb[0].mxu0 %v4393
      %v4652 = vpop.f32.mrb[0].mxu0
      %v4653 = vadd.f32 %v4416, %v4652
      %v4654 = vpop.f32.mrb[0].mxu0
      %v4655 = vpop.f32.mrb[0].mxu0
      %v4656 = vadd.f32 %v4416, %v4655
      %v4657 = vpop.f32.mrb[0].mxu0
      %4658 = vmatprep.mubr.bf16.mxu0 0
      %4659 = vmatmul.mubr.bf16.gmra.mrb[0].mxu0 %v4394
      %v4660 = vpop.f32.mrb[0].mxu0
      %v4661 = vadd.f32 %v4416, %v4660
      %v4662 = vpop.f32.mrb[0].mxu0
      %v4663 = vpop.f32.mrb[0].mxu0
      %v4664 = vpop.f32.mrb[0].mxu0
      %4665 = vdwg.mxu0
      %v4666 = vld [vmem:[%s300] sm:$0xff]
      %v4667 = vld [vmem:[%s300 + $0x8] sm:$0xff]
      %v4668 = vld [vmem:[%s300 + $0x10] sm:$0xff]
      %v4669 = vld [vmem:[%s300 + $0x18] sm:$0xff]
      %v4670 = vld [vmem:[%s300 + $0x20] sm:$0xff]
      %v4671 = vld [vmem:[%s300 + $0x28] sm:$0xff]
      %v4672 = vld [vmem:[%s300 + $0x30] sm:$0xff]
      %v4673 = vld [vmem:[%s300 + $0x38] sm:$0xff]
      %v4674 = vld [vmem:[%s300 + $0x40] sm:$0xff]
      %v4675 = vld [vmem:[%s300 + $0x48] sm:$0xff]
      %v4676 = vld [vmem:[%s300 + $0x50] sm:$0xff]
      %v4677 = vld [vmem:[%s300 + $0x58] sm:$0xff]
      %v4678 = vld [vmem:[%s300 + $0x60] sm:$0xff]
      %v4679 = vld [vmem:[%s300 + $0x68] sm:$0xff]
      %v4680 = vld [vmem:[%s300 + $0x70] sm:$0xff]
      %v4681 = vld [vmem:[%s300 + $0x78] sm:$0xff]
      %v4682 = vld [vmem:[%s300 + $0x80] sm:$0xff]
      %v4683 = vld [vmem:[%s300 + $0x88] sm:$0xff]
      %v4684 = vld [vmem:[%s300 + $0x90] sm:$0xff]
      %v4685 = vld [vmem:[%s300 + $0x98] sm:$0xff]
      %v4686 = vld [vmem:[%s300 + $0xa0] sm:$0xff]
      %v4687 = vld [vmem:[%s300 + $0xa8] sm:$0xff]
      %v4688 = vld [vmem:[%s300 + $0xb0] sm:$0xff]
      %v4689 = vld [vmem:[%s300 + $0xb8] sm:$0xff]
      %v4690 = vld [vmem:[%s300 + $0xc0] sm:$0xff]
      %v4691 = vld [vmem:[%s300 + $0xc8] sm:$0xff]
      %v4692 = vld [vmem:[%s300 + $0xd0] sm:$0xff]
      %v4693 = vld [vmem:[%s300 + $0xd8] sm:$0xff]
      %v4694 = vld [vmem:[%s300 + $0xe0] sm:$0xff]
      %v4695 = vld [vmem:[%s300 + $0xe8] sm:$0xff]
      %v4696 = vld [vmem:[%s300 + $0xf0] sm:$0xff]
      %v4697 = vld [vmem:[%s300 + $0xf8] sm:$0xff]
      %v4698 = vld [vmem:[%s300 + $0x100] sm:$0xff]
      %v4699 = vld [vmem:[%s300 + $0x108] sm:$0xff]
      %v4700 = vld [vmem:[%s300 + $0x110] sm:$0xff]
      %v4701 = vld [vmem:[%s300 + $0x118] sm:$0xff]
      %v4702 = vld [vmem:[%s300 + $0x120] sm:$0xff]
      %v4703 = vld [vmem:[%s300 + $0x128] sm:$0xff]
      %v4704 = vld [vmem:[%s300 + $0x130] sm:$0xff]
      %v4705 = vld [vmem:[%s300 + $0x138] sm:$0xff]
      %v4706 = vld [vmem:[%s300 + $0x140] sm:$0xf]
      %v4707 = vadd.f32 %v4501, %v4666
      %v4708 = vadd.f32 %v4504, %v4667
      %v4709 = vadd.f32 %v4509, %v4668
      %v4710 = vadd.f32 %v4512, %v4669
      %v4711 = vadd.f32 %v4517, %v4670
      %v4712 = vadd.f32 %v4520, %v4671
      %v4713 = vadd.f32 %v4525, %v4672
      %v4714 = vadd.f32 %v4528, %v4673
      %v4715 = vadd.f32 %v4533, %v4674
      %v4716 = vadd.f32 %v4536, %v4675
      %v4717 = vadd.f32 %v4541, %v4676
      %v4718 = vadd.f32 %v4544, %v4677
      %v4719 = vadd.f32 %v4549, %v4678
      %v4720 = vadd.f32 %v4552, %v4679
      %v4721 = vadd.f32 %v4557, %v4680
      %v4722 = vadd.f32 %v4560, %v4681
      %v4723 = vadd.f32 %v4565, %v4682
      %v4724 = vadd.f32 %v4568, %v4683
      %v4725 = vadd.f32 %v4573, %v4684
      %v4726 = vadd.f32 %v4576, %v4685
      %v4727 = vadd.f32 %v4581, %v4686
      %v4728 = vadd.f32 %v4584, %v4687
      %v4729 = vadd.f32 %v4589, %v4688
      %v4730 = vadd.f32 %v4592, %v4689
      %v4731 = vadd.f32 %v4597, %v4690
      %v4732 = vadd.f32 %v4600, %v4691
      %v4733 = vadd.f32 %v4605, %v4692
      %v4734 = vadd.f32 %v4608, %v4693
      %v4735 = vadd.f32 %v4613, %v4694
      %v4736 = vadd.f32 %v4616, %v4695
      %v4737 = vadd.f32 %v4621, %v4696
      %v4738 = vadd.f32 %v4624, %v4697
      %v4739 = vadd.f32 %v4629, %v4698
      %v4740 = vadd.f32 %v4632, %v4699
      %v4741 = vadd.f32 %v4637, %v4700
      %v4742 = vadd.f32 %v4640, %v4701
      %v4743 = vadd.f32 %v4645, %v4702
      %v4744 = vadd.f32 %v4648, %v4703
      %v4745 = vadd.f32 %v4653, %v4704
      %v4746 = vadd.f32 %v4656, %v4705
      %v4747 = vadd.f32 %v4661, %v4706
      %v4748 = vmax.f32 %v4707, 0.0
      %v4749 = vmax.f32 %v4708, 0.0
      %v4750 = vmax.f32 %v4709, 0.0
      %v4751 = vmax.f32 %v4710, 0.0
      %v4752 = vmax.f32 %v4711, 0.0
      %v4753 = vmax.f32 %v4712, 0.0
      %v4754 = vmax.f32 %v4713, 0.0
      %v4755 = vmax.f32 %v4714, 0.0
      %v4756 = vmax.f32 %v4715, 0.0
      %v4757 = vmax.f32 %v4716, 0.0
      %v4758 = vmax.f32 %v4717, 0.0
      %v4759 = vmax.f32 %v4718, 0.0
      %v4760 = vmax.f32 %v4719, 0.0
      %v4761 = vmax.f32 %v4720, 0.0
      %v4762 = vmax.f32 %v4721, 0.0
      %v4763 = vmax.f32 %v4722, 0.0
      %v4764 = vmax.f32 %v4723, 0.0
      %v4765 = vmax.f32 %v4724, 0.0
      %v4766 = vmax.f32 %v4725, 0.0
      %v4767 = vmax.f32 %v4726, 0.0
      %v4768 = vmax.f32 %v4727, 0.0
      %v4769 = vmax.f32 %v4728, 0.0
      %v4770 = vmax.f32 %v4729, 0.0
      %v4771 = vmax.f32 %v4730, 0.0
      %v4772 = vmax.f32 %v4731, 0.0
      %v4773 = vmax.f32 %v4732, 0.0
      %v4774 = vmax.f32 %v4733, 0.0
      %v4775 = vmax.f32 %v4734, 0.0
      %v4776 = vmax.f32 %v4735, 0.0
      %v4777 = vmax.f32 %v4736, 0.0
      %v4778 = vmax.f32 %v4737, 0.0
      %v4779 = vmax.f32 %v4738, 0.0
      %v4780 = vmax.f32 %v4739, 0.0
      %v4781 = vmax.f32 %v4740, 0.0
      %v4782 = vmax.f32 %v4741, 0.0
      %v4783 = vmax.f32 %v4742, 0.0
      %v4784 = vmax.f32 %v4743, 0.0
      %v4785 = vmax.f32 %v4744, 0.0
      %v4786 = vmax.f32 %v4745, 0.0
      %v4787 = vmax.f32 %v4746, 0.0
      %v4788 = vmax.f32 %v4747, 0.0
      %4789 = vst [vmem:[%s305] sm:$0xff] %v4748
      %4790 = vst [vmem:[%s305 + $0x8] sm:$0xff] %v4749
      %4791 = vst [vmem:[%s305 + $0x10] sm:$0xff] %v4750
      %4792 = vst [vmem:[%s305 + $0x18] sm:$0xff] %v4751
      %4793 = vst [vmem:[%s305 + $0x20] sm:$0xff] %v4752
      %4794 = vst [vmem:[%s305 + $0x28] sm:$0xff] %v4753
      %4795 = vst [vmem:[%s305 + $0x30] sm:$0xff] %v4754
      %4796 = vst [vmem:[%s305 + $0x38] sm:$0xff] %v4755
      %4797 = vst [vmem:[%s305 + $0x40] sm:$0xff] %v4756
      %4798 = vst [vmem:[%s305 + $0x48] sm:$0xff] %v4757
      %4799 = vst [vmem:[%s305 + $0x50] sm:$0xff] %v4758
      %4800 = vst [vmem:[%s305 + $0x58] sm:$0xff] %v4759
      %4801 = vst [vmem:[%s305 + $0x60] sm:$0xff] %v4760
      %4802 = vst [vmem:[%s305 + $0x68] sm:$0xff] %v4761
      %4803 = vst [vmem:[%s305 + $0x70] sm:$0xff] %v4762
      %4804 = vst [vmem:[%s305 + $0x78] sm:$0xff] %v4763
      %4805 = vst [vmem:[%s305 + $0x80] sm:$0xff] %v4764
      %4806 = vst [vmem:[%s305 + $0x88] sm:$0xff] %v4765
      %4807 = vst [vmem:[%s305 + $0x90] sm:$0xff] %v4766
      %4808 = vst [vmem:[%s305 + $0x98] sm:$0xff] %v4767
      %4809 = vst [vmem:[%s305 + $0xa0] sm:$0xff] %v4768
      %4810 = vst [vmem:[%s305 + $0xa8] sm:$0xff] %v4769
      %4811 = vst [vmem:[%s305 + $0xb0] sm:$0xff] %v4770
      %4812 = vst [vmem:[%s305 + $0xb8] sm:$0xff] %v4771
      %4813 = vst [vmem:[%s305 + $0xc0] sm:$0xff] %v4772
      %4814 = vst [vmem:[%s305 + $0xc8] sm:$0xff] %v4773
      %4815 = vst [vmem:[%s305 + $0xd0] sm:$0xff] %v4774
      %4816 = vst [vmem:[%s305 + $0xd8] sm:$0xff] %v4775
      %4817 = vst [vmem:[%s305 + $0xe0] sm:$0xff] %v4776
      %4818 = vst [vmem:[%s305 + $0xe8] sm:$0xff] %v4777
      %4819 = vst [vmem:[%s305 + $0xf0] sm:$0xff] %v4778
      %4820 = vst [vmem:[%s305 + $0xf8] sm:$0xff] %v4779
      %4821 = vst [vmem:[%s305 + $0x100] sm:$0xff] %v4780
      %4822 = vst [vmem:[%s305 + $0x108] sm:$0xff] %v4781
      %4823 = vst [vmem:[%s305 + $0x110] sm:$0xff] %v4782
      %4824 = vst [vmem:[%s305 + $0x118] sm:$0xff] %v4783
      %4825 = vst [vmem:[%s305 + $0x120] sm:$0xff] %v4784
      %4826 = vst [vmem:[%s305 + $0x128] sm:$0xff] %v4785
      %4827 = vst [vmem:[%s305 + $0x130] sm:$0xff] %v4786
      %4828 = vst [vmem:[%s305 + $0x138] sm:$0xff] %v4787
      %4829 = vst [vmem:[%s305 + $0x140] sm:$0xf] %v4788
      %p4830 = scmp.lt.s32.totalorder %s19, 1
      %s4831 = scalar_select %p4830, %s19, 1
      %s4832 = smul.addr %s4831, 41
      %s4833 = smul.addr %s4832, 8
      %s4834 = scalar_lea.vmem %s8, %s4833
      // Predicated region
      $region53: #{identity_block3_forward.1} parent=51 // pred_check
        %p4835 = pneg %p210
      $region54: #{identity_block3_forward.1} parent=51 // pred_check_branch
        %4837 = sbr.rel (%p4835) target = $region56
      $region55: #{identity_block3_forward.1} parent=51 // pred_region
        _
      $region56: #{identity_block3_forward.1} parent=51 // pred_fallthru
        _
    $region52: #{identity_block3_forward.1} parent=5 // pred_fallthru
      _
    %p4838 = scmp.le.s32.totalorder 2, %s14
    // Predicated region
    $region57: #{identity_block3_forward.1} parent=5 // pred_check
      %p4839 = pneg %p4838
    $region58: #{identity_block3_forward.1} parent=5 // pred_check_branch
      %4841 = sbr.rel (%p4839) target = $region60
    $region59: #{identity_block3_forward.1} parent=5 // pred_region
      %s4842 = ssub.s32 %s14, 2
      // Predicated region
      $region61: #{identity_block3_forward.1} parent=59 // pred_check
        %p4843 = pneg %p216
      $region62: #{identity_block3_forward.1} parent=59 // pred_check_branch
        %4845 = sbr.rel (%p4843) target = $region64
      $region63: #{identity_block3_forward.1} parent=59 // pred_region
        %p4846 = scmp.lt.s32.totalorder %s20, 1
        %s4847 = scalar_select %p4846, %s20, 1
        %s4848 = smul.addr %s4847, 41
        %s4849 = smul.addr %s4848, 8
        %s4850 = scalar_lea.vmem %s8, %s4849
      $region64: #{identity_block3_forward.1} parent=59 // pred_fallthru
        _
    $region60: #{identity_block3_forward.1} parent=5 // pred_fallthru
      _
  $region6: #{identity_block3_forward.1} parent=0 // loop_footer
    %s18 = sadd.s32 1, %s14
  $region7: #{identity_block3_forward.1} parent=0 // loop_footer_branch
    %13 = sbr.rel target = $region3
  $region8: #{identity_block3_forward.1} parent=0 // loop_exit
    _

</llo_original>
